<compile_context>
chip_gen: v7x
topology: tpu7x:2x2x1
jax: 0.10.0
libtpu: 0.0.40
codegen_flags: <defaults>
</compile_context>

<pallas_src>
import jax
import jax.numpy as jnp
from jax.experimental import pallas as pl
from jax.experimental.pallas import tpu as pltpu

IN_FEATURES = 561    # fc1 in_features (UCI HAR feature count)
IN_PAD = 640         # 5 * 128 -- lane/K-aligned contraction dim
HIDDEN = 512         # fc1 out_features
OUT_FEATURES = 6     # fc2 out_features
OUT_PAD = 128        # lane-dense output width (unmasked stores)
TM = 256             # batch tile: multiple of 128, fits VMEM on v5e/v6e/v7x


def _mlp_kernel(x_ref, w1_ref, b1_ref, w2_ref, b2_ref, o_ref):
    # fc1: bf16 MXU matmul, f32 accumulation.
    h = jnp.dot(x_ref[...], w1_ref[...], preferred_element_type=jnp.float32)
    # bias + ReLU in f32 on the VPU (f32 epilogue; safe on v5e).
    h = jnp.maximum(h + b1_ref[...], 0.0)
    # fc2: bf16 MXU matmul, f32 accumulation (padded 128-wide output tile).
    y = jnp.dot(h.astype(jnp.bfloat16), w2_ref[...],
                preferred_element_type=jnp.float32)
    y = y + b2_ref[...]
    o_ref[...] = y.astype(o_ref.dtype)


def mnist_cnn_forward(inputs, params, *, tm=TM):
    # forward: tensor = inputs.view(-1, 561)
    x = inputs.reshape(-1, IN_FEATURES).astype(jnp.float32)
    n = x.shape[0]
    # TODO(synk): conv1/pool1/conv2/pool2 from the reference module cannot be
    # applied to the 2-D (N, 561) tensor produced by view(-1, 561); nn.Conv2d
    # requires 3-D/4-D input and the PyTorch forward raises there, so only the
    # well-defined fc1 -> ReLU -> fc2 path is implemented in the kernel.
    w1, b1, w2, b2 = params["w1"], params["b1"], params["w2"], params["b2"]

    # Pad batch to a TM multiple and K to 640 with zeros (exact: padding
    # contributes 0 to the contraction; padded rows are sliced off).
    n_pad = -(-n // tm) * tm
    x_pad = jnp.pad(x.astype(jnp.bfloat16),
                    ((0, n_pad - n), (0, IN_PAD - IN_FEATURES)))

    grid = (n_pad // tm,)
    bytes_accessed = (x_pad.size * 2 + w1.size * 2 + w2.size * 2
                      + b1.size * 4 + b2.size * 4 + n_pad * OUT_PAD * 4)
    cost = pl.CostEstimate(
        flops=2 * n_pad * (IN_PAD * HIDDEN + HIDDEN * OUT_PAD),
        transcendentals=0,
        bytes_accessed=bytes_accessed)

    out = pl.pallas_call(
        _mlp_kernel,
        out_shape=jax.ShapeDtypeStruct((n_pad, OUT_PAD), jnp.float32),
        grid=grid,
        in_specs=[
            pl.BlockSpec((tm, IN_PAD), lambda i: (i, 0)),         # x tile
            pl.BlockSpec((IN_PAD, HIDDEN), lambda i: (0, 0)),     # W1 (resident)
            pl.BlockSpec((1, HIDDEN), lambda i: (0, 0)),          # b1 (resident)
            pl.BlockSpec((HIDDEN, OUT_PAD), lambda i: (0, 0)),    # W2 (resident)
            pl.BlockSpec((1, OUT_PAD), lambda i: (0, 0)),         # b2 (resident)
        ],
        out_specs=pl.BlockSpec((tm, OUT_PAD), lambda i: (i, 0)),
        compiler_params=pltpu.CompilerParams(
            dimension_semantics=("parallel",)),
        cost_estimate=cost,
    )(x_pad, w1, b1, w2, b2)

    # Strip batch and lane padding.
    return out[:n, :OUT_FEATURES]


def init_params(key):
    """Deterministic init mirroring the shapes declared in Mnist_CNN.__init__.

    Linear weights are pre-transposed to (in, out), zero-padded to the
    lane-aligned kernel shapes, and cast to bf16 for the MXU.  Biases stay
    f32 (epilogue dtype)."""
    k1, k2, k3, k4, k5, k6 = jax.random.split(key, 6)
    # Conv parameters declared for shape parity with __init__ but unused
    # (see TODO in mnist_cnn_forward): conv1 (32,1,5,5), conv2 (64,32,5,5).
    conv1_w = jax.random.normal(k5, (32, 1, 5, 5), jnp.float32) * 0.02
    conv2_w = jax.random.normal(k6, (64, 32, 5, 5), jnp.float32) * 0.02
    # nn.Linear default init: U(-1/sqrt(fan_in), 1/sqrt(fan_in)).
    lim1 = 1.0 / (IN_FEATURES ** 0.5)
    lim2 = 1.0 / (HIDDEN ** 0.5)
    w1 = jax.random.uniform(k1, (IN_FEATURES, HIDDEN), jnp.float32, -lim1, lim1)
    b1 = jax.random.uniform(k2, (1, HIDDEN), jnp.float32, -lim1, lim1)
    w2 = jax.random.uniform(k3, (HIDDEN, OUT_FEATURES), jnp.float32, -lim2, lim2)
    b2 = jax.random.uniform(k4, (1, OUT_FEATURES), jnp.float32, -lim2, lim2)
    # Zero-pad to kernel shapes (exact) and cast matmul operands to bf16.
    w1_pad = jnp.zeros((IN_PAD, HIDDEN), jnp.float32).at[:IN_FEATURES, :].set(w1)
    w2_pad = jnp.zeros((HIDDEN, OUT_PAD), jnp.float32).at[:, :OUT_FEATURES].set(w2)
    b2_pad = jnp.zeros((1, OUT_PAD), jnp.float32).at[:, :OUT_FEATURES].set(b2)
    return {
        "w1": w1_pad.astype(jnp.bfloat16),
        "b1": b1,
        "w2": w2_pad.astype(jnp.bfloat16),
        "b2": b2_pad,
        "conv1_w": conv1_w,
        "conv2_w": conv2_w,
    }


def _reference(inputs, params):
    """Pure-JAX reference mirroring the kernel's dtypes/padding exactly."""
    x = inputs.reshape(-1, IN_FEATURES).astype(jnp.float32)
    x_pad = jnp.pad(x.astype(jnp.bfloat16), ((0, 0), (0, IN_PAD - IN_FEATURES)))
    h = jnp.dot(x_pad, params["w1"], preferred_element_type=jnp.float32)
    h = jnp.maximum(h + params["b1"], 0.0)
    y = jnp.dot(h.astype(jnp.bfloat16), params["w2"],
                preferred_element_type=jnp.float32)
    y = y + params["b2"]
    return y[:, :OUT_FEATURES]


if __name__ == "__main__":
    key = jax.random.PRNGKey(0)
    pkey, xkey = jax.random.split(key)
    params = init_params(pkey)

    # Small batch of UCI HAR-style feature vectors (any shape whose element
    # count is a multiple of 561 works; forward views it to (-1, 561)).
    x = jax.random.normal(xkey, (4, IN_FEATURES), jnp.float32)

    out = jax.block_until_ready(mnist_cnn_forward(x, params))
    ref = _reference(x, params)

    assert out.shape == (4, OUT_FEATURES)
    assert jnp.allclose(out, ref, atol=1e-2, rtol=1e-2), (
        f"max abs err {jnp.max(jnp.abs(out - ref))}")
    print("KERNEL_OK")
</pallas_src>

<mosaic_0001>
module attributes {stable_mosaic.version = 11 : i64} {
  func.func @_mlp_kernel(%arg0: i32, %arg1: memref<256x640xbf16, #tpu.memory_space<vmem>>, %arg2: memref<640x512xbf16, #tpu.memory_space<vmem>>, %arg3: memref<1x512xf32, #tpu.memory_space<vmem>>, %arg4: memref<512x128xbf16, #tpu.memory_space<vmem>>, %arg5: memref<1x128xf32, #tpu.memory_space<vmem>>, %arg6: memref<256x128xf32, #tpu.memory_space<vmem>>) attributes {dimension_semantics = [#tpu.dimension_semantics<parallel>], iteration_bounds = array<i64: 1>, scalar_prefetch = 0 : i64, scratch_operands = 0 : i64, tpu.core_type = #tpu.core_type<tc>, window_params = [{transform_indices = @transform_0, window_bounds = array<i64: 256, 640>}, {pipeline_mode = #tpu.pipeline_mode<synchronous>, transform_indices = @transform_1, window_bounds = array<i64: 640, 512>}, {pipeline_mode = #tpu.pipeline_mode<synchronous>, transform_indices = @transform_2, window_bounds = array<i64: 1, 512>}, {pipeline_mode = #tpu.pipeline_mode<synchronous>, transform_indices = @transform_3, window_bounds = array<i64: 512, 128>}, {pipeline_mode = #tpu.pipeline_mode<synchronous>, transform_indices = @transform_4, window_bounds = array<i64: 1, 128>}, {transform_indices = @transform_5, window_bounds = array<i64: 256, 128>}]} {
    %c0 = arith.constant 0 : index
    %c0_0 = arith.constant 0 : index
    %0 = vector.load %arg1[%c0, %c0_0] : memref<256x640xbf16, #tpu.memory_space<vmem>>, vector<256x640xbf16>
    %c0_1 = arith.constant 0 : index
    %c0_2 = arith.constant 0 : index
    %1 = vector.load %arg2[%c0_1, %c0_2] : memref<640x512xbf16, #tpu.memory_space<vmem>>, vector<640x512xbf16>
    %cst = arith.constant dense<0.000000e+00> : vector<256x512xf32>
    %2 = tpu.matmul %0, %1, %cst {dimension_numbers = #tpu.dot_dimension_numbers<[1], [0], [0], [1], [0, 0, 1, 1], [], []>} : vector<256x640xbf16>, vector<640x512xbf16>, vector<256x512xf32> -> vector<256x512xf32>
    %c0_3 = arith.constant 0 : index
    %c0_4 = arith.constant 0 : index
    %3 = vector.load %arg3[%c0_3, %c0_4] : memref<1x512xf32, #tpu.memory_space<vmem>>, vector<1x512xf32>
    %4 = vector.broadcast %3 : vector<1x512xf32> to vector<256x512xf32>
    %5 = arith.addf %2, %4 : vector<256x512xf32>
    %cst_5 = arith.constant 0.000000e+00 : f32
    %6 = vector.broadcast %cst_5 : f32 to vector<256x512xf32>
    %7 = arith.maximumf %5, %6 : vector<256x512xf32>
    %8 = arith.truncf %7 : vector<256x512xf32> to vector<256x512xbf16>
    %c0_6 = arith.constant 0 : index
    %c0_7 = arith.constant 0 : index
    %9 = vector.load %arg4[%c0_6, %c0_7] : memref<512x128xbf16, #tpu.memory_space<vmem>>, vector<512x128xbf16>
    %cst_8 = arith.constant dense<0.000000e+00> : vector<256x128xf32>
    %10 = tpu.matmul %8, %9, %cst_8 {dimension_numbers = #tpu.dot_dimension_numbers<[1], [0], [0], [1], [0, 0, 1, 1], [], []>} : vector<256x512xbf16>, vector<512x128xbf16>, vector<256x128xf32> -> vector<256x128xf32>
    %c0_9 = arith.constant 0 : index
    %c0_10 = arith.constant 0 : index
    %11 = vector.load %arg5[%c0_9, %c0_10] : memref<1x128xf32, #tpu.memory_space<vmem>>, vector<1x128xf32>
    %12 = vector.broadcast %11 : vector<1x128xf32> to vector<256x128xf32>
    %13 = arith.addf %10, %12 : vector<256x128xf32>
    %c0_11 = arith.constant 0 : index
    %c0_12 = arith.constant 0 : index
    %14 = vector.load %arg6[%c0_11, %c0_12] : memref<256x128xf32, #tpu.memory_space<vmem>>, vector<256x128xf32>
    tpu.vector_store %arg6[%c0_11, %c0_12], %13 {strides = array<i32>} : memref<256x128xf32, #tpu.memory_space<vmem>>, vector<256x128xf32>,
    return
  }
  func.func @transform_0(%arg0: i32) -> (i32, i32) {
    %c0_i32 = arith.constant 0 : i32
    %c0_i32_0 = arith.constant 0 : i32
    return %arg0, %c0_i32 : i32, i32
  }
  func.func @transform_1(%arg0: i32) -> (i32, i32) {
    %c0_i32 = arith.constant 0 : i32
    %c0_i32_0 = arith.constant 0 : i32
    %c0_i32_1 = arith.constant 0 : i32
    return %c0_i32, %c0_i32_0 : i32, i32
  }
  func.func @transform_2(%arg0: i32) -> (i32, i32) {
    %c0_i32 = arith.constant 0 : i32
    %c0_i32_0 = arith.constant 0 : i32
    %c0_i32_1 = arith.constant 0 : i32
    return %c0_i32, %c0_i32_0 : i32, i32
  }
  func.func @transform_3(%arg0: i32) -> (i32, i32) {
    %c0_i32 = arith.constant 0 : i32
    %c0_i32_0 = arith.constant 0 : i32
    %c0_i32_1 = arith.constant 0 : i32
    return %c0_i32, %c0_i32_0 : i32, i32
  }
  func.func @transform_4(%arg0: i32) -> (i32, i32) {
    %c0_i32 = arith.constant 0 : i32
    %c0_i32_0 = arith.constant 0 : i32
    %c0_i32_1 = arith.constant 0 : i32
    return %c0_i32, %c0_i32_0 : i32, i32
  }
  func.func @transform_5(%arg0: i32) -> (i32, i32) {
    %c0_i32 = arith.constant 0 : i32
    %c0_i32_0 = arith.constant 0 : i32
    return %arg0, %c0_i32 : i32, i32
  }
}

</mosaic_0001>

<llo_original>
// kernel: tpu_custom_call.1
$region0: #{tpu_custom_call.1}
  #allocation0 [shape = 'u32[]', space=smem, size = 0x4, offset = 0x4, fixed_abs, tag = 'smem constant byte address 0x4 - core index']
  #allocation1 [shape = 'u32[144,128]{1,0:T(1,128)}', space=vmem, size = 0x12000, scoped, tag = 'internal scratch']
  %s0 = inlined_call_operand.hbm [shape: bf16[256,640], index: 0, kind: input, shape index: {}]
  %s1 = inlined_call_operand.hbm [shape: bf16[640,512], index: 1, kind: input, shape index: {}]
  %s2 = inlined_call_operand.vmem [shape: f32[1,512], index: 2, kind: input, shape index: {}]
  %s3 = inlined_call_operand.hbm [shape: bf16[512,128], index: 3, kind: input, shape index: {}]
  %s4 = inlined_call_operand.vmem [shape: f32[1,128], index: 4, kind: input, shape index: {}]
  %s5 = inlined_call_operand.hbm [shape: f32[256,128], index: 5, kind: output, shape index: {}]
  %s6 = sld [smem:[#allocation0]]
  $region42: #{tpu_custom_call.1} parent=0
    _
  %s8 = ssub.s32 1, %s6
  %s9 = scalar_select 0, %s8, %s6
  $region1: #{tpu_custom_call.1} parent=0
    #allocation2 [shape = 'u8[327680]{0}', space=vmem, size = 0x50000, scoped, tag = 'input window, operand 0, single buffered']
    #allocation3 [shape = 's32[1]{0}', space=sflag, size = 0x4, scoped, tag = 'scoped memory for tpu_custom_call.1']
    #allocation4 [shape = 's32[1]{0}', space=sflag, size = 0x4, scoped, tag = 'scoped memory for tpu_custom_call.1']
    #allocation5 [shape = 'u8[655360]{0}', space=vmem, size = 0xa0000, scoped, tag = 'input window, operand 1, single buffered']
    #allocation6 [shape = 's32[1]{0}', space=sflag, size = 0x4, scoped, tag = 'scoped memory for tpu_custom_call.1']
    #allocation7 [shape = 'u8[131072]{0}', space=vmem, size = 0x20000, scoped, tag = 'input window, operand 3, single buffered']
    #allocation8 [shape = 'u8[131072]{0}', space=vmem, size = 0x20000, scoped, tag = 'output window, operand 0, single buffered']
    %10 = vsyncpa [#allocation3], 0
    %11 = vsyncpa [#allocation6], 0
    %12 = vsyncpa [#allocation4], 0
    // Predicated region
    $region2: #{tpu_custom_call.1} parent=1 // pred_check
      _
    $region3: #{tpu_custom_call.1} parent=1 // pred_check_branch
      %14 = sbr.rel (0) target = $region5
    $region4: #{tpu_custom_call.1} parent=1 // pred_region
      %s16 = ssub.s32 10240, 10240
      %17 = vsyncadd [#allocation3], %s16
      %s18 = sshll.u32 [#allocation2], 4
      %s19 = int_to_ptr.vmem [resolvable:$true] %s18
      %24 = dma.hbm_to_vmem [thread:$0]  %s0, 10240, %s19, [#allocation3], 320, 320, 20
    $region5: #{tpu_custom_call.1} parent=1 // pred_fallthru
      _
    // Predicated region
    $region6: #{tpu_custom_call.1} parent=1 // pred_check
      _
    $region7: #{tpu_custom_call.1} parent=1 // pred_check_branch
      %26 = sbr.rel (0) target = $region9
    $region8: #{tpu_custom_call.1} parent=1 // pred_region
      %s28 = ssub.s32 20480, 20480
      %29 = vsyncadd [#allocation6], %s28
      %s30 = sshll.u32 [#allocation5], 4
      %s31 = int_to_ptr.vmem [resolvable:$true] %s30
      %36 = dma.hbm_to_vmem [thread:$0]  %s1, 20480, %s31, [#allocation6], 256, 256, 16
    $region9: #{tpu_custom_call.1} parent=1 // pred_fallthru
      _
    // Predicated region
    $region10: #{tpu_custom_call.1} parent=1 // pred_check
      _
    $region11: #{tpu_custom_call.1} parent=1 // pred_check_branch
      %38 = sbr.rel (0) target = $region13
    $region12: #{tpu_custom_call.1} parent=1 // pred_region
      _
    $region13: #{tpu_custom_call.1} parent=1 // pred_fallthru
      _
    // Predicated region
    $region14: #{tpu_custom_call.1} parent=1 // pred_check
      _
    $region15: #{tpu_custom_call.1} parent=1 // pred_check_branch
      %40 = sbr.rel (0) target = $region17
    $region16: #{tpu_custom_call.1} parent=1 // pred_region
      %s42 = ssub.s32 4096, 4096
      %43 = vsyncadd [#allocation6], %s42
      %s44 = sshll.u32 [#allocation7], 4
      %s45 = int_to_ptr.vmem [resolvable:$true] %s44
      %50 = dma.hbm_to_vmem [thread:$0]  %s3, 4096, %s45, [#allocation6], 64, 64, 4
    $region17: #{tpu_custom_call.1} parent=1 // pred_fallthru
      _
    // Predicated region
    $region18: #{tpu_custom_call.1} parent=1 // pred_check
      _
    $region19: #{tpu_custom_call.1} parent=1 // pred_check_branch
      %52 = sbr.rel (0) target = $region21
    $region20: #{tpu_custom_call.1} parent=1 // pred_region
      _
    $region21: #{tpu_custom_call.1} parent=1 // pred_fallthru
      _
    // Predicated region
    $region22: #{tpu_custom_call.1} parent=1 // pred_check
      _
    $region23: #{tpu_custom_call.1} parent=1 // pred_check_branch
      %54 = sbr.rel (0) target = $region25
    $region24: #{tpu_custom_call.1} parent=1 // pred_region
      %55 = dma.done [#allocation3], 10240
    $region25: #{tpu_custom_call.1} parent=1 // pred_fallthru
      _
    // Predicated region
    $region26: #{tpu_custom_call.1} parent=1 // pred_check
      _
    $region27: #{tpu_custom_call.1} parent=1 // pred_check_branch
      %57 = sbr.rel (0) target = $region29
    $region28: #{tpu_custom_call.1} parent=1 // pred_region
      %58 = dma.done [#allocation6], 20480
    $region29: #{tpu_custom_call.1} parent=1 // pred_fallthru
      _
    // Predicated region
    $region30: #{tpu_custom_call.1} parent=1 // pred_check
      _
    $region31: #{tpu_custom_call.1} parent=1 // pred_check_branch
      %60 = sbr.rel (0) target = $region33
    $region32: #{tpu_custom_call.1} parent=1 // pred_region
      %61 = dma.done [#allocation6], 4096
    $region33: #{tpu_custom_call.1} parent=1 // pred_fallthru
      _
    %v63 = vld [vmem:[#allocation2] sm:$0xff]
    %v64 = vld [vmem:[#allocation2 + $0x8] sm:$0xff]
    %v65 = vld [vmem:[#allocation2 + $0x10] sm:$0xf]
    %v66 = vld [vmem:[#allocation2 + $0x14] sm:$0xff]
    %v67 = vld [vmem:[#allocation2 + $0x1c] sm:$0xff]
    %v68 = vld [vmem:[#allocation2 + $0x24] sm:$0xf]
    %v69 = vld [vmem:[#allocation2 + $0x28] sm:$0xff]
    %v70 = vld [vmem:[#allocation2 + $0x30] sm:$0xff]
    %v71 = vld [vmem:[#allocation2 + $0x38] sm:$0xf]
    %v72 = vld [vmem:[#allocation2 + $0x3c] sm:$0xff]
    %v73 = vld [vmem:[#allocation2 + $0x44] sm:$0xff]
    %v74 = vld [vmem:[#allocation2 + $0x4c] sm:$0xf]
    %v75 = vld [vmem:[#allocation2 + $0x50] sm:$0xff]
    %v76 = vld [vmem:[#allocation2 + $0x58] sm:$0xff]
    %v77 = vld [vmem:[#allocation2 + $0x60] sm:$0xf]
    %v78 = vld [vmem:[#allocation2 + $0x64] sm:$0xff]
    %v79 = vld [vmem:[#allocation2 + $0x6c] sm:$0xff]
    %v80 = vld [vmem:[#allocation2 + $0x74] sm:$0xf]
    %v81 = vld [vmem:[#allocation2 + $0x78] sm:$0xff]
    %v82 = vld [vmem:[#allocation2 + $0x80] sm:$0xff]
    %v83 = vld [vmem:[#allocation2 + $0x88] sm:$0xf]
    %v84 = vld [vmem:[#allocation2 + $0x8c] sm:$0xff]
    %v85 = vld [vmem:[#allocation2 + $0x94] sm:$0xff]
    %v86 = vld [vmem:[#allocation2 + $0x9c] sm:$0xf]
    %v87 = vld [vmem:[#allocation2 + $0xa0] sm:$0xff]
    %v88 = vld [vmem:[#allocation2 + $0xa8] sm:$0xff]
    %v89 = vld [vmem:[#allocation2 + $0xb0] sm:$0xf]
    %v90 = vld [vmem:[#allocation2 + $0xb4] sm:$0xff]
    %v91 = vld [vmem:[#allocation2 + $0xbc] sm:$0xff]
    %v92 = vld [vmem:[#allocation2 + $0xc4] sm:$0xf]
    %v93 = vld [vmem:[#allocation2 + $0xc8] sm:$0xff]
    %v94 = vld [vmem:[#allocation2 + $0xd0] sm:$0xff]
    %v95 = vld [vmem:[#allocation2 + $0xd8] sm:$0xf]
    %v96 = vld [vmem:[#allocation2 + $0xdc] sm:$0xff]
    %v97 = vld [vmem:[#allocation2 + $0xe4] sm:$0xff]
    %v98 = vld [vmem:[#allocation2 + $0xec] sm:$0xf]
    %v99 = vld [vmem:[#allocation2 + $0xf0] sm:$0xff]
    %v100 = vld [vmem:[#allocation2 + $0xf8] sm:$0xff]
    %v101 = vld [vmem:[#allocation2 + $0x100] sm:$0xf]
    %v102 = vld [vmem:[#allocation2 + $0x104] sm:$0xff]
    %v103 = vld [vmem:[#allocation2 + $0x10c] sm:$0xff]
    %v104 = vld [vmem:[#allocation2 + $0x114] sm:$0xf]
    %v105 = vld [vmem:[#allocation2 + $0x118] sm:$0xff]
    %v106 = vld [vmem:[#allocation2 + $0x120] sm:$0xff]
    %v107 = vld [vmem:[#allocation2 + $0x128] sm:$0xf]
    %v108 = vld [vmem:[#allocation2 + $0x12c] sm:$0xff]
    %v109 = vld [vmem:[#allocation2 + $0x134] sm:$0xff]
    %v110 = vld [vmem:[#allocation2 + $0x13c] sm:$0xf]
    %v111 = vld [vmem:[#allocation2 + $0x140] sm:$0xff]
    %v112 = vld [vmem:[#allocation2 + $0x148] sm:$0xff]
    %v113 = vld [vmem:[#allocation2 + $0x150] sm:$0xf]
    %v114 = vld [vmem:[#allocation2 + $0x154] sm:$0xff]
    %v115 = vld [vmem:[#allocation2 + $0x15c] sm:$0xff]
    %v116 = vld [vmem:[#allocation2 + $0x164] sm:$0xf]
    %v117 = vld [vmem:[#allocation2 + $0x168] sm:$0xff]
    %v118 = vld [vmem:[#allocation2 + $0x170] sm:$0xff]
    %v119 = vld [vmem:[#allocation2 + $0x178] sm:$0xf]
    %v120 = vld [vmem:[#allocation2 + $0x17c] sm:$0xff]
    %v121 = vld [vmem:[#allocation2 + $0x184] sm:$0xff]
    %v122 = vld [vmem:[#allocation2 + $0x18c] sm:$0xf]
    %v123 = vld [vmem:[#allocation2 + $0x190] sm:$0xff]
    %v124 = vld [vmem:[#allocation2 + $0x198] sm:$0xff]
    %v125 = vld [vmem:[#allocation2 + $0x1a0] sm:$0xf]
    %v126 = vld [vmem:[#allocation2 + $0x1a4] sm:$0xff]
    %v127 = vld [vmem:[#allocation2 + $0x1ac] sm:$0xff]
    %v128 = vld [vmem:[#allocation2 + $0x1b4] sm:$0xf]
    %v129 = vld [vmem:[#allocation2 + $0x1b8] sm:$0xff]
    %v130 = vld [vmem:[#allocation2 + $0x1c0] sm:$0xff]
    %v131 = vld [vmem:[#allocation2 + $0x1c8] sm:$0xf]
    %v132 = vld [vmem:[#allocation2 + $0x1cc] sm:$0xff]
    %v133 = vld [vmem:[#allocation2 + $0x1d4] sm:$0xff]
    %v134 = vld [vmem:[#allocation2 + $0x1dc] sm:$0xf]
    %v135 = vld [vmem:[#allocation2 + $0x1e0] sm:$0xff]
    %v136 = vld [vmem:[#allocation2 + $0x1e8] sm:$0xff]
    %v137 = vld [vmem:[#allocation2 + $0x1f0] sm:$0xf]
    %v138 = vld [vmem:[#allocation2 + $0x1f4] sm:$0xff]
    %v139 = vld [vmem:[#allocation2 + $0x1fc] sm:$0xff]
    %v140 = vld [vmem:[#allocation2 + $0x204] sm:$0xf]
    %v141 = vld [vmem:[#allocation2 + $0x208] sm:$0xff]
    %v142 = vld [vmem:[#allocation2 + $0x210] sm:$0xff]
    %v143 = vld [vmem:[#allocation2 + $0x218] sm:$0xf]
    %v144 = vld [vmem:[#allocation2 + $0x21c] sm:$0xff]
    %v145 = vld [vmem:[#allocation2 + $0x224] sm:$0xff]
    %v146 = vld [vmem:[#allocation2 + $0x22c] sm:$0xf]
    %v147 = vld [vmem:[#allocation2 + $0x230] sm:$0xff]
    %v148 = vld [vmem:[#allocation2 + $0x238] sm:$0xff]
    %v149 = vld [vmem:[#allocation2 + $0x240] sm:$0xf]
    %v150 = vld [vmem:[#allocation2 + $0x244] sm:$0xff]
    %v151 = vld [vmem:[#allocation2 + $0x24c] sm:$0xff]
    %v152 = vld [vmem:[#allocation2 + $0x254] sm:$0xf]
    %v153 = vld [vmem:[#allocation2 + $0x258] sm:$0xff]
    %v154 = vld [vmem:[#allocation2 + $0x260] sm:$0xff]
    %v155 = vld [vmem:[#allocation2 + $0x268] sm:$0xf]
    %v156 = vld [vmem:[#allocation2 + $0x26c] sm:$0xff]
    %v157 = vld [vmem:[#allocation2 + $0x274] sm:$0xff]
    %v158 = vld [vmem:[#allocation2 + $0x27c] sm:$0xf]
    %v159 = vld [vmem:[#allocation5] sm:$0xff]
    %v160 = vld [vmem:[#allocation5 + $0x8] sm:$0xff]
    %v161 = vld [vmem:[#allocation5 + $0x10] sm:$0xff]
    %v162 = vld [vmem:[#allocation5 + $0x18] sm:$0xff]
    %v163 = vld [vmem:[#allocation5 + $0x20] sm:$0xff]
    %v164 = vld [vmem:[#allocation5 + $0x28] sm:$0xff]
    %v165 = vld [vmem:[#allocation5 + $0x30] sm:$0xff]
    %v166 = vld [vmem:[#allocation5 + $0x38] sm:$0xff]
    %v167 = vld [vmem:[#allocation5 + $0x40] sm:$0xff]
    %v168 = vld [vmem:[#allocation5 + $0x48] sm:$0xff]
    %v169 = vld [vmem:[#allocation5 + $0x50] sm:$0xff]
    %v170 = vld [vmem:[#allocation5 + $0x58] sm:$0xff]
    %v171 = vld [vmem:[#allocation5 + $0x60] sm:$0xff]
    %v172 = vld [vmem:[#allocation5 + $0x68] sm:$0xff]
    %v173 = vld [vmem:[#allocation5 + $0x70] sm:$0xff]
    %v174 = vld [vmem:[#allocation5 + $0x78] sm:$0xff]
    %v175 = vld [vmem:[#allocation5 + $0x80] sm:$0xff]
    %v176 = vld [vmem:[#allocation5 + $0x88] sm:$0xff]
    %v177 = vld [vmem:[#allocation5 + $0x90] sm:$0xff]
    %v178 = vld [vmem:[#allocation5 + $0x98] sm:$0xff]
    %v179 = vld [vmem:[#allocation5 + $0xa0] sm:$0xff]
    %v180 = vld [vmem:[#allocation5 + $0xa8] sm:$0xff]
    %v181 = vld [vmem:[#allocation5 + $0xb0] sm:$0xff]
    %v182 = vld [vmem:[#allocation5 + $0xb8] sm:$0xff]
    %v183 = vld [vmem:[#allocation5 + $0xc0] sm:$0xff]
    %v184 = vld [vmem:[#allocation5 + $0xc8] sm:$0xff]
    %v185 = vld [vmem:[#allocation5 + $0xd0] sm:$0xff]
    %v186 = vld [vmem:[#allocation5 + $0xd8] sm:$0xff]
    %v187 = vld [vmem:[#allocation5 + $0xe0] sm:$0xff]
    %v188 = vld [vmem:[#allocation5 + $0xe8] sm:$0xff]
    %v189 = vld [vmem:[#allocation5 + $0xf0] sm:$0xff]
    %v190 = vld [vmem:[#allocation5 + $0xf8] sm:$0xff]
    %v191 = vld [vmem:[#allocation5 + $0x100] sm:$0xff]
    %v192 = vld [vmem:[#allocation5 + $0x108] sm:$0xff]
    %v193 = vld [vmem:[#allocation5 + $0x110] sm:$0xff]
    %v194 = vld [vmem:[#allocation5 + $0x118] sm:$0xff]
    %v195 = vld [vmem:[#allocation5 + $0x120] sm:$0xff]
    %v196 = vld [vmem:[#allocation5 + $0x128] sm:$0xff]
    %v197 = vld [vmem:[#allocation5 + $0x130] sm:$0xff]
    %v198 = vld [vmem:[#allocation5 + $0x138] sm:$0xff]
    %v199 = vld [vmem:[#allocation5 + $0x140] sm:$0xff]
    %v200 = vld [vmem:[#allocation5 + $0x148] sm:$0xff]
    %v201 = vld [vmem:[#allocation5 + $0x150] sm:$0xff]
    %v202 = vld [vmem:[#allocation5 + $0x158] sm:$0xff]
    %v203 = vld [vmem:[#allocation5 + $0x160] sm:$0xff]
    %v204 = vld [vmem:[#allocation5 + $0x168] sm:$0xff]
    %v205 = vld [vmem:[#allocation5 + $0x170] sm:$0xff]
    %v206 = vld [vmem:[#allocation5 + $0x178] sm:$0xff]
    %v207 = vld [vmem:[#allocation5 + $0x180] sm:$0xff]
    %v208 = vld [vmem:[#allocation5 + $0x188] sm:$0xff]
    %v209 = vld [vmem:[#allocation5 + $0x190] sm:$0xff]
    %v210 = vld [vmem:[#allocation5 + $0x198] sm:$0xff]
    %v211 = vld [vmem:[#allocation5 + $0x1a0] sm:$0xff]
    %v212 = vld [vmem:[#allocation5 + $0x1a8] sm:$0xff]
    %v213 = vld [vmem:[#allocation5 + $0x1b0] sm:$0xff]
    %v214 = vld [vmem:[#allocation5 + $0x1b8] sm:$0xff]
    %v215 = vld [vmem:[#allocation5 + $0x1c0] sm:$0xff]
    %v216 = vld [vmem:[#allocation5 + $0x1c8] sm:$0xff]
    %v217 = vld [vmem:[#allocation5 + $0x1d0] sm:$0xff]
    %v218 = vld [vmem:[#allocation5 + $0x1d8] sm:$0xff]
    %v219 = vld [vmem:[#allocation5 + $0x1e0] sm:$0xff]
    %v220 = vld [vmem:[#allocation5 + $0x1e8] sm:$0xff]
    %v221 = vld [vmem:[#allocation5 + $0x1f0] sm:$0xff]
    %v222 = vld [vmem:[#allocation5 + $0x1f8] sm:$0xff]
    %v223 = vld [vmem:[#allocation5 + $0x200] sm:$0xff]
    %v224 = vld [vmem:[#allocation5 + $0x208] sm:$0xff]
    %v225 = vld [vmem:[#allocation5 + $0x210] sm:$0xff]
    %v226 = vld [vmem:[#allocation5 + $0x218] sm:$0xff]
    %v227 = vld [vmem:[#allocation5 + $0x220] sm:$0xff]
    %v228 = vld [vmem:[#allocation5 + $0x228] sm:$0xff]
    %v229 = vld [vmem:[#allocation5 + $0x230] sm:$0xff]
    %v230 = vld [vmem:[#allocation5 + $0x238] sm:$0xff]
    %v231 = vld [vmem:[#allocation5 + $0x240] sm:$0xff]
    %v232 = vld [vmem:[#allocation5 + $0x248] sm:$0xff]
    %v233 = vld [vmem:[#allocation5 + $0x250] sm:$0xff]
    %v234 = vld [vmem:[#allocation5 + $0x258] sm:$0xff]
    %v235 = vld [vmem:[#allocation5 + $0x260] sm:$0xff]
    %v236 = vld [vmem:[#allocation5 + $0x268] sm:$0xff]
    %v237 = vld [vmem:[#allocation5 + $0x270] sm:$0xff]
    %v238 = vld [vmem:[#allocation5 + $0x278] sm:$0xff]
    %v239 = vld [vmem:[#allocation5 + $0x280] sm:$0xff]
    %v240 = vld [vmem:[#allocation5 + $0x288] sm:$0xff]
    %v241 = vld [vmem:[#allocation5 + $0x290] sm:$0xff]
    %v242 = vld [vmem:[#allocation5 + $0x298] sm:$0xff]
    %v243 = vld [vmem:[#allocation5 + $0x2a0] sm:$0xff]
    %v244 = vld [vmem:[#allocation5 + $0x2a8] sm:$0xff]
    %v245 = vld [vmem:[#allocation5 + $0x2b0] sm:$0xff]
    %v246 = vld [vmem:[#allocation5 + $0x2b8] sm:$0xff]
    %v247 = vld [vmem:[#allocation5 + $0x2c0] sm:$0xff]
    %v248 = vld [vmem:[#allocation5 + $0x2c8] sm:$0xff]
    %v249 = vld [vmem:[#allocation5 + $0x2d0] sm:$0xff]
    %v250 = vld [vmem:[#allocation5 + $0x2d8] sm:$0xff]
    %v251 = vld [vmem:[#allocation5 + $0x2e0] sm:$0xff]
    %v252 = vld [vmem:[#allocation5 + $0x2e8] sm:$0xff]
    %v253 = vld [vmem:[#allocation5 + $0x2f0] sm:$0xff]
    %v254 = vld [vmem:[#allocation5 + $0x2f8] sm:$0xff]
    %v255 = vld [vmem:[#allocation5 + $0x300] sm:$0xff]
    %v256 = vld [vmem:[#allocation5 + $0x308] sm:$0xff]
    %v257 = vld [vmem:[#allocation5 + $0x310] sm:$0xff]
    %v258 = vld [vmem:[#allocation5 + $0x318] sm:$0xff]
    %v259 = vld [vmem:[#allocation5 + $0x320] sm:$0xff]
    %v260 = vld [vmem:[#allocation5 + $0x328] sm:$0xff]
    %v261 = vld [vmem:[#allocation5 + $0x330] sm:$0xff]
    %v262 = vld [vmem:[#allocation5 + $0x338] sm:$0xff]
    %v263 = vld [vmem:[#allocation5 + $0x340] sm:$0xff]
    %v264 = vld [vmem:[#allocation5 + $0x348] sm:$0xff]
    %v265 = vld [vmem:[#allocation5 + $0x350] sm:$0xff]
    %v266 = vld [vmem:[#allocation5 + $0x358] sm:$0xff]
    %v267 = vld [vmem:[#allocation5 + $0x360] sm:$0xff]
    %v268 = vld [vmem:[#allocation5 + $0x368] sm:$0xff]
    %v269 = vld [vmem:[#allocation5 + $0x370] sm:$0xff]
    %v270 = vld [vmem:[#allocation5 + $0x378] sm:$0xff]
    %v271 = vld [vmem:[#allocation5 + $0x380] sm:$0xff]
    %v272 = vld [vmem:[#allocation5 + $0x388] sm:$0xff]
    %v273 = vld [vmem:[#allocation5 + $0x390] sm:$0xff]
    %v274 = vld [vmem:[#allocation5 + $0x398] sm:$0xff]
    %v275 = vld [vmem:[#allocation5 + $0x3a0] sm:$0xff]
    %v276 = vld [vmem:[#allocation5 + $0x3a8] sm:$0xff]
    %v277 = vld [vmem:[#allocation5 + $0x3b0] sm:$0xff]
    %v278 = vld [vmem:[#allocation5 + $0x3b8] sm:$0xff]
    %v279 = vld [vmem:[#allocation5 + $0x3c0] sm:$0xff]
    %v280 = vld [vmem:[#allocation5 + $0x3c8] sm:$0xff]
    %v281 = vld [vmem:[#allocation5 + $0x3d0] sm:$0xff]
    %v282 = vld [vmem:[#allocation5 + $0x3d8] sm:$0xff]
    %v283 = vld [vmem:[#allocation5 + $0x3e0] sm:$0xff]
    %v284 = vld [vmem:[#allocation5 + $0x3e8] sm:$0xff]
    %v285 = vld [vmem:[#allocation5 + $0x3f0] sm:$0xff]
    %v286 = vld [vmem:[#allocation5 + $0x3f8] sm:$0xff]
    %v287 = vld [vmem:[#allocation5 + $0x400] sm:$0xff]
    %v288 = vld [vmem:[#allocation5 + $0x408] sm:$0xff]
    %v289 = vld [vmem:[#allocation5 + $0x410] sm:$0xff]
    %v290 = vld [vmem:[#allocation5 + $0x418] sm:$0xff]
    %v291 = vld [vmem:[#allocation5 + $0x420] sm:$0xff]
    %v292 = vld [vmem:[#allocation5 + $0x428] sm:$0xff]
    %v293 = vld [vmem:[#allocation5 + $0x430] sm:$0xff]
    %v294 = vld [vmem:[#allocation5 + $0x438] sm:$0xff]
    %v295 = vld [vmem:[#allocation5 + $0x440] sm:$0xff]
    %v296 = vld [vmem:[#allocation5 + $0x448] sm:$0xff]
    %v297 = vld [vmem:[#allocation5 + $0x450] sm:$0xff]
    %v298 = vld [vmem:[#allocation5 + $0x458] sm:$0xff]
    %v299 = vld [vmem:[#allocation5 + $0x460] sm:$0xff]
    %v300 = vld [vmem:[#allocation5 + $0x468] sm:$0xff]
    %v301 = vld [vmem:[#allocation5 + $0x470] sm:$0xff]
    %v302 = vld [vmem:[#allocation5 + $0x478] sm:$0xff]
    %v303 = vld [vmem:[#allocation5 + $0x480] sm:$0xff]
    %v304 = vld [vmem:[#allocation5 + $0x488] sm:$0xff]
    %v305 = vld [vmem:[#allocation5 + $0x490] sm:$0xff]
    %v306 = vld [vmem:[#allocation5 + $0x498] sm:$0xff]
    %v307 = vld [vmem:[#allocation5 + $0x4a0] sm:$0xff]
    %v308 = vld [vmem:[#allocation5 + $0x4a8] sm:$0xff]
    %v309 = vld [vmem:[#allocation5 + $0x4b0] sm:$0xff]
    %v310 = vld [vmem:[#allocation5 + $0x4b8] sm:$0xff]
    %v311 = vld [vmem:[#allocation5 + $0x4c0] sm:$0xff]
    %v312 = vld [vmem:[#allocation5 + $0x4c8] sm:$0xff]
    %v313 = vld [vmem:[#allocation5 + $0x4d0] sm:$0xff]
    %v314 = vld [vmem:[#allocation5 + $0x4d8] sm:$0xff]
    %v315 = vld [vmem:[#allocation5 + $0x4e0] sm:$0xff]
    %v316 = vld [vmem:[#allocation5 + $0x4e8] sm:$0xff]
    %v317 = vld [vmem:[#allocation5 + $0x4f0] sm:$0xff]
    %v318 = vld [vmem:[#allocation5 + $0x4f8] sm:$0xff]
    %v319 = vld [vmem:[%s2] sm:$0xf]
    %v321 = vlaneseq
    %v322 = vshrl.u32 %v321, 7
    %v323 = vsub.s32 0, %v322
    %v324 = vrot.slane %v319, %v323
    %v325 = vlaneseq
    %v326 = vshrl.u32 %v325, 7
    %v327 = vsub.s32 1, %v326
    %v328 = vrot.slane %v319, %v327
    %v329 = vlaneseq
    %v330 = vshrl.u32 %v329, 7
    %v331 = vsub.s32 2, %v330
    %v332 = vrot.slane %v319, %v331
    %v333 = vlaneseq
    %v334 = vshrl.u32 %v333, 7
    %v335 = vsub.s32 3, %v334
    %v336 = vrot.slane %v319, %v335
    %v437 = vunpack.c.l.b16 %v63
    %v438 = vunpack.c.h.b16 %v63
    %v439 = vunpack.c.l.b16 %v64
    %v440 = vunpack.c.h.b16 %v64
    %v441 = vunpack.c.l.b16 %v65
    %v442 = vunpack.c.l.b16 %v66
    %v443 = vunpack.c.h.b16 %v66
    %v444 = vunpack.c.l.b16 %v67
    %v445 = vunpack.c.h.b16 %v67
    %v446 = vunpack.c.l.b16 %v68
    %v447 = vunpack.c.l.b16 %v69
    %v448 = vunpack.c.h.b16 %v69
    %v449 = vunpack.c.l.b16 %v70
    %v450 = vunpack.c.h.b16 %v70
    %v451 = vunpack.c.l.b16 %v71
    %v452 = vunpack.c.l.b16 %v72
    %v453 = vunpack.c.h.b16 %v72
    %v454 = vunpack.c.l.b16 %v73
    %v455 = vunpack.c.h.b16 %v73
    %v456 = vunpack.c.l.b16 %v74
    %v457 = vunpack.c.l.b16 %v75
    %v458 = vunpack.c.h.b16 %v75
    %v459 = vunpack.c.l.b16 %v76
    %v460 = vunpack.c.h.b16 %v76
    %v461 = vunpack.c.l.b16 %v77
    %v462 = vunpack.c.l.b16 %v78
    %v463 = vunpack.c.h.b16 %v78
    %v464 = vunpack.c.l.b16 %v79
    %v465 = vunpack.c.h.b16 %v79
    %v466 = vunpack.c.l.b16 %v80
    %v467 = vunpack.c.l.b16 %v81
    %v468 = vunpack.c.h.b16 %v81
    %v469 = vunpack.c.l.b16 %v82
    %v470 = vunpack.c.h.b16 %v82
    %v471 = vunpack.c.l.b16 %v83
    %v472 = vunpack.c.l.b16 %v84
    %v473 = vunpack.c.h.b16 %v84
    %v474 = vunpack.c.l.b16 %v85
    %v475 = vunpack.c.h.b16 %v85
    %v476 = vunpack.c.l.b16 %v86
    %v477 = vunpack.c.l.b16 %v87
    %v478 = vunpack.c.h.b16 %v87
    %v479 = vunpack.c.l.b16 %v88
    %v480 = vunpack.c.h.b16 %v88
    %v481 = vunpack.c.l.b16 %v89
    %v482 = vunpack.c.l.b16 %v90
    %v483 = vunpack.c.h.b16 %v90
    %v484 = vunpack.c.l.b16 %v91
    %v485 = vunpack.c.h.b16 %v91
    %v486 = vunpack.c.l.b16 %v92
    %v487 = vunpack.c.l.b16 %v93
    %v488 = vunpack.c.h.b16 %v93
    %v489 = vunpack.c.l.b16 %v94
    %v490 = vunpack.c.h.b16 %v94
    %v491 = vunpack.c.l.b16 %v95
    %v492 = vunpack.c.l.b16 %v96
    %v493 = vunpack.c.h.b16 %v96
    %v494 = vunpack.c.l.b16 %v97
    %v495 = vunpack.c.h.b16 %v97
    %v496 = vunpack.c.l.b16 %v98
    %v497 = vunpack.c.l.b16 %v99
    %v498 = vunpack.c.h.b16 %v99
    %v499 = vunpack.c.l.b16 %v100
    %v500 = vunpack.c.h.b16 %v100
    %v501 = vunpack.c.l.b16 %v101
    %v502 = vunpack.c.l.b16 %v102
    %v503 = vunpack.c.h.b16 %v102
    %v504 = vunpack.c.l.b16 %v103
    %v505 = vunpack.c.h.b16 %v103
    %v506 = vunpack.c.l.b16 %v104
    %v507 = vunpack.c.l.b16 %v105
    %v508 = vunpack.c.h.b16 %v105
    %v509 = vunpack.c.l.b16 %v106
    %v510 = vunpack.c.h.b16 %v106
    %v511 = vunpack.c.l.b16 %v107
    %v512 = vunpack.c.l.b16 %v108
    %v513 = vunpack.c.h.b16 %v108
    %v514 = vunpack.c.l.b16 %v109
    %v515 = vunpack.c.h.b16 %v109
    %v516 = vunpack.c.l.b16 %v110
    %v517 = vunpack.c.l.b16 %v111
    %v518 = vunpack.c.h.b16 %v111
    %v519 = vunpack.c.l.b16 %v112
    %v520 = vunpack.c.h.b16 %v112
    %v521 = vunpack.c.l.b16 %v113
    %v522 = vunpack.c.l.b16 %v114
    %v523 = vunpack.c.h.b16 %v114
    %v524 = vunpack.c.l.b16 %v115
    %v525 = vunpack.c.h.b16 %v115
    %v526 = vunpack.c.l.b16 %v116
    %v527 = vunpack.c.l.b16 %v117
    %v528 = vunpack.c.h.b16 %v117
    %v529 = vunpack.c.l.b16 %v118
    %v530 = vunpack.c.h.b16 %v118
    %v531 = vunpack.c.l.b16 %v119
    %v532 = vunpack.c.l.b16 %v120
    %v533 = vunpack.c.h.b16 %v120
    %v534 = vunpack.c.l.b16 %v121
    %v535 = vunpack.c.h.b16 %v121
    %v536 = vunpack.c.l.b16 %v122
    %v537 = vunpack.c.l.b16 %v123
    %v538 = vunpack.c.h.b16 %v123
    %v539 = vunpack.c.l.b16 %v124
    %v540 = vunpack.c.h.b16 %v124
    %v541 = vunpack.c.l.b16 %v125
    %v542 = vunpack.c.l.b16 %v126
    %v543 = vunpack.c.h.b16 %v126
    %v544 = vunpack.c.l.b16 %v127
    %v545 = vunpack.c.h.b16 %v127
    %v546 = vunpack.c.l.b16 %v128
    %v547 = vunpack.c.l.b16 %v129
    %v548 = vunpack.c.h.b16 %v129
    %v549 = vunpack.c.l.b16 %v130
    %v550 = vunpack.c.h.b16 %v130
    %v551 = vunpack.c.l.b16 %v131
    %v552 = vunpack.c.l.b16 %v132
    %v553 = vunpack.c.h.b16 %v132
    %v554 = vunpack.c.l.b16 %v133
    %v555 = vunpack.c.h.b16 %v133
    %v556 = vunpack.c.l.b16 %v134
    %v557 = vunpack.c.l.b16 %v135
    %v558 = vunpack.c.h.b16 %v135
    %v559 = vunpack.c.l.b16 %v136
    %v560 = vunpack.c.h.b16 %v136
    %v561 = vunpack.c.l.b16 %v137
    %v562 = vunpack.c.l.b16 %v138
    %v563 = vunpack.c.h.b16 %v138
    %v564 = vunpack.c.l.b16 %v139
    %v565 = vunpack.c.h.b16 %v139
    %v566 = vunpack.c.l.b16 %v140
    %v567 = vunpack.c.l.b16 %v141
    %v568 = vunpack.c.h.b16 %v141
    %v569 = vunpack.c.l.b16 %v142
    %v570 = vunpack.c.h.b16 %v142
    %v571 = vunpack.c.l.b16 %v143
    %v572 = vunpack.c.l.b16 %v144
    %v573 = vunpack.c.h.b16 %v144
    %v574 = vunpack.c.l.b16 %v145
    %v575 = vunpack.c.h.b16 %v145
    %v576 = vunpack.c.l.b16 %v146
    %v577 = vunpack.c.l.b16 %v147
    %v578 = vunpack.c.h.b16 %v147
    %v579 = vunpack.c.l.b16 %v148
    %v580 = vunpack.c.h.b16 %v148
    %v581 = vunpack.c.l.b16 %v149
    %v582 = vunpack.c.l.b16 %v150
    %v583 = vunpack.c.h.b16 %v150
    %v584 = vunpack.c.l.b16 %v151
    %v585 = vunpack.c.h.b16 %v151
    %v586 = vunpack.c.l.b16 %v152
    %v587 = vunpack.c.l.b16 %v153
    %v588 = vunpack.c.h.b16 %v153
    %v589 = vunpack.c.l.b16 %v154
    %v590 = vunpack.c.h.b16 %v154
    %v591 = vunpack.c.l.b16 %v155
    %v592 = vunpack.c.l.b16 %v156
    %v593 = vunpack.c.h.b16 %v156
    %v594 = vunpack.c.l.b16 %v157
    %v595 = vunpack.c.h.b16 %v157
    %v596 = vunpack.c.l.b16 %v158
    %v597 = vpack.c.b16 %v442, %v437
    %v598 = vpack.c.b16 %v443, %v438
    %v599 = vpack.c.b16 %v444, %v439
    %v600 = vpack.c.b16 %v445, %v440
    %v601 = vpack.c.b16 %v446, %v441
    %v602 = vpack.c.b16 %v452, %v447
    %v603 = vpack.c.b16 %v453, %v448
    %v604 = vpack.c.b16 %v454, %v449
    %v605 = vpack.c.b16 %v455, %v450
    %v606 = vpack.c.b16 %v456, %v451
    %v607 = vpack.c.b16 %v462, %v457
    %v608 = vpack.c.b16 %v463, %v458
    %v609 = vpack.c.b16 %v464, %v459
    %v610 = vpack.c.b16 %v465, %v460
    %v611 = vpack.c.b16 %v466, %v461
    %v612 = vpack.c.b16 %v472, %v467
    %v613 = vpack.c.b16 %v473, %v468
    %v614 = vpack.c.b16 %v474, %v469
    %v615 = vpack.c.b16 %v475, %v470
    %v616 = vpack.c.b16 %v476, %v471
    %v617 = vpack.c.b16 %v482, %v477
    %v618 = vpack.c.b16 %v483, %v478
    %v619 = vpack.c.b16 %v484, %v479
    %v620 = vpack.c.b16 %v485, %v480
    %v621 = vpack.c.b16 %v486, %v481
    %v622 = vpack.c.b16 %v492, %v487
    %v623 = vpack.c.b16 %v493, %v488
    %v624 = vpack.c.b16 %v494, %v489
    %v625 = vpack.c.b16 %v495, %v490
    %v626 = vpack.c.b16 %v496, %v491
    %v627 = vpack.c.b16 %v502, %v497
    %v628 = vpack.c.b16 %v503, %v498
    %v629 = vpack.c.b16 %v504, %v499
    %v630 = vpack.c.b16 %v505, %v500
    %v631 = vpack.c.b16 %v506, %v501
    %v632 = vpack.c.b16 %v512, %v507
    %v633 = vpack.c.b16 %v513, %v508
    %v634 = vpack.c.b16 %v514, %v509
    %v635 = vpack.c.b16 %v515, %v510
    %v636 = vpack.c.b16 %v516, %v511
    %v637 = vpack.c.b16 %v522, %v517
    %v638 = vpack.c.b16 %v523, %v518
    %v639 = vpack.c.b16 %v524, %v519
    %v640 = vpack.c.b16 %v525, %v520
    %v641 = vpack.c.b16 %v526, %v521
    %v642 = vpack.c.b16 %v532, %v527
    %v643 = vpack.c.b16 %v533, %v528
    %v644 = vpack.c.b16 %v534, %v529
    %v645 = vpack.c.b16 %v535, %v530
    %v646 = vpack.c.b16 %v536, %v531
    %v647 = vpack.c.b16 %v542, %v537
    %v648 = vpack.c.b16 %v543, %v538
    %v649 = vpack.c.b16 %v544, %v539
    %v650 = vpack.c.b16 %v545, %v540
    %v651 = vpack.c.b16 %v546, %v541
    %v652 = vpack.c.b16 %v552, %v547
    %v653 = vpack.c.b16 %v553, %v548
    %v654 = vpack.c.b16 %v554, %v549
    %v655 = vpack.c.b16 %v555, %v550
    %v656 = vpack.c.b16 %v556, %v551
    %v657 = vpack.c.b16 %v562, %v557
    %v658 = vpack.c.b16 %v563, %v558
    %v659 = vpack.c.b16 %v564, %v559
    %v660 = vpack.c.b16 %v565, %v560
    %v661 = vpack.c.b16 %v566, %v561
    %v662 = vpack.c.b16 %v572, %v567
    %v663 = vpack.c.b16 %v573, %v568
    %v664 = vpack.c.b16 %v574, %v569
    %v665 = vpack.c.b16 %v575, %v570
    %v666 = vpack.c.b16 %v576, %v571
    %v667 = vpack.c.b16 %v582, %v577
    %v668 = vpack.c.b16 %v583, %v578
    %v669 = vpack.c.b16 %v584, %v579
    %v670 = vpack.c.b16 %v585, %v580
    %v671 = vpack.c.b16 %v586, %v581
    %v672 = vpack.c.b16 %v592, %v587
    %v673 = vpack.c.b16 %v593, %v588
    %v674 = vpack.c.b16 %v594, %v589
    %v675 = vpack.c.b16 %v595, %v590
    %v676 = vpack.c.b16 %v596, %v591
    %v917 = vunpack.c.l.b16 %v159
    %v918 = vunpack.c.h.b16 %v159
    %v919 = vunpack.c.l.b16 %v160
    %v920 = vunpack.c.h.b16 %v160
    %v921 = vunpack.c.l.b16 %v161
    %v922 = vunpack.c.h.b16 %v161
    %v923 = vunpack.c.l.b16 %v162
    %v924 = vunpack.c.h.b16 %v162
    %v925 = vunpack.c.l.b16 %v163
    %v926 = vunpack.c.h.b16 %v163
    %v927 = vunpack.c.l.b16 %v164
    %v928 = vunpack.c.h.b16 %v164
    %v929 = vunpack.c.l.b16 %v165
    %v930 = vunpack.c.h.b16 %v165
    %v931 = vunpack.c.l.b16 %v166
    %v932 = vunpack.c.h.b16 %v166
    %v933 = vunpack.c.l.b16 %v167
    %v934 = vunpack.c.h.b16 %v167
    %v935 = vunpack.c.l.b16 %v168
    %v936 = vunpack.c.h.b16 %v168
    %v937 = vunpack.c.l.b16 %v169
    %v938 = vunpack.c.h.b16 %v169
    %v939 = vunpack.c.l.b16 %v170
    %v940 = vunpack.c.h.b16 %v170
    %v941 = vunpack.c.l.b16 %v171
    %v942 = vunpack.c.h.b16 %v171
    %v943 = vunpack.c.l.b16 %v172
    %v944 = vunpack.c.h.b16 %v172
    %v945 = vunpack.c.l.b16 %v173
    %v946 = vunpack.c.h.b16 %v173
    %v947 = vunpack.c.l.b16 %v174
    %v948 = vunpack.c.h.b16 %v174
    %v949 = vunpack.c.l.b16 %v175
    %v950 = vunpack.c.h.b16 %v175
    %v951 = vunpack.c.l.b16 %v176
    %v952 = vunpack.c.h.b16 %v176
    %v953 = vunpack.c.l.b16 %v177
    %v954 = vunpack.c.h.b16 %v177
    %v955 = vunpack.c.l.b16 %v178
    %v956 = vunpack.c.h.b16 %v178
    %v957 = vunpack.c.l.b16 %v179
    %v958 = vunpack.c.h.b16 %v179
    %v959 = vunpack.c.l.b16 %v180
    %v960 = vunpack.c.h.b16 %v180
    %v961 = vunpack.c.l.b16 %v181
    %v962 = vunpack.c.h.b16 %v181
    %v963 = vunpack.c.l.b16 %v182
    %v964 = vunpack.c.h.b16 %v182
    %v965 = vunpack.c.l.b16 %v183
    %v966 = vunpack.c.h.b16 %v183
    %v967 = vunpack.c.l.b16 %v184
    %v968 = vunpack.c.h.b16 %v184
    %v969 = vunpack.c.l.b16 %v185
    %v970 = vunpack.c.h.b16 %v185
    %v971 = vunpack.c.l.b16 %v186
    %v972 = vunpack.c.h.b16 %v186
    %v973 = vunpack.c.l.b16 %v187
    %v974 = vunpack.c.h.b16 %v187
    %v975 = vunpack.c.l.b16 %v188
    %v976 = vunpack.c.h.b16 %v188
    %v977 = vunpack.c.l.b16 %v189
    %v978 = vunpack.c.h.b16 %v189
    %v979 = vunpack.c.l.b16 %v190
    %v980 = vunpack.c.h.b16 %v190
    %v981 = vunpack.c.l.b16 %v191
    %v982 = vunpack.c.h.b16 %v191
    %v983 = vunpack.c.l.b16 %v192
    %v984 = vunpack.c.h.b16 %v192
    %v985 = vunpack.c.l.b16 %v193
    %v986 = vunpack.c.h.b16 %v193
    %v987 = vunpack.c.l.b16 %v194
    %v988 = vunpack.c.h.b16 %v194
    %v989 = vunpack.c.l.b16 %v195
    %v990 = vunpack.c.h.b16 %v195
    %v991 = vunpack.c.l.b16 %v196
    %v992 = vunpack.c.h.b16 %v196
    %v993 = vunpack.c.l.b16 %v197
    %v994 = vunpack.c.h.b16 %v197
    %v995 = vunpack.c.l.b16 %v198
    %v996 = vunpack.c.h.b16 %v198
    %v997 = vunpack.c.l.b16 %v199
    %v998 = vunpack.c.h.b16 %v199
    %v999 = vunpack.c.l.b16 %v200
    %v1000 = vunpack.c.h.b16 %v200
    %v1001 = vunpack.c.l.b16 %v201
    %v1002 = vunpack.c.h.b16 %v201
    %v1003 = vunpack.c.l.b16 %v202
    %v1004 = vunpack.c.h.b16 %v202
    %v1005 = vunpack.c.l.b16 %v203
    %v1006 = vunpack.c.h.b16 %v203
    %v1007 = vunpack.c.l.b16 %v204
    %v1008 = vunpack.c.h.b16 %v204
    %v1009 = vunpack.c.l.b16 %v205
    %v1010 = vunpack.c.h.b16 %v205
    %v1011 = vunpack.c.l.b16 %v206
    %v1012 = vunpack.c.h.b16 %v206
    %v1013 = vunpack.c.l.b16 %v207
    %v1014 = vunpack.c.h.b16 %v207
    %v1015 = vunpack.c.l.b16 %v208
    %v1016 = vunpack.c.h.b16 %v208
    %v1017 = vunpack.c.l.b16 %v209
    %v1018 = vunpack.c.h.b16 %v209
    %v1019 = vunpack.c.l.b16 %v210
    %v1020 = vunpack.c.h.b16 %v210
    %v1021 = vunpack.c.l.b16 %v211
    %v1022 = vunpack.c.h.b16 %v211
    %v1023 = vunpack.c.l.b16 %v212
    %v1024 = vunpack.c.h.b16 %v212
    %v1025 = vunpack.c.l.b16 %v213
    %v1026 = vunpack.c.h.b16 %v213
    %v1027 = vunpack.c.l.b16 %v214
    %v1028 = vunpack.c.h.b16 %v214
    %v1029 = vunpack.c.l.b16 %v215
    %v1030 = vunpack.c.h.b16 %v215
    %v1031 = vunpack.c.l.b16 %v216
    %v1032 = vunpack.c.h.b16 %v216
    %v1033 = vunpack.c.l.b16 %v217
    %v1034 = vunpack.c.h.b16 %v217
    %v1035 = vunpack.c.l.b16 %v218
    %v1036 = vunpack.c.h.b16 %v218
    %v1037 = vunpack.c.l.b16 %v219
    %v1038 = vunpack.c.h.b16 %v219
    %v1039 = vunpack.c.l.b16 %v220
    %v1040 = vunpack.c.h.b16 %v220
    %v1041 = vunpack.c.l.b16 %v221
    %v1042 = vunpack.c.h.b16 %v221
    %v1043 = vunpack.c.l.b16 %v222
    %v1044 = vunpack.c.h.b16 %v222
    %v1045 = vunpack.c.l.b16 %v223
    %v1046 = vunpack.c.h.b16 %v223
    %v1047 = vunpack.c.l.b16 %v224
    %v1048 = vunpack.c.h.b16 %v224
    %v1049 = vunpack.c.l.b16 %v225
    %v1050 = vunpack.c.h.b16 %v225
    %v1051 = vunpack.c.l.b16 %v226
    %v1052 = vunpack.c.h.b16 %v226
    %v1053 = vunpack.c.l.b16 %v227
    %v1054 = vunpack.c.h.b16 %v227
    %v1055 = vunpack.c.l.b16 %v228
    %v1056 = vunpack.c.h.b16 %v228
    %v1057 = vunpack.c.l.b16 %v229
    %v1058 = vunpack.c.h.b16 %v229
    %v1059 = vunpack.c.l.b16 %v230
    %v1060 = vunpack.c.h.b16 %v230
    %v1061 = vunpack.c.l.b16 %v231
    %v1062 = vunpack.c.h.b16 %v231
    %v1063 = vunpack.c.l.b16 %v232
    %v1064 = vunpack.c.h.b16 %v232
    %v1065 = vunpack.c.l.b16 %v233
    %v1066 = vunpack.c.h.b16 %v233
    %v1067 = vunpack.c.l.b16 %v234
    %v1068 = vunpack.c.h.b16 %v234
    %v1069 = vunpack.c.l.b16 %v235
    %v1070 = vunpack.c.h.b16 %v235
    %v1071 = vunpack.c.l.b16 %v236
    %v1072 = vunpack.c.h.b16 %v236
    %v1073 = vunpack.c.l.b16 %v237
    %v1074 = vunpack.c.h.b16 %v237
    %v1075 = vunpack.c.l.b16 %v238
    %v1076 = vunpack.c.h.b16 %v238
    %v1077 = vunpack.c.l.b16 %v239
    %v1078 = vunpack.c.h.b16 %v239
    %v1079 = vunpack.c.l.b16 %v240
    %v1080 = vunpack.c.h.b16 %v240
    %v1081 = vunpack.c.l.b16 %v241
    %v1082 = vunpack.c.h.b16 %v241
    %v1083 = vunpack.c.l.b16 %v242
    %v1084 = vunpack.c.h.b16 %v242
    %v1085 = vunpack.c.l.b16 %v243
    %v1086 = vunpack.c.h.b16 %v243
    %v1087 = vunpack.c.l.b16 %v244
    %v1088 = vunpack.c.h.b16 %v244
    %v1089 = vunpack.c.l.b16 %v245
    %v1090 = vunpack.c.h.b16 %v245
    %v1091 = vunpack.c.l.b16 %v246
    %v1092 = vunpack.c.h.b16 %v246
    %v1093 = vunpack.c.l.b16 %v247
    %v1094 = vunpack.c.h.b16 %v247
    %v1095 = vunpack.c.l.b16 %v248
    %v1096 = vunpack.c.h.b16 %v248
    %v1097 = vunpack.c.l.b16 %v249
    %v1098 = vunpack.c.h.b16 %v249
    %v1099 = vunpack.c.l.b16 %v250
    %v1100 = vunpack.c.h.b16 %v250
    %v1101 = vunpack.c.l.b16 %v251
    %v1102 = vunpack.c.h.b16 %v251
    %v1103 = vunpack.c.l.b16 %v252
    %v1104 = vunpack.c.h.b16 %v252
    %v1105 = vunpack.c.l.b16 %v253
    %v1106 = vunpack.c.h.b16 %v253
    %v1107 = vunpack.c.l.b16 %v254
    %v1108 = vunpack.c.h.b16 %v254
    %v1109 = vunpack.c.l.b16 %v255
    %v1110 = vunpack.c.h.b16 %v255
    %v1111 = vunpack.c.l.b16 %v256
    %v1112 = vunpack.c.h.b16 %v256
    %v1113 = vunpack.c.l.b16 %v257
    %v1114 = vunpack.c.h.b16 %v257
    %v1115 = vunpack.c.l.b16 %v258
    %v1116 = vunpack.c.h.b16 %v258
    %v1117 = vunpack.c.l.b16 %v259
    %v1118 = vunpack.c.h.b16 %v259
    %v1119 = vunpack.c.l.b16 %v260
    %v1120 = vunpack.c.h.b16 %v260
    %v1121 = vunpack.c.l.b16 %v261
    %v1122 = vunpack.c.h.b16 %v261
    %v1123 = vunpack.c.l.b16 %v262
    %v1124 = vunpack.c.h.b16 %v262
    %v1125 = vunpack.c.l.b16 %v263
    %v1126 = vunpack.c.h.b16 %v263
    %v1127 = vunpack.c.l.b16 %v264
    %v1128 = vunpack.c.h.b16 %v264
    %v1129 = vunpack.c.l.b16 %v265
    %v1130 = vunpack.c.h.b16 %v265
    %v1131 = vunpack.c.l.b16 %v266
    %v1132 = vunpack.c.h.b16 %v266
    %v1133 = vunpack.c.l.b16 %v267
    %v1134 = vunpack.c.h.b16 %v267
    %v1135 = vunpack.c.l.b16 %v268
    %v1136 = vunpack.c.h.b16 %v268
    %v1137 = vunpack.c.l.b16 %v269
    %v1138 = vunpack.c.h.b16 %v269
    %v1139 = vunpack.c.l.b16 %v270
    %v1140 = vunpack.c.h.b16 %v270
    %v1141 = vunpack.c.l.b16 %v271
    %v1142 = vunpack.c.h.b16 %v271
    %v1143 = vunpack.c.l.b16 %v272
    %v1144 = vunpack.c.h.b16 %v272
    %v1145 = vunpack.c.l.b16 %v273
    %v1146 = vunpack.c.h.b16 %v273
    %v1147 = vunpack.c.l.b16 %v274
    %v1148 = vunpack.c.h.b16 %v274
    %v1149 = vunpack.c.l.b16 %v275
    %v1150 = vunpack.c.h.b16 %v275
    %v1151 = vunpack.c.l.b16 %v276
    %v1152 = vunpack.c.h.b16 %v276
    %v1153 = vunpack.c.l.b16 %v277
    %v1154 = vunpack.c.h.b16 %v277
    %v1155 = vunpack.c.l.b16 %v278
    %v1156 = vunpack.c.h.b16 %v278
    %v1157 = vunpack.c.l.b16 %v279
    %v1158 = vunpack.c.h.b16 %v279
    %v1159 = vunpack.c.l.b16 %v280
    %v1160 = vunpack.c.h.b16 %v280
    %v1161 = vunpack.c.l.b16 %v281
    %v1162 = vunpack.c.h.b16 %v281
    %v1163 = vunpack.c.l.b16 %v282
    %v1164 = vunpack.c.h.b16 %v282
    %v1165 = vunpack.c.l.b16 %v283
    %v1166 = vunpack.c.h.b16 %v283
    %v1167 = vunpack.c.l.b16 %v284
    %v1168 = vunpack.c.h.b16 %v284
    %v1169 = vunpack.c.l.b16 %v285
    %v1170 = vunpack.c.h.b16 %v285
    %v1171 = vunpack.c.l.b16 %v286
    %v1172 = vunpack.c.h.b16 %v286
    %v1173 = vunpack.c.l.b16 %v287
    %v1174 = vunpack.c.h.b16 %v287
    %v1175 = vunpack.c.l.b16 %v288
    %v1176 = vunpack.c.h.b16 %v288
    %v1177 = vunpack.c.l.b16 %v289
    %v1178 = vunpack.c.h.b16 %v289
    %v1179 = vunpack.c.l.b16 %v290
    %v1180 = vunpack.c.h.b16 %v290
    %v1181 = vunpack.c.l.b16 %v291
    %v1182 = vunpack.c.h.b16 %v291
    %v1183 = vunpack.c.l.b16 %v292
    %v1184 = vunpack.c.h.b16 %v292
    %v1185 = vunpack.c.l.b16 %v293
    %v1186 = vunpack.c.h.b16 %v293
    %v1187 = vunpack.c.l.b16 %v294
    %v1188 = vunpack.c.h.b16 %v294
    %v1189 = vunpack.c.l.b16 %v295
    %v1190 = vunpack.c.h.b16 %v295
    %v1191 = vunpack.c.l.b16 %v296
    %v1192 = vunpack.c.h.b16 %v296
    %v1193 = vunpack.c.l.b16 %v297
    %v1194 = vunpack.c.h.b16 %v297
    %v1195 = vunpack.c.l.b16 %v298
    %v1196 = vunpack.c.h.b16 %v298
    %v1197 = vunpack.c.l.b16 %v299
    %v1198 = vunpack.c.h.b16 %v299
    %v1199 = vunpack.c.l.b16 %v300
    %v1200 = vunpack.c.h.b16 %v300
    %v1201 = vunpack.c.l.b16 %v301
    %v1202 = vunpack.c.h.b16 %v301
    %v1203 = vunpack.c.l.b16 %v302
    %v1204 = vunpack.c.h.b16 %v302
    %v1205 = vunpack.c.l.b16 %v303
    %v1206 = vunpack.c.h.b16 %v303
    %v1207 = vunpack.c.l.b16 %v304
    %v1208 = vunpack.c.h.b16 %v304
    %v1209 = vunpack.c.l.b16 %v305
    %v1210 = vunpack.c.h.b16 %v305
    %v1211 = vunpack.c.l.b16 %v306
    %v1212 = vunpack.c.h.b16 %v306
    %v1213 = vunpack.c.l.b16 %v307
    %v1214 = vunpack.c.h.b16 %v307
    %v1215 = vunpack.c.l.b16 %v308
    %v1216 = vunpack.c.h.b16 %v308
    %v1217 = vunpack.c.l.b16 %v309
    %v1218 = vunpack.c.h.b16 %v309
    %v1219 = vunpack.c.l.b16 %v310
    %v1220 = vunpack.c.h.b16 %v310
    %v1221 = vunpack.c.l.b16 %v311
    %v1222 = vunpack.c.h.b16 %v311
    %v1223 = vunpack.c.l.b16 %v312
    %v1224 = vunpack.c.h.b16 %v312
    %v1225 = vunpack.c.l.b16 %v313
    %v1226 = vunpack.c.h.b16 %v313
    %v1227 = vunpack.c.l.b16 %v314
    %v1228 = vunpack.c.h.b16 %v314
    %v1229 = vunpack.c.l.b16 %v315
    %v1230 = vunpack.c.h.b16 %v315
    %v1231 = vunpack.c.l.b16 %v316
    %v1232 = vunpack.c.h.b16 %v316
    %v1233 = vunpack.c.l.b16 %v317
    %v1234 = vunpack.c.h.b16 %v317
    %v1235 = vunpack.c.l.b16 %v318
    %v1236 = vunpack.c.h.b16 %v318
    %v1237 = vpack.c.b16 %v921, %v917
    %v1238 = vpack.c.b16 %v922, %v918
    %v1239 = vpack.c.b16 %v923, %v919
    %v1240 = vpack.c.b16 %v924, %v920
    %v1241 = vpack.c.b16 %v929, %v925
    %v1242 = vpack.c.b16 %v930, %v926
    %v1243 = vpack.c.b16 %v931, %v927
    %v1244 = vpack.c.b16 %v932, %v928
    %v1245 = vpack.c.b16 %v937, %v933
    %v1246 = vpack.c.b16 %v938, %v934
    %v1247 = vpack.c.b16 %v939, %v935
    %v1248 = vpack.c.b16 %v940, %v936
    %v1249 = vpack.c.b16 %v945, %v941
    %v1250 = vpack.c.b16 %v946, %v942
    %v1251 = vpack.c.b16 %v947, %v943
    %v1252 = vpack.c.b16 %v948, %v944
    %v1253 = vpack.c.b16 %v953, %v949
    %v1254 = vpack.c.b16 %v954, %v950
    %v1255 = vpack.c.b16 %v955, %v951
    %v1256 = vpack.c.b16 %v956, %v952
    %v1257 = vpack.c.b16 %v961, %v957
    %v1258 = vpack.c.b16 %v962, %v958
    %v1259 = vpack.c.b16 %v963, %v959
    %v1260 = vpack.c.b16 %v964, %v960
    %v1261 = vpack.c.b16 %v969, %v965
    %v1262 = vpack.c.b16 %v970, %v966
    %v1263 = vpack.c.b16 %v971, %v967
    %v1264 = vpack.c.b16 %v972, %v968
    %v1265 = vpack.c.b16 %v977, %v973
    %v1266 = vpack.c.b16 %v978, %v974
    %v1267 = vpack.c.b16 %v979, %v975
    %v1268 = vpack.c.b16 %v980, %v976
    %v1269 = vpack.c.b16 %v985, %v981
    %v1270 = vpack.c.b16 %v986, %v982
    %v1271 = vpack.c.b16 %v987, %v983
    %v1272 = vpack.c.b16 %v988, %v984
    %v1273 = vpack.c.b16 %v993, %v989
    %v1274 = vpack.c.b16 %v994, %v990
    %v1275 = vpack.c.b16 %v995, %v991
    %v1276 = vpack.c.b16 %v996, %v992
    %v1277 = vpack.c.b16 %v1001, %v997
    %v1278 = vpack.c.b16 %v1002, %v998
    %v1279 = vpack.c.b16 %v1003, %v999
    %v1280 = vpack.c.b16 %v1004, %v1000
    %v1281 = vpack.c.b16 %v1009, %v1005
    %v1282 = vpack.c.b16 %v1010, %v1006
    %v1283 = vpack.c.b16 %v1011, %v1007
    %v1284 = vpack.c.b16 %v1012, %v1008
    %v1285 = vpack.c.b16 %v1017, %v1013
    %v1286 = vpack.c.b16 %v1018, %v1014
    %v1287 = vpack.c.b16 %v1019, %v1015
    %v1288 = vpack.c.b16 %v1020, %v1016
    %v1289 = vpack.c.b16 %v1025, %v1021
    %v1290 = vpack.c.b16 %v1026, %v1022
    %v1291 = vpack.c.b16 %v1027, %v1023
    %v1292 = vpack.c.b16 %v1028, %v1024
    %v1293 = vpack.c.b16 %v1033, %v1029
    %v1294 = vpack.c.b16 %v1034, %v1030
    %v1295 = vpack.c.b16 %v1035, %v1031
    %v1296 = vpack.c.b16 %v1036, %v1032
    %v1297 = vpack.c.b16 %v1041, %v1037
    %v1298 = vpack.c.b16 %v1042, %v1038
    %v1299 = vpack.c.b16 %v1043, %v1039
    %v1300 = vpack.c.b16 %v1044, %v1040
    %v1301 = vpack.c.b16 %v1049, %v1045
    %v1302 = vpack.c.b16 %v1050, %v1046
    %v1303 = vpack.c.b16 %v1051, %v1047
    %v1304 = vpack.c.b16 %v1052, %v1048
    %v1305 = vpack.c.b16 %v1057, %v1053
    %v1306 = vpack.c.b16 %v1058, %v1054
    %v1307 = vpack.c.b16 %v1059, %v1055
    %v1308 = vpack.c.b16 %v1060, %v1056
    %v1309 = vpack.c.b16 %v1065, %v1061
    %v1310 = vpack.c.b16 %v1066, %v1062
    %v1311 = vpack.c.b16 %v1067, %v1063
    %v1312 = vpack.c.b16 %v1068, %v1064
    %v1313 = vpack.c.b16 %v1073, %v1069
    %v1314 = vpack.c.b16 %v1074, %v1070
    %v1315 = vpack.c.b16 %v1075, %v1071
    %v1316 = vpack.c.b16 %v1076, %v1072
    %v1317 = vpack.c.b16 %v1081, %v1077
    %v1318 = vpack.c.b16 %v1082, %v1078
    %v1319 = vpack.c.b16 %v1083, %v1079
    %v1320 = vpack.c.b16 %v1084, %v1080
    %v1321 = vpack.c.b16 %v1089, %v1085
    %v1322 = vpack.c.b16 %v1090, %v1086
    %v1323 = vpack.c.b16 %v1091, %v1087
    %v1324 = vpack.c.b16 %v1092, %v1088
    %v1325 = vpack.c.b16 %v1097, %v1093
    %v1326 = vpack.c.b16 %v1098, %v1094
    %v1327 = vpack.c.b16 %v1099, %v1095
    %v1328 = vpack.c.b16 %v1100, %v1096
    %v1329 = vpack.c.b16 %v1105, %v1101
    %v1330 = vpack.c.b16 %v1106, %v1102
    %v1331 = vpack.c.b16 %v1107, %v1103
    %v1332 = vpack.c.b16 %v1108, %v1104
    %v1333 = vpack.c.b16 %v1113, %v1109
    %v1334 = vpack.c.b16 %v1114, %v1110
    %v1335 = vpack.c.b16 %v1115, %v1111
    %v1336 = vpack.c.b16 %v1116, %v1112
    %v1337 = vpack.c.b16 %v1121, %v1117
    %v1338 = vpack.c.b16 %v1122, %v1118
    %v1339 = vpack.c.b16 %v1123, %v1119
    %v1340 = vpack.c.b16 %v1124, %v1120
    %v1341 = vpack.c.b16 %v1129, %v1125
    %v1342 = vpack.c.b16 %v1130, %v1126
    %v1343 = vpack.c.b16 %v1131, %v1127
    %v1344 = vpack.c.b16 %v1132, %v1128
    %v1345 = vpack.c.b16 %v1137, %v1133
    %v1346 = vpack.c.b16 %v1138, %v1134
    %v1347 = vpack.c.b16 %v1139, %v1135
    %v1348 = vpack.c.b16 %v1140, %v1136
    %v1349 = vpack.c.b16 %v1145, %v1141
    %v1350 = vpack.c.b16 %v1146, %v1142
    %v1351 = vpack.c.b16 %v1147, %v1143
    %v1352 = vpack.c.b16 %v1148, %v1144
    %v1353 = vpack.c.b16 %v1153, %v1149
    %v1354 = vpack.c.b16 %v1154, %v1150
    %v1355 = vpack.c.b16 %v1155, %v1151
    %v1356 = vpack.c.b16 %v1156, %v1152
    %v1357 = vpack.c.b16 %v1161, %v1157
    %v1358 = vpack.c.b16 %v1162, %v1158
    %v1359 = vpack.c.b16 %v1163, %v1159
    %v1360 = vpack.c.b16 %v1164, %v1160
    %v1361 = vpack.c.b16 %v1169, %v1165
    %v1362 = vpack.c.b16 %v1170, %v1166
    %v1363 = vpack.c.b16 %v1171, %v1167
    %v1364 = vpack.c.b16 %v1172, %v1168
    %v1365 = vpack.c.b16 %v1177, %v1173
    %v1366 = vpack.c.b16 %v1178, %v1174
    %v1367 = vpack.c.b16 %v1179, %v1175
    %v1368 = vpack.c.b16 %v1180, %v1176
    %v1369 = vpack.c.b16 %v1185, %v1181
    %v1370 = vpack.c.b16 %v1186, %v1182
    %v1371 = vpack.c.b16 %v1187, %v1183
    %v1372 = vpack.c.b16 %v1188, %v1184
    %v1373 = vpack.c.b16 %v1193, %v1189
    %v1374 = vpack.c.b16 %v1194, %v1190
    %v1375 = vpack.c.b16 %v1195, %v1191
    %v1376 = vpack.c.b16 %v1196, %v1192
    %v1377 = vpack.c.b16 %v1201, %v1197
    %v1378 = vpack.c.b16 %v1202, %v1198
    %v1379 = vpack.c.b16 %v1203, %v1199
    %v1380 = vpack.c.b16 %v1204, %v1200
    %v1381 = vpack.c.b16 %v1209, %v1205
    %v1382 = vpack.c.b16 %v1210, %v1206
    %v1383 = vpack.c.b16 %v1211, %v1207
    %v1384 = vpack.c.b16 %v1212, %v1208
    %v1385 = vpack.c.b16 %v1217, %v1213
    %v1386 = vpack.c.b16 %v1218, %v1214
    %v1387 = vpack.c.b16 %v1219, %v1215
    %v1388 = vpack.c.b16 %v1220, %v1216
    %v1389 = vpack.c.b16 %v1225, %v1221
    %v1390 = vpack.c.b16 %v1226, %v1222
    %v1391 = vpack.c.b16 %v1227, %v1223
    %v1392 = vpack.c.b16 %v1228, %v1224
    %v1393 = vpack.c.b16 %v1233, %v1229
    %v1394 = vpack.c.b16 %v1234, %v1230
    %v1395 = vpack.c.b16 %v1235, %v1231
    %v1396 = vpack.c.b16 %v1236, %v1232
    %1557 = vmatprep.subr.bf16.mxu0 %v1238
    %1558 = vmatpush1.bf16.msra.mxu0 %v1237
    %1559 = vmatprep.subr.bf16.mxu0 %v1242
    %1560 = vmatpush1.bf16.msra.mxu0 %v1241
    %1561 = vmatprep.subr.bf16.mxu0 %v1246
    %1562 = vmatpush1.bf16.msra.mxu0 %v1245
    %1563 = vmatprep.subr.bf16.mxu0 %v1250
    %1564 = vmatpush1.bf16.msra.mxu0 %v1249
    %1565 = vmatprep.subr.bf16.mxu0 %v1254
    %1566 = vmatpush1.bf16.msra.mxu0 %v1253
    %1567 = vmatprep.subr.bf16.mxu0 %v1258
    %1568 = vmatpush1.bf16.msra.mxu0 %v1257
    %1569 = vmatprep.subr.bf16.mxu0 %v1262
    %1570 = vmatpush1.bf16.msra.mxu0 %v1261
    %1571 = vmatprep.subr.bf16.mxu0 %v1266
    %1572 = vmatpush1.bf16.msra.mxu0 %v1265
    %1573 = vmatprep.subr.bf16.mxu0 %v1270
    %1574 = vmatpush1.bf16.msra.mxu0 %v1269
    %1575 = vmatprep.subr.bf16.mxu0 %v1274
    %1576 = vmatpush1.bf16.msra.mxu0 %v1273
    %1577 = vmatprep.subr.bf16.mxu0 %v1278
    %1578 = vmatpush1.bf16.msra.mxu0 %v1277
    %1579 = vmatprep.subr.bf16.mxu0 %v1282
    %1580 = vmatpush1.bf16.msra.mxu0 %v1281
    %1581 = vmatprep.subr.bf16.mxu0 %v1286
    %1582 = vmatpush1.bf16.msra.mxu0 %v1285
    %1583 = vmatprep.subr.bf16.mxu0 %v1290
    %1584 = vmatpush1.bf16.msra.mxu0 %v1289
    %1585 = vmatprep.subr.bf16.mxu0 %v1294
    %1586 = vmatpush1.bf16.msra.mxu0 %v1293
    %1587 = vmatprep.subr.bf16.mxu0 %v1298
    %1588 = vmatpush1.bf16.msra.mxu0 %v1297
    %1589 = vmatprep.mubr.bf16.mxu0 %v598
    %1590 = vmatmul.mubr.bf16.gmra.mrb[0].mxu0 %v597
    %v1591 = vpop.f32.mrb[0].mxu0
    %v1592 = vadd.f32 %v324, %v1591
    %v1593 = vpop.f32.mrb[0].mxu0
    %v1594 = vadd.f32 %v328, %v1593
    %v1595 = vpop.f32.mrb[0].mxu0
    %v1596 = vadd.f32 %v324, %v1595
    %v1597 = vpop.f32.mrb[0].mxu0
    %v1598 = vadd.f32 %v328, %v1597
    %1599 = vmatprep.mubr.bf16.mxu0 %v603
    %1600 = vmatmul.mubr.bf16.gmra.mrb[0].mxu0 %v602
    %v1601 = vpop.f32.mrb[0].mxu0
    %v1602 = vadd.f32 %v324, %v1601
    %v1603 = vpop.f32.mrb[0].mxu0
    %v1604 = vadd.f32 %v328, %v1603
    %v1605 = vpop.f32.mrb[0].mxu0
    %v1606 = vadd.f32 %v324, %v1605
    %v1607 = vpop.f32.mrb[0].mxu0
    %v1608 = vadd.f32 %v328, %v1607
    %1609 = vmatprep.mubr.bf16.mxu0 %v608
    %1610 = vmatmul.mubr.bf16.gmra.mrb[0].mxu0 %v607
    %v1611 = vpop.f32.mrb[0].mxu0
    %v1612 = vadd.f32 %v324, %v1611
    %v1613 = vpop.f32.mrb[0].mxu0
    %v1614 = vadd.f32 %v328, %v1613
    %v1615 = vpop.f32.mrb[0].mxu0
    %v1616 = vadd.f32 %v324, %v1615
    %v1617 = vpop.f32.mrb[0].mxu0
    %v1618 = vadd.f32 %v328, %v1617
    %1619 = vmatprep.mubr.bf16.mxu0 %v613
    %1620 = vmatmul.mubr.bf16.gmra.mrb[0].mxu0 %v612
    %v1621 = vpop.f32.mrb[0].mxu0
    %v1622 = vadd.f32 %v324, %v1621
    %v1623 = vpop.f32.mrb[0].mxu0
    %v1624 = vadd.f32 %v328, %v1623
    %v1625 = vpop.f32.mrb[0].mxu0
    %v1626 = vadd.f32 %v324, %v1625
    %v1627 = vpop.f32.mrb[0].mxu0
    %v1628 = vadd.f32 %v328, %v1627
    %1629 = vmatprep.mubr.bf16.mxu0 %v618
    %1630 = vmatmul.mubr.bf16.gmra.mrb[0].mxu0 %v617
    %v1631 = vpop.f32.mrb[0].mxu0
    %v1632 = vadd.f32 %v324, %v1631
    %v1633 = vpop.f32.mrb[0].mxu0
    %v1634 = vadd.f32 %v328, %v1633
    %v1635 = vpop.f32.mrb[0].mxu0
    %v1636 = vadd.f32 %v324, %v1635
    %v1637 = vpop.f32.mrb[0].mxu0
    %v1638 = vadd.f32 %v328, %v1637
    %1639 = vmatprep.mubr.bf16.mxu0 %v623
    %1640 = vmatmul.mubr.bf16.gmra.mrb[0].mxu0 %v622
    %v1641 = vpop.f32.mrb[0].mxu0
    %v1642 = vadd.f32 %v324, %v1641
    %v1643 = vpop.f32.mrb[0].mxu0
    %v1644 = vadd.f32 %v328, %v1643
    %v1645 = vpop.f32.mrb[0].mxu0
    %v1646 = vadd.f32 %v324, %v1645
    %v1647 = vpop.f32.mrb[0].mxu0
    %v1648 = vadd.f32 %v328, %v1647
    %1649 = vmatprep.mubr.bf16.mxu0 %v628
    %1650 = vmatmul.mubr.bf16.gmra.mrb[0].mxu0 %v627
    %v1651 = vpop.f32.mrb[0].mxu0
    %v1652 = vadd.f32 %v324, %v1651
    %v1653 = vpop.f32.mrb[0].mxu0
    %v1654 = vadd.f32 %v328, %v1653
    %v1655 = vpop.f32.mrb[0].mxu0
    %v1656 = vadd.f32 %v324, %v1655
    %v1657 = vpop.f32.mrb[0].mxu0
    %v1658 = vadd.f32 %v328, %v1657
    %1659 = vmatprep.mubr.bf16.mxu0 %v633
    %1660 = vmatmul.mubr.bf16.gmra.mrb[0].mxu0 %v632
    %v1661 = vpop.f32.mrb[0].mxu0
    %v1662 = vadd.f32 %v324, %v1661
    %v1663 = vpop.f32.mrb[0].mxu0
    %v1664 = vadd.f32 %v328, %v1663
    %v1665 = vpop.f32.mrb[0].mxu0
    %v1666 = vadd.f32 %v324, %v1665
    %v1667 = vpop.f32.mrb[0].mxu0
    %v1668 = vadd.f32 %v328, %v1667
    %1669 = vmatprep.mubr.bf16.mxu0 %v638
    %1670 = vmatmul.mubr.bf16.gmra.mrb[0].mxu0 %v637
    %v1671 = vpop.f32.mrb[0].mxu0
    %v1672 = vadd.f32 %v324, %v1671
    %v1673 = vpop.f32.mrb[0].mxu0
    %v1674 = vadd.f32 %v328, %v1673
    %v1675 = vpop.f32.mrb[0].mxu0
    %v1676 = vadd.f32 %v324, %v1675
    %v1677 = vpop.f32.mrb[0].mxu0
    %v1678 = vadd.f32 %v328, %v1677
    %1679 = vmatprep.mubr.bf16.mxu0 %v643
    %1680 = vmatmul.mubr.bf16.gmra.mrb[0].mxu0 %v642
    %v1681 = vpop.f32.mrb[0].mxu0
    %v1682 = vadd.f32 %v324, %v1681
    %v1683 = vpop.f32.mrb[0].mxu0
    %v1684 = vadd.f32 %v328, %v1683
    %v1685 = vpop.f32.mrb[0].mxu0
    %v1686 = vadd.f32 %v324, %v1685
    %v1687 = vpop.f32.mrb[0].mxu0
    %v1688 = vadd.f32 %v328, %v1687
    %1689 = vmatprep.mubr.bf16.mxu0 %v648
    %1690 = vmatmul.mubr.bf16.gmra.mrb[0].mxu0 %v647
    %v1691 = vpop.f32.mrb[0].mxu0
    %v1692 = vadd.f32 %v324, %v1691
    %v1693 = vpop.f32.mrb[0].mxu0
    %v1694 = vadd.f32 %v328, %v1693
    %v1695 = vpop.f32.mrb[0].mxu0
    %v1696 = vadd.f32 %v324, %v1695
    %v1697 = vpop.f32.mrb[0].mxu0
    %v1698 = vadd.f32 %v328, %v1697
    %1699 = vmatprep.mubr.bf16.mxu0 %v653
    %1700 = vmatmul.mubr.bf16.gmra.mrb[0].mxu0 %v652
    %v1701 = vpop.f32.mrb[0].mxu0
    %v1702 = vadd.f32 %v324, %v1701
    %v1703 = vpop.f32.mrb[0].mxu0
    %v1704 = vadd.f32 %v328, %v1703
    %v1705 = vpop.f32.mrb[0].mxu0
    %v1706 = vadd.f32 %v324, %v1705
    %v1707 = vpop.f32.mrb[0].mxu0
    %v1708 = vadd.f32 %v328, %v1707
    %1709 = vmatprep.mubr.bf16.mxu0 %v658
    %1710 = vmatmul.mubr.bf16.gmra.mrb[0].mxu0 %v657
    %v1711 = vpop.f32.mrb[0].mxu0
    %v1712 = vadd.f32 %v324, %v1711
    %v1713 = vpop.f32.mrb[0].mxu0
    %v1714 = vadd.f32 %v328, %v1713
    %v1715 = vpop.f32.mrb[0].mxu0
    %v1716 = vadd.f32 %v324, %v1715
    %v1717 = vpop.f32.mrb[0].mxu0
    %v1718 = vadd.f32 %v328, %v1717
    %1719 = vmatprep.mubr.bf16.mxu0 %v663
    %1720 = vmatmul.mubr.bf16.gmra.mrb[0].mxu0 %v662
    %v1721 = vpop.f32.mrb[0].mxu0
    %v1722 = vadd.f32 %v324, %v1721
    %v1723 = vpop.f32.mrb[0].mxu0
    %v1724 = vadd.f32 %v328, %v1723
    %v1725 = vpop.f32.mrb[0].mxu0
    %v1726 = vadd.f32 %v324, %v1725
    %v1727 = vpop.f32.mrb[0].mxu0
    %v1728 = vadd.f32 %v328, %v1727
    %1729 = vmatprep.mubr.bf16.mxu0 %v668
    %1730 = vmatmul.mubr.bf16.gmra.mrb[0].mxu0 %v667
    %v1731 = vpop.f32.mrb[0].mxu0
    %v1732 = vadd.f32 %v324, %v1731
    %v1733 = vpop.f32.mrb[0].mxu0
    %v1734 = vadd.f32 %v328, %v1733
    %v1735 = vpop.f32.mrb[0].mxu0
    %v1736 = vadd.f32 %v324, %v1735
    %v1737 = vpop.f32.mrb[0].mxu0
    %v1738 = vadd.f32 %v328, %v1737
    %1739 = vmatprep.mubr.bf16.mxu0 %v673
    %1740 = vmatmul.mubr.bf16.gmra.mrb[0].mxu0 %v672
    %v1741 = vpop.f32.mrb[0].mxu0
    %v1742 = vadd.f32 %v324, %v1741
    %v1743 = vpop.f32.mrb[0].mxu0
    %v1744 = vadd.f32 %v328, %v1743
    %v1745 = vpop.f32.mrb[0].mxu0
    %v1746 = vadd.f32 %v324, %v1745
    %v1747 = vpop.f32.mrb[0].mxu0
    %v1748 = vadd.f32 %v328, %v1747
    %1749 = vdwg.mxu0
    %1750 = vmatprep.subr.bf16.mxu0 %v1302
    %1751 = vmatpush1.bf16.msra.mxu0 %v1301
    %1752 = vmatprep.subr.bf16.mxu0 %v1306
    %1753 = vmatpush1.bf16.msra.mxu0 %v1305
    %1754 = vmatprep.subr.bf16.mxu0 %v1310
    %1755 = vmatpush1.bf16.msra.mxu0 %v1309
    %1756 = vmatprep.subr.bf16.mxu0 %v1314
    %1757 = vmatpush1.bf16.msra.mxu0 %v1313
    %1758 = vmatprep.subr.bf16.mxu0 %v1318
    %1759 = vmatpush1.bf16.msra.mxu0 %v1317
    %1760 = vmatprep.subr.bf16.mxu0 %v1322
    %1761 = vmatpush1.bf16.msra.mxu0 %v1321
    %1762 = vmatprep.subr.bf16.mxu0 %v1326
    %1763 = vmatpush1.bf16.msra.mxu0 %v1325
    %1764 = vmatprep.subr.bf16.mxu0 %v1330
    %1765 = vmatpush1.bf16.msra.mxu0 %v1329
    %1766 = vmatprep.subr.bf16.mxu0 %v1334
    %1767 = vmatpush1.bf16.msra.mxu0 %v1333
    %1768 = vmatprep.subr.bf16.mxu0 %v1338
    %1769 = vmatpush1.bf16.msra.mxu0 %v1337
    %1770 = vmatprep.subr.bf16.mxu0 %v1342
    %1771 = vmatpush1.bf16.msra.mxu0 %v1341
    %1772 = vmatprep.subr.bf16.mxu0 %v1346
    %1773 = vmatpush1.bf16.msra.mxu0 %v1345
    %1774 = vmatprep.subr.bf16.mxu0 %v1350
    %1775 = vmatpush1.bf16.msra.mxu0 %v1349
    %1776 = vmatprep.subr.bf16.mxu0 %v1354
    %1777 = vmatpush1.bf16.msra.mxu0 %v1353
    %1778 = vmatprep.subr.bf16.mxu0 %v1358
    %1779 = vmatpush1.bf16.msra.mxu0 %v1357
    %1780 = vmatprep.subr.bf16.mxu0 %v1362
    %1781 = vmatpush1.bf16.msra.mxu0 %v1361
    %1782 = vmatprep.mubr.bf16.mxu0 %v600
    %1783 = vmatmul.mubr.bf16.gmra.mrb[0].mxu0 %v599
    %v1784 = vpop.f32.mrb[0].mxu0
    %v1785 = vadd.f32 %v1592, %v1784
    %v1786 = vpop.f32.mrb[0].mxu0
    %v1787 = vadd.f32 %v1594, %v1786
    %v1788 = vpop.f32.mrb[0].mxu0
    %v1789 = vadd.f32 %v1596, %v1788
    %v1790 = vpop.f32.mrb[0].mxu0
    %v1791 = vadd.f32 %v1598, %v1790
    %1792 = vmatprep.mubr.bf16.mxu0 %v605
    %1793 = vmatmul.mubr.bf16.gmra.mrb[0].mxu0 %v604
    %v1794 = vpop.f32.mrb[0].mxu0
    %v1795 = vadd.f32 %v1602, %v1794
    %v1796 = vpop.f32.mrb[0].mxu0
    %v1797 = vadd.f32 %v1604, %v1796
    %v1798 = vpop.f32.mrb[0].mxu0
    %v1799 = vadd.f32 %v1606, %v1798
    %v1800 = vpop.f32.mrb[0].mxu0
    %v1801 = vadd.f32 %v1608, %v1800
    %1802 = vmatprep.mubr.bf16.mxu0 %v610
    %1803 = vmatmul.mubr.bf16.gmra.mrb[0].mxu0 %v609
    %v1804 = vpop.f32.mrb[0].mxu0
    %v1805 = vadd.f32 %v1612, %v1804
    %v1806 = vpop.f32.mrb[0].mxu0
    %v1807 = vadd.f32 %v1614, %v1806
    %v1808 = vpop.f32.mrb[0].mxu0
    %v1809 = vadd.f32 %v1616, %v1808
    %v1810 = vpop.f32.mrb[0].mxu0
    %v1811 = vadd.f32 %v1618, %v1810
    %1812 = vmatprep.mubr.bf16.mxu0 %v615
    %1813 = vmatmul.mubr.bf16.gmra.mrb[0].mxu0 %v614
    %v1814 = vpop.f32.mrb[0].mxu0
    %v1815 = vadd.f32 %v1622, %v1814
    %v1816 = vpop.f32.mrb[0].mxu0
    %v1817 = vadd.f32 %v1624, %v1816
    %v1818 = vpop.f32.mrb[0].mxu0
    %v1819 = vadd.f32 %v1626, %v1818
    %v1820 = vpop.f32.mrb[0].mxu0
    %v1821 = vadd.f32 %v1628, %v1820
    %1822 = vmatprep.mubr.bf16.mxu0 %v620
    %1823 = vmatmul.mubr.bf16.gmra.mrb[0].mxu0 %v619
    %v1824 = vpop.f32.mrb[0].mxu0
    %v1825 = vadd.f32 %v1632, %v1824
    %v1826 = vpop.f32.mrb[0].mxu0
    %v1827 = vadd.f32 %v1634, %v1826
    %v1828 = vpop.f32.mrb[0].mxu0
    %v1829 = vadd.f32 %v1636, %v1828
    %v1830 = vpop.f32.mrb[0].mxu0
    %v1831 = vadd.f32 %v1638, %v1830
    %1832 = vmatprep.mubr.bf16.mxu0 %v625
    %1833 = vmatmul.mubr.bf16.gmra.mrb[0].mxu0 %v624
    %v1834 = vpop.f32.mrb[0].mxu0
    %v1835 = vadd.f32 %v1642, %v1834
    %v1836 = vpop.f32.mrb[0].mxu0
    %v1837 = vadd.f32 %v1644, %v1836
    %v1838 = vpop.f32.mrb[0].mxu0
    %v1839 = vadd.f32 %v1646, %v1838
    %v1840 = vpop.f32.mrb[0].mxu0
    %v1841 = vadd.f32 %v1648, %v1840
    %1842 = vmatprep.mubr.bf16.mxu0 %v630
    %1843 = vmatmul.mubr.bf16.gmra.mrb[0].mxu0 %v629
    %v1844 = vpop.f32.mrb[0].mxu0
    %v1845 = vadd.f32 %v1652, %v1844
    %v1846 = vpop.f32.mrb[0].mxu0
    %v1847 = vadd.f32 %v1654, %v1846
    %v1848 = vpop.f32.mrb[0].mxu0
    %v1849 = vadd.f32 %v1656, %v1848
    %v1850 = vpop.f32.mrb[0].mxu0
    %v1851 = vadd.f32 %v1658, %v1850
    %1852 = vmatprep.mubr.bf16.mxu0 %v635
    %1853 = vmatmul.mubr.bf16.gmra.mrb[0].mxu0 %v634
    %v1854 = vpop.f32.mrb[0].mxu0
    %v1855 = vadd.f32 %v1662, %v1854
    %v1856 = vpop.f32.mrb[0].mxu0
    %v1857 = vadd.f32 %v1664, %v1856
    %v1858 = vpop.f32.mrb[0].mxu0
    %v1859 = vadd.f32 %v1666, %v1858
    %v1860 = vpop.f32.mrb[0].mxu0
    %v1861 = vadd.f32 %v1668, %v1860
    %1862 = vmatprep.mubr.bf16.mxu0 %v640
    %1863 = vmatmul.mubr.bf16.gmra.mrb[0].mxu0 %v639
    %v1864 = vpop.f32.mrb[0].mxu0
    %v1865 = vadd.f32 %v1672, %v1864
    %v1866 = vpop.f32.mrb[0].mxu0
    %v1867 = vadd.f32 %v1674, %v1866
    %v1868 = vpop.f32.mrb[0].mxu0
    %v1869 = vadd.f32 %v1676, %v1868
    %v1870 = vpop.f32.mrb[0].mxu0
    %v1871 = vadd.f32 %v1678, %v1870
    %1872 = vmatprep.mubr.bf16.mxu0 %v645
    %1873 = vmatmul.mubr.bf16.gmra.mrb[0].mxu0 %v644
    %v1874 = vpop.f32.mrb[0].mxu0
    %v1875 = vadd.f32 %v1682, %v1874
    %v1876 = vpop.f32.mrb[0].mxu0
    %v1877 = vadd.f32 %v1684, %v1876
    %v1878 = vpop.f32.mrb[0].mxu0
    %v1879 = vadd.f32 %v1686, %v1878
    %v1880 = vpop.f32.mrb[0].mxu0
    %v1881 = vadd.f32 %v1688, %v1880
    %1882 = vmatprep.mubr.bf16.mxu0 %v650
    %1883 = vmatmul.mubr.bf16.gmra.mrb[0].mxu0 %v649
    %v1884 = vpop.f32.mrb[0].mxu0
    %v1885 = vadd.f32 %v1692, %v1884
    %v1886 = vpop.f32.mrb[0].mxu0
    %v1887 = vadd.f32 %v1694, %v1886
    %v1888 = vpop.f32.mrb[0].mxu0
    %v1889 = vadd.f32 %v1696, %v1888
    %v1890 = vpop.f32.mrb[0].mxu0
    %v1891 = vadd.f32 %v1698, %v1890
    %1892 = vmatprep.mubr.bf16.mxu0 %v655
    %1893 = vmatmul.mubr.bf16.gmra.mrb[0].mxu0 %v654
    %v1894 = vpop.f32.mrb[0].mxu0
    %v1895 = vadd.f32 %v1702, %v1894
    %v1896 = vpop.f32.mrb[0].mxu0
    %v1897 = vadd.f32 %v1704, %v1896
    %v1898 = vpop.f32.mrb[0].mxu0
    %v1899 = vadd.f32 %v1706, %v1898
    %v1900 = vpop.f32.mrb[0].mxu0
    %v1901 = vadd.f32 %v1708, %v1900
    %1902 = vmatprep.mubr.bf16.mxu0 %v660
    %1903 = vmatmul.mubr.bf16.gmra.mrb[0].mxu0 %v659
    %v1904 = vpop.f32.mrb[0].mxu0
    %v1905 = vadd.f32 %v1712, %v1904
    %v1906 = vpop.f32.mrb[0].mxu0
    %v1907 = vadd.f32 %v1714, %v1906
    %v1908 = vpop.f32.mrb[0].mxu0
    %v1909 = vadd.f32 %v1716, %v1908
    %v1910 = vpop.f32.mrb[0].mxu0
    %v1911 = vadd.f32 %v1718, %v1910
    %1912 = vmatprep.mubr.bf16.mxu0 %v665
    %1913 = vmatmul.mubr.bf16.gmra.mrb[0].mxu0 %v664
    %v1914 = vpop.f32.mrb[0].mxu0
    %v1915 = vadd.f32 %v1722, %v1914
    %v1916 = vpop.f32.mrb[0].mxu0
    %v1917 = vadd.f32 %v1724, %v1916
    %v1918 = vpop.f32.mrb[0].mxu0
    %v1919 = vadd.f32 %v1726, %v1918
    %v1920 = vpop.f32.mrb[0].mxu0
    %v1921 = vadd.f32 %v1728, %v1920
    %1922 = vmatprep.mubr.bf16.mxu0 %v670
    %1923 = vmatmul.mubr.bf16.gmra.mrb[0].mxu0 %v669
    %v1924 = vpop.f32.mrb[0].mxu0
    %v1925 = vadd.f32 %v1732, %v1924
    %v1926 = vpop.f32.mrb[0].mxu0
    %v1927 = vadd.f32 %v1734, %v1926
    %v1928 = vpop.f32.mrb[0].mxu0
    %v1929 = vadd.f32 %v1736, %v1928
    %v1930 = vpop.f32.mrb[0].mxu0
    %v1931 = vadd.f32 %v1738, %v1930
    %1932 = vmatprep.mubr.bf16.mxu0 %v675
    %1933 = vmatmul.mubr.bf16.gmra.mrb[0].mxu0 %v674
    %v1934 = vpop.f32.mrb[0].mxu0
    %v1935 = vadd.f32 %v1742, %v1934
    %v1936 = vpop.f32.mrb[0].mxu0
    %v1937 = vadd.f32 %v1744, %v1936
    %v1938 = vpop.f32.mrb[0].mxu0
    %v1939 = vadd.f32 %v1746, %v1938
    %v1940 = vpop.f32.mrb[0].mxu0
    %v1941 = vadd.f32 %v1748, %v1940
    %1942 = vdwg.mxu0
    %1943 = vmatprep.subr.bf16.mxu0 %v1366
    %1944 = vmatpush1.bf16.msra.mxu0 %v1365
    %1945 = vmatprep.subr.bf16.mxu0 %v1370
    %1946 = vmatpush1.bf16.msra.mxu0 %v1369
    %1947 = vmatprep.subr.bf16.mxu0 %v1374
    %1948 = vmatpush1.bf16.msra.mxu0 %v1373
    %1949 = vmatprep.subr.bf16.mxu0 %v1378
    %1950 = vmatpush1.bf16.msra.mxu0 %v1377
    %1951 = vmatprep.subr.bf16.mxu0 %v1382
    %1952 = vmatpush1.bf16.msra.mxu0 %v1381
    %1953 = vmatprep.subr.bf16.mxu0 %v1386
    %1954 = vmatpush1.bf16.msra.mxu0 %v1385
    %1955 = vmatprep.subr.bf16.mxu0 %v1390
    %1956 = vmatpush1.bf16.msra.mxu0 %v1389
    %1957 = vmatprep.subr.bf16.mxu0 %v1394
    %1958 = vmatpush1.bf16.msra.mxu0 %v1393
    %1959 = vmatprep.subr.bf16.mxu0 0
    %1960 = vmatpush1.bf16.msra.mxu0 0
    %1961 = vmatprep.subr.bf16.mxu0 0
    %1962 = vmatpush1.bf16.msra.mxu0 0
    %1963 = vmatprep.subr.bf16.mxu0 0
    %1964 = vmatpush1.bf16.msra.mxu0 0
    %1965 = vmatprep.subr.bf16.mxu0 0
    %1966 = vmatpush1.bf16.msra.mxu0 0
    %1967 = vmatprep.subr.bf16.mxu0 0
    %1968 = vmatpush1.bf16.msra.mxu0 0
    %1969 = vmatprep.subr.bf16.mxu0 0
    %1970 = vmatpush1.bf16.msra.mxu0 0
    %1971 = vmatprep.subr.bf16.mxu0 0
    %1972 = vmatpush1.bf16.msra.mxu0 0
    %1973 = vmatprep.subr.bf16.mxu0 0
    %1974 = vmatpush1.bf16.msra.mxu0 0
    %1975 = vmatprep.mubr.bf16.mxu0 0
    %1976 = vmatmul.mubr.bf16.gmra.mrb[0].mxu0 %v601
    %v1977 = vpop.f32.mrb[0].mxu0
    %v1978 = vadd.f32 %v1785, %v1977
    %v1979 = vpop.f32.mrb[0].mxu0
    %v1980 = vadd.f32 %v1787, %v1979
    %v1981 = vpop.f32.mrb[0].mxu0
    %v1982 = vadd.f32 %v1789, %v1981
    %v1983 = vpop.f32.mrb[0].mxu0
    %v1984 = vadd.f32 %v1791, %v1983
    %1985 = vmatprep.mubr.bf16.mxu0 0
    %1986 = vmatmul.mubr.bf16.gmra.mrb[0].mxu0 %v606
    %v1987 = vpop.f32.mrb[0].mxu0
    %v1988 = vadd.f32 %v1795, %v1987
    %v1989 = vpop.f32.mrb[0].mxu0
    %v1990 = vadd.f32 %v1797, %v1989
    %v1991 = vpop.f32.mrb[0].mxu0
    %v1992 = vadd.f32 %v1799, %v1991
    %v1993 = vpop.f32.mrb[0].mxu0
    %v1994 = vadd.f32 %v1801, %v1993
    %1995 = vmatprep.mubr.bf16.mxu0 0
    %1996 = vmatmul.mubr.bf16.gmra.mrb[0].mxu0 %v611
    %v1997 = vpop.f32.mrb[0].mxu0
    %v1998 = vadd.f32 %v1805, %v1997
    %v1999 = vpop.f32.mrb[0].mxu0
    %v2000 = vadd.f32 %v1807, %v1999
    %v2001 = vpop.f32.mrb[0].mxu0
    %v2002 = vadd.f32 %v1809, %v2001
    %v2003 = vpop.f32.mrb[0].mxu0
    %v2004 = vadd.f32 %v1811, %v2003
    %2005 = vmatprep.mubr.bf16.mxu0 0
    %2006 = vmatmul.mubr.bf16.gmra.mrb[0].mxu0 %v616
    %v2007 = vpop.f32.mrb[0].mxu0
    %v2008 = vadd.f32 %v1815, %v2007
    %v2009 = vpop.f32.mrb[0].mxu0
    %v2010 = vadd.f32 %v1817, %v2009
    %v2011 = vpop.f32.mrb[0].mxu0
    %v2012 = vadd.f32 %v1819, %v2011
    %v2013 = vpop.f32.mrb[0].mxu0
    %v2014 = vadd.f32 %v1821, %v2013
    %2015 = vmatprep.mubr.bf16.mxu0 0
    %2016 = vmatmul.mubr.bf16.gmra.mrb[0].mxu0 %v621
    %v2017 = vpop.f32.mrb[0].mxu0
    %v2018 = vadd.f32 %v1825, %v2017
    %v2019 = vpop.f32.mrb[0].mxu0
    %v2020 = vadd.f32 %v1827, %v2019
    %v2021 = vpop.f32.mrb[0].mxu0
    %v2022 = vadd.f32 %v1829, %v2021
    %v2023 = vpop.f32.mrb[0].mxu0
    %v2024 = vadd.f32 %v1831, %v2023
    %2025 = vmatprep.mubr.bf16.mxu0 0
    %2026 = vmatmul.mubr.bf16.gmra.mrb[0].mxu0 %v626
    %v2027 = vpop.f32.mrb[0].mxu0
    %v2028 = vadd.f32 %v1835, %v2027
    %v2029 = vpop.f32.mrb[0].mxu0
    %v2030 = vadd.f32 %v1837, %v2029
    %v2031 = vpop.f32.mrb[0].mxu0
    %v2032 = vadd.f32 %v1839, %v2031
    %v2033 = vpop.f32.mrb[0].mxu0
    %v2034 = vadd.f32 %v1841, %v2033
    %2035 = vmatprep.mubr.bf16.mxu0 0
    %2036 = vmatmul.mubr.bf16.gmra.mrb[0].mxu0 %v631
    %v2037 = vpop.f32.mrb[0].mxu0
    %v2038 = vadd.f32 %v1845, %v2037
    %v2039 = vpop.f32.mrb[0].mxu0
    %v2040 = vadd.f32 %v1847, %v2039
    %v2041 = vpop.f32.mrb[0].mxu0
    %v2042 = vadd.f32 %v1849, %v2041
    %v2043 = vpop.f32.mrb[0].mxu0
    %v2044 = vadd.f32 %v1851, %v2043
    %2045 = vmatprep.mubr.bf16.mxu0 0
    %2046 = vmatmul.mubr.bf16.gmra.mrb[0].mxu0 %v636
    %v2047 = vpop.f32.mrb[0].mxu0
    %v2048 = vadd.f32 %v1855, %v2047
    %v2049 = vpop.f32.mrb[0].mxu0
    %v2050 = vadd.f32 %v1857, %v2049
    %v2051 = vpop.f32.mrb[0].mxu0
    %v2052 = vadd.f32 %v1859, %v2051
    %v2053 = vpop.f32.mrb[0].mxu0
    %v2054 = vadd.f32 %v1861, %v2053
    %2055 = vmatprep.mubr.bf16.mxu0 0
    %2056 = vmatmul.mubr.bf16.gmra.mrb[0].mxu0 %v641
    %v2057 = vpop.f32.mrb[0].mxu0
    %v2058 = vadd.f32 %v1865, %v2057
    %v2059 = vpop.f32.mrb[0].mxu0
    %v2060 = vadd.f32 %v1867, %v2059
    %v2061 = vpop.f32.mrb[0].mxu0
    %v2062 = vadd.f32 %v1869, %v2061
    %v2063 = vpop.f32.mrb[0].mxu0
    %v2064 = vadd.f32 %v1871, %v2063
    %2065 = vmatprep.mubr.bf16.mxu0 0
    %2066 = vmatmul.mubr.bf16.gmra.mrb[0].mxu0 %v646
    %v2067 = vpop.f32.mrb[0].mxu0
    %v2068 = vadd.f32 %v1875, %v2067
    %v2069 = vpop.f32.mrb[0].mxu0
    %v2070 = vadd.f32 %v1877, %v2069
    %v2071 = vpop.f32.mrb[0].mxu0
    %v2072 = vadd.f32 %v1879, %v2071
    %v2073 = vpop.f32.mrb[0].mxu0
    %v2074 = vadd.f32 %v1881, %v2073
    %2075 = vmatprep.mubr.bf16.mxu0 0
    %2076 = vmatmul.mubr.bf16.gmra.mrb[0].mxu0 %v651
    %v2077 = vpop.f32.mrb[0].mxu0
    %v2078 = vadd.f32 %v1885, %v2077
    %v2079 = vpop.f32.mrb[0].mxu0
    %v2080 = vadd.f32 %v1887, %v2079
    %v2081 = vpop.f32.mrb[0].mxu0
    %v2082 = vadd.f32 %v1889, %v2081
    %v2083 = vpop.f32.mrb[0].mxu0
    %v2084 = vadd.f32 %v1891, %v2083
    %2085 = vmatprep.mubr.bf16.mxu0 0
    %2086 = vmatmul.mubr.bf16.gmra.mrb[0].mxu0 %v656
    %v2087 = vpop.f32.mrb[0].mxu0
    %v2088 = vadd.f32 %v1895, %v2087
    %v2089 = vpop.f32.mrb[0].mxu0
    %v2090 = vadd.f32 %v1897, %v2089
    %v2091 = vpop.f32.mrb[0].mxu0
    %v2092 = vadd.f32 %v1899, %v2091
    %v2093 = vpop.f32.mrb[0].mxu0
    %v2094 = vadd.f32 %v1901, %v2093
    %2095 = vmatprep.mubr.bf16.mxu0 0
    %2096 = vmatmul.mubr.bf16.gmra.mrb[0].mxu0 %v661
    %v2097 = vpop.f32.mrb[0].mxu0
    %v2098 = vadd.f32 %v1905, %v2097
    %v2099 = vpop.f32.mrb[0].mxu0
    %v2100 = vadd.f32 %v1907, %v2099
    %v2101 = vpop.f32.mrb[0].mxu0
    %v2102 = vadd.f32 %v1909, %v2101
    %v2103 = vpop.f32.mrb[0].mxu0
    %v2104 = vadd.f32 %v1911, %v2103
    %2105 = vmatprep.mubr.bf16.mxu0 0
    %2106 = vmatmul.mubr.bf16.gmra.mrb[0].mxu0 %v666
    %v2107 = vpop.f32.mrb[0].mxu0
    %v2108 = vadd.f32 %v1915, %v2107
    %v2109 = vpop.f32.mrb[0].mxu0
    %v2110 = vadd.f32 %v1917, %v2109
    %v2111 = vpop.f32.mrb[0].mxu0
    %v2112 = vadd.f32 %v1919, %v2111
    %v2113 = vpop.f32.mrb[0].mxu0
    %v2114 = vadd.f32 %v1921, %v2113
    %2115 = vmatprep.mubr.bf16.mxu0 0
    %2116 = vmatmul.mubr.bf16.gmra.mrb[0].mxu0 %v671
    %v2117 = vpop.f32.mrb[0].mxu0
    %v2118 = vadd.f32 %v1925, %v2117
    %v2119 = vpop.f32.mrb[0].mxu0
    %v2120 = vadd.f32 %v1927, %v2119
    %v2121 = vpop.f32.mrb[0].mxu0
    %v2122 = vadd.f32 %v1929, %v2121
    %v2123 = vpop.f32.mrb[0].mxu0
    %v2124 = vadd.f32 %v1931, %v2123
    %2125 = vmatprep.mubr.bf16.mxu0 0
    %2126 = vmatmul.mubr.bf16.gmra.mrb[0].mxu0 %v676
    %v2127 = vpop.f32.mrb[0].mxu0
    %v2128 = vadd.f32 %v1935, %v2127
    %v2129 = vpop.f32.mrb[0].mxu0
    %v2130 = vadd.f32 %v1937, %v2129
    %v2131 = vpop.f32.mrb[0].mxu0
    %v2132 = vadd.f32 %v1939, %v2131
    %v2133 = vpop.f32.mrb[0].mxu0
    %v2134 = vadd.f32 %v1941, %v2133
    %2135 = vdwg.mxu0
    %2136 = vmatprep.subr.bf16.mxu0 %v1240
    %2137 = vmatpush1.bf16.msra.mxu0 %v1239
    %2138 = vmatprep.subr.bf16.mxu0 %v1244
    %2139 = vmatpush1.bf16.msra.mxu0 %v1243
    %2140 = vmatprep.subr.bf16.mxu0 %v1248
    %2141 = vmatpush1.bf16.msra.mxu0 %v1247
    %2142 = vmatprep.subr.bf16.mxu0 %v1252
    %2143 = vmatpush1.bf16.msra.mxu0 %v1251
    %2144 = vmatprep.subr.bf16.mxu0 %v1256
    %2145 = vmatpush1.bf16.msra.mxu0 %v1255
    %2146 = vmatprep.subr.bf16.mxu0 %v1260
    %2147 = vmatpush1.bf16.msra.mxu0 %v1259
    %2148 = vmatprep.subr.bf16.mxu0 %v1264
    %2149 = vmatpush1.bf16.msra.mxu0 %v1263
    %2150 = vmatprep.subr.bf16.mxu0 %v1268
    %2151 = vmatpush1.bf16.msra.mxu0 %v1267
    %2152 = vmatprep.subr.bf16.mxu0 %v1272
    %2153 = vmatpush1.bf16.msra.mxu0 %v1271
    %2154 = vmatprep.subr.bf16.mxu0 %v1276
    %2155 = vmatpush1.bf16.msra.mxu0 %v1275
    %2156 = vmatprep.subr.bf16.mxu0 %v1280
    %2157 = vmatpush1.bf16.msra.mxu0 %v1279
    %2158 = vmatprep.subr.bf16.mxu0 %v1284
    %2159 = vmatpush1.bf16.msra.mxu0 %v1283
    %2160 = vmatprep.subr.bf16.mxu0 %v1288
    %2161 = vmatpush1.bf16.msra.mxu0 %v1287
    %2162 = vmatprep.subr.bf16.mxu0 %v1292
    %2163 = vmatpush1.bf16.msra.mxu0 %v1291
    %2164 = vmatprep.subr.bf16.mxu0 %v1296
    %2165 = vmatpush1.bf16.msra.mxu0 %v1295
    %2166 = vmatprep.subr.bf16.mxu0 %v1300
    %2167 = vmatpush1.bf16.msra.mxu0 %v1299
    %2168 = vmatprep.mubr.bf16.mxu0 %v598
    %2169 = vmatmul.mubr.bf16.gmra.mrb[0].mxu0 %v597
    %v2170 = vpop.f32.mrb[0].mxu0
    %v2171 = vadd.f32 %v332, %v2170
    %v2172 = vpop.f32.mrb[0].mxu0
    %v2173 = vadd.f32 %v336, %v2172
    %v2174 = vpop.f32.mrb[0].mxu0
    %v2175 = vadd.f32 %v332, %v2174
    %v2176 = vpop.f32.mrb[0].mxu0
    %v2177 = vadd.f32 %v336, %v2176
    %2178 = vmatprep.mubr.bf16.mxu0 %v603
    %2179 = vmatmul.mubr.bf16.gmra.mrb[0].mxu0 %v602
    %v2180 = vpop.f32.mrb[0].mxu0
    %v2181 = vadd.f32 %v332, %v2180
    %v2182 = vpop.f32.mrb[0].mxu0
    %v2183 = vadd.f32 %v336, %v2182
    %v2184 = vpop.f32.mrb[0].mxu0
    %v2185 = vadd.f32 %v332, %v2184
    %v2186 = vpop.f32.mrb[0].mxu0
    %v2187 = vadd.f32 %v336, %v2186
    %2188 = vmatprep.mubr.bf16.mxu0 %v608
    %2189 = vmatmul.mubr.bf16.gmra.mrb[0].mxu0 %v607
    %v2190 = vpop.f32.mrb[0].mxu0
    %v2191 = vadd.f32 %v332, %v2190
    %v2192 = vpop.f32.mrb[0].mxu0
    %v2193 = vadd.f32 %v336, %v2192
    %v2194 = vpop.f32.mrb[0].mxu0
    %v2195 = vadd.f32 %v332, %v2194
    %v2196 = vpop.f32.mrb[0].mxu0
    %v2197 = vadd.f32 %v336, %v2196
    %2198 = vmatprep.mubr.bf16.mxu0 %v613
    %2199 = vmatmul.mubr.bf16.gmra.mrb[0].mxu0 %v612
    %v2200 = vpop.f32.mrb[0].mxu0
    %v2201 = vadd.f32 %v332, %v2200
    %v2202 = vpop.f32.mrb[0].mxu0
    %v2203 = vadd.f32 %v336, %v2202
    %v2204 = vpop.f32.mrb[0].mxu0
    %v2205 = vadd.f32 %v332, %v2204
    %v2206 = vpop.f32.mrb[0].mxu0
    %v2207 = vadd.f32 %v336, %v2206
    %2208 = vmatprep.mubr.bf16.mxu0 %v618
    %2209 = vmatmul.mubr.bf16.gmra.mrb[0].mxu0 %v617
    %v2210 = vpop.f32.mrb[0].mxu0
    %v2211 = vadd.f32 %v332, %v2210
    %v2212 = vpop.f32.mrb[0].mxu0
    %v2213 = vadd.f32 %v336, %v2212
    %v2214 = vpop.f32.mrb[0].mxu0
    %v2215 = vadd.f32 %v332, %v2214
    %v2216 = vpop.f32.mrb[0].mxu0
    %v2217 = vadd.f32 %v336, %v2216
    %2218 = vmatprep.mubr.bf16.mxu0 %v623
    %2219 = vmatmul.mubr.bf16.gmra.mrb[0].mxu0 %v622
    %v2220 = vpop.f32.mrb[0].mxu0
    %v2221 = vadd.f32 %v332, %v2220
    %v2222 = vpop.f32.mrb[0].mxu0
    %v2223 = vadd.f32 %v336, %v2222
    %v2224 = vpop.f32.mrb[0].mxu0
    %v2225 = vadd.f32 %v332, %v2224
    %v2226 = vpop.f32.mrb[0].mxu0
    %v2227 = vadd.f32 %v336, %v2226
    %2228 = vmatprep.mubr.bf16.mxu0 %v628
    %2229 = vmatmul.mubr.bf16.gmra.mrb[0].mxu0 %v627
    %v2230 = vpop.f32.mrb[0].mxu0
    %v2231 = vadd.f32 %v332, %v2230
    %v2232 = vpop.f32.mrb[0].mxu0
    %v2233 = vadd.f32 %v336, %v2232
    %v2234 = vpop.f32.mrb[0].mxu0
    %v2235 = vadd.f32 %v332, %v2234
    %v2236 = vpop.f32.mrb[0].mxu0
    %v2237 = vadd.f32 %v336, %v2236
    %2238 = vmatprep.mubr.bf16.mxu0 %v633
    %2239 = vmatmul.mubr.bf16.gmra.mrb[0].mxu0 %v632
    %v2240 = vpop.f32.mrb[0].mxu0
    %v2241 = vadd.f32 %v332, %v2240
    %v2242 = vpop.f32.mrb[0].mxu0
    %v2243 = vadd.f32 %v336, %v2242
    %v2244 = vpop.f32.mrb[0].mxu0
    %v2245 = vadd.f32 %v332, %v2244
    %v2246 = vpop.f32.mrb[0].mxu0
    %v2247 = vadd.f32 %v336, %v2246
    %2248 = vmatprep.mubr.bf16.mxu0 %v638
    %2249 = vmatmul.mubr.bf16.gmra.mrb[0].mxu0 %v637
    %v2250 = vpop.f32.mrb[0].mxu0
    %v2251 = vadd.f32 %v332, %v2250
    %v2252 = vpop.f32.mrb[0].mxu0
    %v2253 = vadd.f32 %v336, %v2252
    %v2254 = vpop.f32.mrb[0].mxu0
    %v2255 = vadd.f32 %v332, %v2254
    %v2256 = vpop.f32.mrb[0].mxu0
    %v2257 = vadd.f32 %v336, %v2256
    %2258 = vmatprep.mubr.bf16.mxu0 %v643
    %2259 = vmatmul.mubr.bf16.gmra.mrb[0].mxu0 %v642
    %v2260 = vpop.f32.mrb[0].mxu0
    %v2261 = vadd.f32 %v332, %v2260
    %v2262 = vpop.f32.mrb[0].mxu0
    %v2263 = vadd.f32 %v336, %v2262
    %v2264 = vpop.f32.mrb[0].mxu0
    %v2265 = vadd.f32 %v332, %v2264
    %v2266 = vpop.f32.mrb[0].mxu0
    %v2267 = vadd.f32 %v336, %v2266
    %2268 = vmatprep.mubr.bf16.mxu0 %v648
    %2269 = vmatmul.mubr.bf16.gmra.mrb[0].mxu0 %v647
    %v2270 = vpop.f32.mrb[0].mxu0
    %v2271 = vadd.f32 %v332, %v2270
    %v2272 = vpop.f32.mrb[0].mxu0
    %v2273 = vadd.f32 %v336, %v2272
    %v2274 = vpop.f32.mrb[0].mxu0
    %v2275 = vadd.f32 %v332, %v2274
    %v2276 = vpop.f32.mrb[0].mxu0
    %v2277 = vadd.f32 %v336, %v2276
    %2278 = vmatprep.mubr.bf16.mxu0 %v653
    %2279 = vmatmul.mubr.bf16.gmra.mrb[0].mxu0 %v652
    %v2280 = vpop.f32.mrb[0].mxu0
    %v2281 = vadd.f32 %v332, %v2280
    %v2282 = vpop.f32.mrb[0].mxu0
    %v2283 = vadd.f32 %v336, %v2282
    %v2284 = vpop.f32.mrb[0].mxu0
    %v2285 = vadd.f32 %v332, %v2284
    %v2286 = vpop.f32.mrb[0].mxu0
    %v2287 = vadd.f32 %v336, %v2286
    %2288 = vmatprep.mubr.bf16.mxu0 %v658
    %2289 = vmatmul.mubr.bf16.gmra.mrb[0].mxu0 %v657
    %v2290 = vpop.f32.mrb[0].mxu0
    %v2291 = vadd.f32 %v332, %v2290
    %v2292 = vpop.f32.mrb[0].mxu0
    %v2293 = vadd.f32 %v336, %v2292
    %v2294 = vpop.f32.mrb[0].mxu0
    %v2295 = vadd.f32 %v332, %v2294
    %v2296 = vpop.f32.mrb[0].mxu0
    %v2297 = vadd.f32 %v336, %v2296
    %2298 = vmatprep.mubr.bf16.mxu0 %v663
    %2299 = vmatmul.mubr.bf16.gmra.mrb[0].mxu0 %v662
    %v2300 = vpop.f32.mrb[0].mxu0
    %v2301 = vadd.f32 %v332, %v2300
    %v2302 = vpop.f32.mrb[0].mxu0
    %v2303 = vadd.f32 %v336, %v2302
    %v2304 = vpop.f32.mrb[0].mxu0
    %v2305 = vadd.f32 %v332, %v2304
    %v2306 = vpop.f32.mrb[0].mxu0
    %v2307 = vadd.f32 %v336, %v2306
    %2308 = vmatprep.mubr.bf16.mxu0 %v668
    %2309 = vmatmul.mubr.bf16.gmra.mrb[0].mxu0 %v667
    %v2310 = vpop.f32.mrb[0].mxu0
    %v2311 = vadd.f32 %v332, %v2310
    %v2312 = vpop.f32.mrb[0].mxu0
    %v2313 = vadd.f32 %v336, %v2312
    %v2314 = vpop.f32.mrb[0].mxu0
    %v2315 = vadd.f32 %v332, %v2314
    %v2316 = vpop.f32.mrb[0].mxu0
    %v2317 = vadd.f32 %v336, %v2316
    %2318 = vmatprep.mubr.bf16.mxu0 %v673
    %2319 = vmatmul.mubr.bf16.gmra.mrb[0].mxu0 %v672
    %v2320 = vpop.f32.mrb[0].mxu0
    %v2321 = vadd.f32 %v332, %v2320
    %v2322 = vpop.f32.mrb[0].mxu0
    %v2323 = vadd.f32 %v336, %v2322
    %v2324 = vpop.f32.mrb[0].mxu0
    %v2325 = vadd.f32 %v332, %v2324
    %v2326 = vpop.f32.mrb[0].mxu0
    %v2327 = vadd.f32 %v336, %v2326
    %2328 = vdwg.mxu0
    %2329 = vmatprep.subr.bf16.mxu0 %v1304
    %2330 = vmatpush1.bf16.msra.mxu0 %v1303
    %2331 = vmatprep.subr.bf16.mxu0 %v1308
    %2332 = vmatpush1.bf16.msra.mxu0 %v1307
    %2333 = vmatprep.subr.bf16.mxu0 %v1312
    %2334 = vmatpush1.bf16.msra.mxu0 %v1311
    %2335 = vmatprep.subr.bf16.mxu0 %v1316
    %2336 = vmatpush1.bf16.msra.mxu0 %v1315
    %2337 = vmatprep.subr.bf16.mxu0 %v1320
    %2338 = vmatpush1.bf16.msra.mxu0 %v1319
    %2339 = vmatprep.subr.bf16.mxu0 %v1324
    %2340 = vmatpush1.bf16.msra.mxu0 %v1323
    %2341 = vmatprep.subr.bf16.mxu0 %v1328
    %2342 = vmatpush1.bf16.msra.mxu0 %v1327
    %2343 = vmatprep.subr.bf16.mxu0 %v1332
    %2344 = vmatpush1.bf16.msra.mxu0 %v1331
    %2345 = vmatprep.subr.bf16.mxu0 %v1336
    %2346 = vmatpush1.bf16.msra.mxu0 %v1335
    %2347 = vmatprep.subr.bf16.mxu0 %v1340
    %2348 = vmatpush1.bf16.msra.mxu0 %v1339
    %2349 = vmatprep.subr.bf16.mxu0 %v1344
    %2350 = vmatpush1.bf16.msra.mxu0 %v1343
    %2351 = vmatprep.subr.bf16.mxu0 %v1348
    %2352 = vmatpush1.bf16.msra.mxu0 %v1347
    %2353 = vmatprep.subr.bf16.mxu0 %v1352
    %2354 = vmatpush1.bf16.msra.mxu0 %v1351
    %2355 = vmatprep.subr.bf16.mxu0 %v1356
    %2356 = vmatpush1.bf16.msra.mxu0 %v1355
    %2357 = vmatprep.subr.bf16.mxu0 %v1360
    %2358 = vmatpush1.bf16.msra.mxu0 %v1359
    %2359 = vmatprep.subr.bf16.mxu0 %v1364
    %2360 = vmatpush1.bf16.msra.mxu0 %v1363
    %2361 = vmatprep.mubr.bf16.mxu0 %v600
    %2362 = vmatmul.mubr.bf16.gmra.mrb[0].mxu0 %v599
    %v2363 = vpop.f32.mrb[0].mxu0
    %v2364 = vadd.f32 %v2171, %v2363
    %v2365 = vpop.f32.mrb[0].mxu0
    %v2366 = vadd.f32 %v2173, %v2365
    %v2367 = vpop.f32.mrb[0].mxu0
    %v2368 = vadd.f32 %v2175, %v2367
    %v2369 = vpop.f32.mrb[0].mxu0
    %v2370 = vadd.f32 %v2177, %v2369
    %2371 = vmatprep.mubr.bf16.mxu0 %v605
    %2372 = vmatmul.mubr.bf16.gmra.mrb[0].mxu0 %v604
    %v2373 = vpop.f32.mrb[0].mxu0
    %v2374 = vadd.f32 %v2181, %v2373
    %v2375 = vpop.f32.mrb[0].mxu0
    %v2376 = vadd.f32 %v2183, %v2375
    %v2377 = vpop.f32.mrb[0].mxu0
    %v2378 = vadd.f32 %v2185, %v2377
    %v2379 = vpop.f32.mrb[0].mxu0
    %v2380 = vadd.f32 %v2187, %v2379
    %2381 = vmatprep.mubr.bf16.mxu0 %v610
    %2382 = vmatmul.mubr.bf16.gmra.mrb[0].mxu0 %v609
    %v2383 = vpop.f32.mrb[0].mxu0
    %v2384 = vadd.f32 %v2191, %v2383
    %v2385 = vpop.f32.mrb[0].mxu0
    %v2386 = vadd.f32 %v2193, %v2385
    %v2387 = vpop.f32.mrb[0].mxu0
    %v2388 = vadd.f32 %v2195, %v2387
    %v2389 = vpop.f32.mrb[0].mxu0
    %v2390 = vadd.f32 %v2197, %v2389
    %2391 = vmatprep.mubr.bf16.mxu0 %v615
    %2392 = vmatmul.mubr.bf16.gmra.mrb[0].mxu0 %v614
    %v2393 = vpop.f32.mrb[0].mxu0
    %v2394 = vadd.f32 %v2201, %v2393
    %v2395 = vpop.f32.mrb[0].mxu0
    %v2396 = vadd.f32 %v2203, %v2395
    %v2397 = vpop.f32.mrb[0].mxu0
    %v2398 = vadd.f32 %v2205, %v2397
    %v2399 = vpop.f32.mrb[0].mxu0
    %v2400 = vadd.f32 %v2207, %v2399
    %2401 = vmatprep.mubr.bf16.mxu0 %v620
    %2402 = vmatmul.mubr.bf16.gmra.mrb[0].mxu0 %v619
    %v2403 = vpop.f32.mrb[0].mxu0
    %v2404 = vadd.f32 %v2211, %v2403
    %v2405 = vpop.f32.mrb[0].mxu0
    %v2406 = vadd.f32 %v2213, %v2405
    %v2407 = vpop.f32.mrb[0].mxu0
    %v2408 = vadd.f32 %v2215, %v2407
    %v2409 = vpop.f32.mrb[0].mxu0
    %v2410 = vadd.f32 %v2217, %v2409
    %2411 = vmatprep.mubr.bf16.mxu0 %v625
    %2412 = vmatmul.mubr.bf16.gmra.mrb[0].mxu0 %v624
    %v2413 = vpop.f32.mrb[0].mxu0
    %v2414 = vadd.f32 %v2221, %v2413
    %v2415 = vpop.f32.mrb[0].mxu0
    %v2416 = vadd.f32 %v2223, %v2415
    %v2417 = vpop.f32.mrb[0].mxu0
    %v2418 = vadd.f32 %v2225, %v2417
    %v2419 = vpop.f32.mrb[0].mxu0
    %v2420 = vadd.f32 %v2227, %v2419
    %2421 = vmatprep.mubr.bf16.mxu0 %v630
    %2422 = vmatmul.mubr.bf16.gmra.mrb[0].mxu0 %v629
    %v2423 = vpop.f32.mrb[0].mxu0
    %v2424 = vadd.f32 %v2231, %v2423
    %v2425 = vpop.f32.mrb[0].mxu0
    %v2426 = vadd.f32 %v2233, %v2425
    %v2427 = vpop.f32.mrb[0].mxu0
    %v2428 = vadd.f32 %v2235, %v2427
    %v2429 = vpop.f32.mrb[0].mxu0
    %v2430 = vadd.f32 %v2237, %v2429
    %2431 = vmatprep.mubr.bf16.mxu0 %v635
    %2432 = vmatmul.mubr.bf16.gmra.mrb[0].mxu0 %v634
    %v2433 = vpop.f32.mrb[0].mxu0
    %v2434 = vadd.f32 %v2241, %v2433
    %v2435 = vpop.f32.mrb[0].mxu0
    %v2436 = vadd.f32 %v2243, %v2435
    %v2437 = vpop.f32.mrb[0].mxu0
    %v2438 = vadd.f32 %v2245, %v2437
    %v2439 = vpop.f32.mrb[0].mxu0
    %v2440 = vadd.f32 %v2247, %v2439
    %2441 = vmatprep.mubr.bf16.mxu0 %v640
    %2442 = vmatmul.mubr.bf16.gmra.mrb[0].mxu0 %v639
    %v2443 = vpop.f32.mrb[0].mxu0
    %v2444 = vadd.f32 %v2251, %v2443
    %v2445 = vpop.f32.mrb[0].mxu0
    %v2446 = vadd.f32 %v2253, %v2445
    %v2447 = vpop.f32.mrb[0].mxu0
    %v2448 = vadd.f32 %v2255, %v2447
    %v2449 = vpop.f32.mrb[0].mxu0
    %v2450 = vadd.f32 %v2257, %v2449
    %2451 = vmatprep.mubr.bf16.mxu0 %v645
    %2452 = vmatmul.mubr.bf16.gmra.mrb[0].mxu0 %v644
    %v2453 = vpop.f32.mrb[0].mxu0
    %v2454 = vadd.f32 %v2261, %v2453
    %v2455 = vpop.f32.mrb[0].mxu0
    %v2456 = vadd.f32 %v2263, %v2455
    %v2457 = vpop.f32.mrb[0].mxu0
    %v2458 = vadd.f32 %v2265, %v2457
    %v2459 = vpop.f32.mrb[0].mxu0
    %v2460 = vadd.f32 %v2267, %v2459
    %2461 = vmatprep.mubr.bf16.mxu0 %v650
    %2462 = vmatmul.mubr.bf16.gmra.mrb[0].mxu0 %v649
    %v2463 = vpop.f32.mrb[0].mxu0
    %v2464 = vadd.f32 %v2271, %v2463
    %v2465 = vpop.f32.mrb[0].mxu0
    %v2466 = vadd.f32 %v2273, %v2465
    %v2467 = vpop.f32.mrb[0].mxu0
    %v2468 = vadd.f32 %v2275, %v2467
    %v2469 = vpop.f32.mrb[0].mxu0
    %v2470 = vadd.f32 %v2277, %v2469
    %2471 = vmatprep.mubr.bf16.mxu0 %v655
    %2472 = vmatmul.mubr.bf16.gmra.mrb[0].mxu0 %v654
    %v2473 = vpop.f32.mrb[0].mxu0
    %v2474 = vadd.f32 %v2281, %v2473
    %v2475 = vpop.f32.mrb[0].mxu0
    %v2476 = vadd.f32 %v2283, %v2475
    %v2477 = vpop.f32.mrb[0].mxu0
    %v2478 = vadd.f32 %v2285, %v2477
    %v2479 = vpop.f32.mrb[0].mxu0
    %v2480 = vadd.f32 %v2287, %v2479
    %2481 = vmatprep.mubr.bf16.mxu0 %v660
    %2482 = vmatmul.mubr.bf16.gmra.mrb[0].mxu0 %v659
    %v2483 = vpop.f32.mrb[0].mxu0
    %v2484 = vadd.f32 %v2291, %v2483
    %v2485 = vpop.f32.mrb[0].mxu0
    %v2486 = vadd.f32 %v2293, %v2485
    %v2487 = vpop.f32.mrb[0].mxu0
    %v2488 = vadd.f32 %v2295, %v2487
    %v2489 = vpop.f32.mrb[0].mxu0
    %v2490 = vadd.f32 %v2297, %v2489
    %2491 = vmatprep.mubr.bf16.mxu0 %v665
    %2492 = vmatmul.mubr.bf16.gmra.mrb[0].mxu0 %v664
    %v2493 = vpop.f32.mrb[0].mxu0
    %v2494 = vadd.f32 %v2301, %v2493
    %v2495 = vpop.f32.mrb[0].mxu0
    %v2496 = vadd.f32 %v2303, %v2495
    %v2497 = vpop.f32.mrb[0].mxu0
    %v2498 = vadd.f32 %v2305, %v2497
    %v2499 = vpop.f32.mrb[0].mxu0
    %v2500 = vadd.f32 %v2307, %v2499
    %2501 = vmatprep.mubr.bf16.mxu0 %v670
    %2502 = vmatmul.mubr.bf16.gmra.mrb[0].mxu0 %v669
    %v2503 = vpop.f32.mrb[0].mxu0
    %v2504 = vadd.f32 %v2311, %v2503
    %v2505 = vpop.f32.mrb[0].mxu0
    %v2506 = vadd.f32 %v2313, %v2505
    %v2507 = vpop.f32.mrb[0].mxu0
    %v2508 = vadd.f32 %v2315, %v2507
    %v2509 = vpop.f32.mrb[0].mxu0
    %v2510 = vadd.f32 %v2317, %v2509
    %2511 = vmatprep.mubr.bf16.mxu0 %v675
    %2512 = vmatmul.mubr.bf16.gmra.mrb[0].mxu0 %v674
    %v2513 = vpop.f32.mrb[0].mxu0
    %v2514 = vadd.f32 %v2321, %v2513
    %v2515 = vpop.f32.mrb[0].mxu0
    %v2516 = vadd.f32 %v2323, %v2515
    %v2517 = vpop.f32.mrb[0].mxu0
    %v2518 = vadd.f32 %v2325, %v2517
    %v2519 = vpop.f32.mrb[0].mxu0
    %v2520 = vadd.f32 %v2327, %v2519
    %2521 = vdwg.mxu0
    %2522 = vmatprep.subr.bf16.mxu0 %v1368
    %2523 = vmatpush1.bf16.msra.mxu0 %v1367
    %2524 = vmatprep.subr.bf16.mxu0 %v1372
    %2525 = vmatpush1.bf16.msra.mxu0 %v1371
    %2526 = vmatprep.subr.bf16.mxu0 %v1376
    %2527 = vmatpush1.bf16.msra.mxu0 %v1375
    %2528 = vmatprep.subr.bf16.mxu0 %v1380
    %2529 = vmatpush1.bf16.msra.mxu0 %v1379
    %2530 = vmatprep.subr.bf16.mxu0 %v1384
    %2531 = vmatpush1.bf16.msra.mxu0 %v1383
    %2532 = vmatprep.subr.bf16.mxu0 %v1388
    %2533 = vmatpush1.bf16.msra.mxu0 %v1387
    %2534 = vmatprep.subr.bf16.mxu0 %v1392
    %2535 = vmatpush1.bf16.msra.mxu0 %v1391
    %2536 = vmatprep.subr.bf16.mxu0 %v1396
    %2537 = vmatpush1.bf16.msra.mxu0 %v1395
    %2538 = vmatprep.subr.bf16.mxu0 0
    %2539 = vmatpush1.bf16.msra.mxu0 0
    %2540 = vmatprep.subr.bf16.mxu0 0
    %2541 = vmatpush1.bf16.msra.mxu0 0
    %2542 = vmatprep.subr.bf16.mxu0 0
    %2543 = vmatpush1.bf16.msra.mxu0 0
    %2544 = vmatprep.subr.bf16.mxu0 0
    %2545 = vmatpush1.bf16.msra.mxu0 0
    %2546 = vmatprep.subr.bf16.mxu0 0
    %2547 = vmatpush1.bf16.msra.mxu0 0
    %2548 = vmatprep.subr.bf16.mxu0 0
    %2549 = vmatpush1.bf16.msra.mxu0 0
    %2550 = vmatprep.subr.bf16.mxu0 0
    %2551 = vmatpush1.bf16.msra.mxu0 0
    %2552 = vmatprep.subr.bf16.mxu0 0
    %2553 = vmatpush1.bf16.msra.mxu0 0
    %2554 = vmatprep.mubr.bf16.mxu0 0
    %2555 = vmatmul.mubr.bf16.gmra.mrb[0].mxu0 %v601
    %v2556 = vpop.f32.mrb[0].mxu0
    %v2557 = vadd.f32 %v2364, %v2556
    %v2558 = vpop.f32.mrb[0].mxu0
    %v2559 = vadd.f32 %v2366, %v2558
    %v2560 = vpop.f32.mrb[0].mxu0
    %v2561 = vadd.f32 %v2368, %v2560
    %v2562 = vpop.f32.mrb[0].mxu0
    %v2563 = vadd.f32 %v2370, %v2562
    %2564 = vmatprep.mubr.bf16.mxu0 0
    %2565 = vmatmul.mubr.bf16.gmra.mrb[0].mxu0 %v606
    %v2566 = vpop.f32.mrb[0].mxu0
    %v2567 = vadd.f32 %v2374, %v2566
    %v2568 = vpop.f32.mrb[0].mxu0
    %v2569 = vadd.f32 %v2376, %v2568
    %v2570 = vpop.f32.mrb[0].mxu0
    %v2571 = vadd.f32 %v2378, %v2570
    %v2572 = vpop.f32.mrb[0].mxu0
    %v2573 = vadd.f32 %v2380, %v2572
    %2574 = vmatprep.mubr.bf16.mxu0 0
    %2575 = vmatmul.mubr.bf16.gmra.mrb[0].mxu0 %v611
    %v2576 = vpop.f32.mrb[0].mxu0
    %v2577 = vadd.f32 %v2384, %v2576
    %v2578 = vpop.f32.mrb[0].mxu0
    %v2579 = vadd.f32 %v2386, %v2578
    %v2580 = vpop.f32.mrb[0].mxu0
    %v2581 = vadd.f32 %v2388, %v2580
    %v2582 = vpop.f32.mrb[0].mxu0
    %v2583 = vadd.f32 %v2390, %v2582
    %2584 = vmatprep.mubr.bf16.mxu0 0
    %2585 = vmatmul.mubr.bf16.gmra.mrb[0].mxu0 %v616
    %v2586 = vpop.f32.mrb[0].mxu0
    %v2587 = vadd.f32 %v2394, %v2586
    %v2588 = vpop.f32.mrb[0].mxu0
    %v2589 = vadd.f32 %v2396, %v2588
    %v2590 = vpop.f32.mrb[0].mxu0
    %v2591 = vadd.f32 %v2398, %v2590
    %v2592 = vpop.f32.mrb[0].mxu0
    %v2593 = vadd.f32 %v2400, %v2592
    %2594 = vmatprep.mubr.bf16.mxu0 0
    %2595 = vmatmul.mubr.bf16.gmra.mrb[0].mxu0 %v621
    %v2596 = vpop.f32.mrb[0].mxu0
    %v2597 = vadd.f32 %v2404, %v2596
    %v2598 = vpop.f32.mrb[0].mxu0
    %v2599 = vadd.f32 %v2406, %v2598
    %v2600 = vpop.f32.mrb[0].mxu0
    %v2601 = vadd.f32 %v2408, %v2600
    %v2602 = vpop.f32.mrb[0].mxu0
    %v2603 = vadd.f32 %v2410, %v2602
    %2604 = vmatprep.mubr.bf16.mxu0 0
    %2605 = vmatmul.mubr.bf16.gmra.mrb[0].mxu0 %v626
    %v2606 = vpop.f32.mrb[0].mxu0
    %v2607 = vadd.f32 %v2414, %v2606
    %v2608 = vpop.f32.mrb[0].mxu0
    %v2609 = vadd.f32 %v2416, %v2608
    %v2610 = vpop.f32.mrb[0].mxu0
    %v2611 = vadd.f32 %v2418, %v2610
    %v2612 = vpop.f32.mrb[0].mxu0
    %v2613 = vadd.f32 %v2420, %v2612
    %2614 = vmatprep.mubr.bf16.mxu0 0
    %2615 = vmatmul.mubr.bf16.gmra.mrb[0].mxu0 %v631
    %v2616 = vpop.f32.mrb[0].mxu0
    %v2617 = vadd.f32 %v2424, %v2616
    %v2618 = vpop.f32.mrb[0].mxu0
    %v2619 = vadd.f32 %v2426, %v2618
    %v2620 = vpop.f32.mrb[0].mxu0
    %v2621 = vadd.f32 %v2428, %v2620
    %v2622 = vpop.f32.mrb[0].mxu0
    %v2623 = vadd.f32 %v2430, %v2622
    %2624 = vmatprep.mubr.bf16.mxu0 0
    %2625 = vmatmul.mubr.bf16.gmra.mrb[0].mxu0 %v636
    %v2626 = vpop.f32.mrb[0].mxu0
    %v2627 = vadd.f32 %v2434, %v2626
    %v2628 = vpop.f32.mrb[0].mxu0
    %v2629 = vadd.f32 %v2436, %v2628
    %v2630 = vpop.f32.mrb[0].mxu0
    %v2631 = vadd.f32 %v2438, %v2630
    %v2632 = vpop.f32.mrb[0].mxu0
    %v2633 = vadd.f32 %v2440, %v2632
    %2634 = vmatprep.mubr.bf16.mxu0 0
    %2635 = vmatmul.mubr.bf16.gmra.mrb[0].mxu0 %v641
    %v2636 = vpop.f32.mrb[0].mxu0
    %v2637 = vadd.f32 %v2444, %v2636
    %v2638 = vpop.f32.mrb[0].mxu0
    %v2639 = vadd.f32 %v2446, %v2638
    %v2640 = vpop.f32.mrb[0].mxu0
    %v2641 = vadd.f32 %v2448, %v2640
    %v2642 = vpop.f32.mrb[0].mxu0
    %v2643 = vadd.f32 %v2450, %v2642
    %2644 = vmatprep.mubr.bf16.mxu0 0
    %2645 = vmatmul.mubr.bf16.gmra.mrb[0].mxu0 %v646
    %v2646 = vpop.f32.mrb[0].mxu0
    %v2647 = vadd.f32 %v2454, %v2646
    %v2648 = vpop.f32.mrb[0].mxu0
    %v2649 = vadd.f32 %v2456, %v2648
    %v2650 = vpop.f32.mrb[0].mxu0
    %v2651 = vadd.f32 %v2458, %v2650
    %v2652 = vpop.f32.mrb[0].mxu0
    %v2653 = vadd.f32 %v2460, %v2652
    %2654 = vmatprep.mubr.bf16.mxu0 0
    %2655 = vmatmul.mubr.bf16.gmra.mrb[0].mxu0 %v651
    %v2656 = vpop.f32.mrb[0].mxu0
    %v2657 = vadd.f32 %v2464, %v2656
    %v2658 = vpop.f32.mrb[0].mxu0
    %v2659 = vadd.f32 %v2466, %v2658
    %v2660 = vpop.f32.mrb[0].mxu0
    %v2661 = vadd.f32 %v2468, %v2660
    %v2662 = vpop.f32.mrb[0].mxu0
    %v2663 = vadd.f32 %v2470, %v2662
    %2664 = vmatprep.mubr.bf16.mxu0 0
    %2665 = vmatmul.mubr.bf16.gmra.mrb[0].mxu0 %v656
    %v2666 = vpop.f32.mrb[0].mxu0
    %v2667 = vadd.f32 %v2474, %v2666
    %v2668 = vpop.f32.mrb[0].mxu0
    %v2669 = vadd.f32 %v2476, %v2668
    %v2670 = vpop.f32.mrb[0].mxu0
    %v2671 = vadd.f32 %v2478, %v2670
    %v2672 = vpop.f32.mrb[0].mxu0
    %v2673 = vadd.f32 %v2480, %v2672
    %2674 = vmatprep.mubr.bf16.mxu0 0
    %2675 = vmatmul.mubr.bf16.gmra.mrb[0].mxu0 %v661
    %v2676 = vpop.f32.mrb[0].mxu0
    %v2677 = vadd.f32 %v2484, %v2676
    %v2678 = vpop.f32.mrb[0].mxu0
    %v2679 = vadd.f32 %v2486, %v2678
    %v2680 = vpop.f32.mrb[0].mxu0
    %v2681 = vadd.f32 %v2488, %v2680
    %v2682 = vpop.f32.mrb[0].mxu0
    %v2683 = vadd.f32 %v2490, %v2682
    %2684 = vmatprep.mubr.bf16.mxu0 0
    %2685 = vmatmul.mubr.bf16.gmra.mrb[0].mxu0 %v666
    %v2686 = vpop.f32.mrb[0].mxu0
    %v2687 = vadd.f32 %v2494, %v2686
    %v2688 = vpop.f32.mrb[0].mxu0
    %v2689 = vadd.f32 %v2496, %v2688
    %v2690 = vpop.f32.mrb[0].mxu0
    %v2691 = vadd.f32 %v2498, %v2690
    %v2692 = vpop.f32.mrb[0].mxu0
    %v2693 = vadd.f32 %v2500, %v2692
    %2694 = vmatprep.mubr.bf16.mxu0 0
    %2695 = vmatmul.mubr.bf16.gmra.mrb[0].mxu0 %v671
    %v2696 = vpop.f32.mrb[0].mxu0
    %v2697 = vadd.f32 %v2504, %v2696
    %v2698 = vpop.f32.mrb[0].mxu0
    %v2699 = vadd.f32 %v2506, %v2698
    %v2700 = vpop.f32.mrb[0].mxu0
    %v2701 = vadd.f32 %v2508, %v2700
    %v2702 = vpop.f32.mrb[0].mxu0
    %v2703 = vadd.f32 %v2510, %v2702
    %2704 = vmatprep.mubr.bf16.mxu0 0
    %2705 = vmatmul.mubr.bf16.gmra.mrb[0].mxu0 %v676
    %v2706 = vpop.f32.mrb[0].mxu0
    %v2707 = vadd.f32 %v2514, %v2706
    %v2708 = vpop.f32.mrb[0].mxu0
    %v2709 = vadd.f32 %v2516, %v2708
    %v2710 = vpop.f32.mrb[0].mxu0
    %v2711 = vadd.f32 %v2518, %v2710
    %v2712 = vpop.f32.mrb[0].mxu0
    %v2713 = vadd.f32 %v2520, %v2712
    %2714 = vdwg.mxu0
    %v2715 = vmax.f32 %v1978, 0.0
    %v2716 = vmax.f32 %v1980, 0.0
    %v2717 = vmax.f32 %v2557, 0.0
    %v2718 = vmax.f32 %v2559, 0.0
    %v2719 = vmax.f32 %v1982, 0.0
    %v2720 = vmax.f32 %v1984, 0.0
    %v2721 = vmax.f32 %v2561, 0.0
    %v2722 = vmax.f32 %v2563, 0.0
    %v2723 = vmax.f32 %v1988, 0.0
    %v2724 = vmax.f32 %v1990, 0.0
    %v2725 = vmax.f32 %v2567, 0.0
    %v2726 = vmax.f32 %v2569, 0.0
    %v2727 = vmax.f32 %v1992, 0.0
    %v2728 = vmax.f32 %v1994, 0.0
    %v2729 = vmax.f32 %v2571, 0.0
    %v2730 = vmax.f32 %v2573, 0.0
    %v2731 = vmax.f32 %v1998, 0.0
    %v2732 = vmax.f32 %v2000, 0.0
    %v2733 = vmax.f32 %v2577, 0.0
    %v2734 = vmax.f32 %v2579, 0.0
    %v2735 = vmax.f32 %v2002, 0.0
    %v2736 = vmax.f32 %v2004, 0.0
    %v2737 = vmax.f32 %v2581, 0.0
    %v2738 = vmax.f32 %v2583, 0.0
    %v2739 = vmax.f32 %v2008, 0.0
    %v2740 = vmax.f32 %v2010, 0.0
    %v2741 = vmax.f32 %v2587, 0.0
    %v2742 = vmax.f32 %v2589, 0.0
    %v2743 = vmax.f32 %v2012, 0.0
    %v2744 = vmax.f32 %v2014, 0.0
    %v2745 = vmax.f32 %v2591, 0.0
    %v2746 = vmax.f32 %v2593, 0.0
    %v2747 = vmax.f32 %v2018, 0.0
    %v2748 = vmax.f32 %v2020, 0.0
    %v2749 = vmax.f32 %v2597, 0.0
    %v2750 = vmax.f32 %v2599, 0.0
    %v2751 = vmax.f32 %v2022, 0.0
    %v2752 = vmax.f32 %v2024, 0.0
    %v2753 = vmax.f32 %v2601, 0.0
    %v2754 = vmax.f32 %v2603, 0.0
    %v2755 = vmax.f32 %v2028, 0.0
    %v2756 = vmax.f32 %v2030, 0.0
    %v2757 = vmax.f32 %v2607, 0.0
    %v2758 = vmax.f32 %v2609, 0.0
    %v2759 = vmax.f32 %v2032, 0.0
    %v2760 = vmax.f32 %v2034, 0.0
    %v2761 = vmax.f32 %v2611, 0.0
    %v2762 = vmax.f32 %v2613, 0.0
    %v2763 = vmax.f32 %v2038, 0.0
    %v2764 = vmax.f32 %v2040, 0.0
    %v2765 = vmax.f32 %v2617, 0.0
    %v2766 = vmax.f32 %v2619, 0.0
    %v2767 = vmax.f32 %v2042, 0.0
    %v2768 = vmax.f32 %v2044, 0.0
    %v2769 = vmax.f32 %v2621, 0.0
    %v2770 = vmax.f32 %v2623, 0.0
    %v2771 = vmax.f32 %v2048, 0.0
    %v2772 = vmax.f32 %v2050, 0.0
    %v2773 = vmax.f32 %v2627, 0.0
    %v2774 = vmax.f32 %v2629, 0.0
    %v2775 = vmax.f32 %v2052, 0.0
    %v2776 = vmax.f32 %v2054, 0.0
    %v2777 = vmax.f32 %v2631, 0.0
    %v2778 = vmax.f32 %v2633, 0.0
    %v2779 = vmax.f32 %v2058, 0.0
    %v2780 = vmax.f32 %v2060, 0.0
    %v2781 = vmax.f32 %v2637, 0.0
    %v2782 = vmax.f32 %v2639, 0.0
    %v2783 = vmax.f32 %v2062, 0.0
    %v2784 = vmax.f32 %v2064, 0.0
    %v2785 = vmax.f32 %v2641, 0.0
    %v2786 = vmax.f32 %v2643, 0.0
    %v2787 = vmax.f32 %v2068, 0.0
    %v2788 = vmax.f32 %v2070, 0.0
    %v2789 = vmax.f32 %v2647, 0.0
    %v2790 = vmax.f32 %v2649, 0.0
    %v2791 = vmax.f32 %v2072, 0.0
    %v2792 = vmax.f32 %v2074, 0.0
    %v2793 = vmax.f32 %v2651, 0.0
    %v2794 = vmax.f32 %v2653, 0.0
    %v2795 = vmax.f32 %v2078, 0.0
    %v2796 = vmax.f32 %v2080, 0.0
    %v2797 = vmax.f32 %v2657, 0.0
    %v2798 = vmax.f32 %v2659, 0.0
    %v2799 = vmax.f32 %v2082, 0.0
    %v2800 = vmax.f32 %v2084, 0.0
    %v2801 = vmax.f32 %v2661, 0.0
    %v2802 = vmax.f32 %v2663, 0.0
    %v2803 = vmax.f32 %v2088, 0.0
    %v2804 = vmax.f32 %v2090, 0.0
    %v2805 = vmax.f32 %v2667, 0.0
    %v2806 = vmax.f32 %v2669, 0.0
    %v2807 = vmax.f32 %v2092, 0.0
    %v2808 = vmax.f32 %v2094, 0.0
    %v2809 = vmax.f32 %v2671, 0.0
    %v2810 = vmax.f32 %v2673, 0.0
    %v2811 = vmax.f32 %v2098, 0.0
    %v2812 = vmax.f32 %v2100, 0.0
    %v2813 = vmax.f32 %v2677, 0.0
    %v2814 = vmax.f32 %v2679, 0.0
    %v2815 = vmax.f32 %v2102, 0.0
    %v2816 = vmax.f32 %v2104, 0.0
    %v2817 = vmax.f32 %v2681, 0.0
    %v2818 = vmax.f32 %v2683, 0.0
    %v2819 = vmax.f32 %v2108, 0.0
    %v2820 = vmax.f32 %v2110, 0.0
    %v2821 = vmax.f32 %v2687, 0.0
    %v2822 = vmax.f32 %v2689, 0.0
    %v2823 = vmax.f32 %v2112, 0.0
    %v2824 = vmax.f32 %v2114, 0.0
    %v2825 = vmax.f32 %v2691, 0.0
    %v2826 = vmax.f32 %v2693, 0.0
    %v2827 = vmax.f32 %v2118, 0.0
    %v2828 = vmax.f32 %v2120, 0.0
    %v2829 = vmax.f32 %v2697, 0.0
    %v2830 = vmax.f32 %v2699, 0.0
    %v2831 = vmax.f32 %v2122, 0.0
    %v2832 = vmax.f32 %v2124, 0.0
    %v2833 = vmax.f32 %v2701, 0.0
    %v2834 = vmax.f32 %v2703, 0.0
    %v2835 = vmax.f32 %v2128, 0.0
    %v2836 = vmax.f32 %v2130, 0.0
    %v2837 = vmax.f32 %v2707, 0.0
    %v2838 = vmax.f32 %v2709, 0.0
    %v2839 = vmax.f32 %v2132, 0.0
    %v2840 = vmax.f32 %v2134, 0.0
    %v2841 = vmax.f32 %v2711, 0.0
    %v2842 = vmax.f32 %v2713, 0.0
    %v2843 = vpack.c.bf16 %v2719, %v2715
    %v2844 = vpack.c.bf16 %v2720, %v2716
    %v2845 = vpack.c.bf16 %v2721, %v2717
    %v2846 = vpack.c.bf16 %v2722, %v2718
    %v2847 = vpack.c.bf16 %v2727, %v2723
    %v2848 = vpack.c.bf16 %v2728, %v2724
    %v2849 = vpack.c.bf16 %v2729, %v2725
    %v2850 = vpack.c.bf16 %v2730, %v2726
    %v2851 = vpack.c.bf16 %v2735, %v2731
    %v2852 = vpack.c.bf16 %v2736, %v2732
    %v2853 = vpack.c.bf16 %v2737, %v2733
    %v2854 = vpack.c.bf16 %v2738, %v2734
    %v2855 = vpack.c.bf16 %v2743, %v2739
    %v2856 = vpack.c.bf16 %v2744, %v2740
    %v2857 = vpack.c.bf16 %v2745, %v2741
    %v2858 = vpack.c.bf16 %v2746, %v2742
    %v2859 = vpack.c.bf16 %v2751, %v2747
    %v2860 = vpack.c.bf16 %v2752, %v2748
    %v2861 = vpack.c.bf16 %v2753, %v2749
    %v2862 = vpack.c.bf16 %v2754, %v2750
    %v2863 = vpack.c.bf16 %v2759, %v2755
    %v2864 = vpack.c.bf16 %v2760, %v2756
    %v2865 = vpack.c.bf16 %v2761, %v2757
    %v2866 = vpack.c.bf16 %v2762, %v2758
    %v2867 = vpack.c.bf16 %v2767, %v2763
    %v2868 = vpack.c.bf16 %v2768, %v2764
    %v2869 = vpack.c.bf16 %v2769, %v2765
    %v2870 = vpack.c.bf16 %v2770, %v2766
    %v2871 = vpack.c.bf16 %v2775, %v2771
    %v2872 = vpack.c.bf16 %v2776, %v2772
    %v2873 = vpack.c.bf16 %v2777, %v2773
    %v2874 = vpack.c.bf16 %v2778, %v2774
    %v2875 = vpack.c.bf16 %v2783, %v2779
    %v2876 = vpack.c.bf16 %v2784, %v2780
    %v2877 = vpack.c.bf16 %v2785, %v2781
    %v2878 = vpack.c.bf16 %v2786, %v2782
    %v2879 = vpack.c.bf16 %v2791, %v2787
    %v2880 = vpack.c.bf16 %v2792, %v2788
    %v2881 = vpack.c.bf16 %v2793, %v2789
    %v2882 = vpack.c.bf16 %v2794, %v2790
    %v2883 = vpack.c.bf16 %v2799, %v2795
    %v2884 = vpack.c.bf16 %v2800, %v2796
    %v2885 = vpack.c.bf16 %v2801, %v2797
    %v2886 = vpack.c.bf16 %v2802, %v2798
    %v2887 = vpack.c.bf16 %v2807, %v2803
    %v2888 = vpack.c.bf16 %v2808, %v2804
    %v2889 = vpack.c.bf16 %v2809, %v2805
    %v2890 = vpack.c.bf16 %v2810, %v2806
    %v2891 = vpack.c.bf16 %v2815, %v2811
    %v2892 = vpack.c.bf16 %v2816, %v2812
    %v2893 = vpack.c.bf16 %v2817, %v2813
    %v2894 = vpack.c.bf16 %v2818, %v2814
    %v2895 = vpack.c.bf16 %v2823, %v2819
    %v2896 = vpack.c.bf16 %v2824, %v2820
    %v2897 = vpack.c.bf16 %v2825, %v2821
    %v2898 = vpack.c.bf16 %v2826, %v2822
    %v2899 = vpack.c.bf16 %v2831, %v2827
    %v2900 = vpack.c.bf16 %v2832, %v2828
    %v2901 = vpack.c.bf16 %v2833, %v2829
    %v2902 = vpack.c.bf16 %v2834, %v2830
    %v2903 = vpack.c.bf16 %v2839, %v2835
    %v2904 = vpack.c.bf16 %v2840, %v2836
    %v2905 = vpack.c.bf16 %v2841, %v2837
    %v2906 = vpack.c.bf16 %v2842, %v2838
    %v2907 = vld [vmem:[#allocation7] sm:$0xf]
    %v2908 = vld [vmem:[#allocation7 + $0x4] sm:$0xf]
    %v2909 = vld [vmem:[#allocation7 + $0x8] sm:$0xf]
    %v2910 = vld [vmem:[#allocation7 + $0xc] sm:$0xf]
    %v2911 = vld [vmem:[#allocation7 + $0x10] sm:$0xf]
    %v2912 = vld [vmem:[#allocation7 + $0x14] sm:$0xf]
    %v2913 = vld [vmem:[#allocation7 + $0x18] sm:$0xf]
    %v2914 = vld [vmem:[#allocation7 + $0x1c] sm:$0xf]
    %v2915 = vld [vmem:[#allocation7 + $0x20] sm:$0xf]
    %v2916 = vld [vmem:[#allocation7 + $0x24] sm:$0xf]
    %v2917 = vld [vmem:[#allocation7 + $0x28] sm:$0xf]
    %v2918 = vld [vmem:[#allocation7 + $0x2c] sm:$0xf]
    %v2919 = vld [vmem:[#allocation7 + $0x30] sm:$0xf]
    %v2920 = vld [vmem:[#allocation7 + $0x34] sm:$0xf]
    %v2921 = vld [vmem:[#allocation7 + $0x38] sm:$0xf]
    %v2922 = vld [vmem:[#allocation7 + $0x3c] sm:$0xf]
    %v2923 = vld [vmem:[#allocation7 + $0x40] sm:$0xf]
    %v2924 = vld [vmem:[#allocation7 + $0x44] sm:$0xf]
    %v2925 = vld [vmem:[#allocation7 + $0x48] sm:$0xf]
    %v2926 = vld [vmem:[#allocation7 + $0x4c] sm:$0xf]
    %v2927 = vld [vmem:[#allocation7 + $0x50] sm:$0xf]
    %v2928 = vld [vmem:[#allocation7 + $0x54] sm:$0xf]
    %v2929 = vld [vmem:[#allocation7 + $0x58] sm:$0xf]
    %v2930 = vld [vmem:[#allocation7 + $0x5c] sm:$0xf]
    %v2931 = vld [vmem:[#allocation7 + $0x60] sm:$0xf]
    %v2932 = vld [vmem:[#allocation7 + $0x64] sm:$0xf]
    %v2933 = vld [vmem:[#allocation7 + $0x68] sm:$0xf]
    %v2934 = vld [vmem:[#allocation7 + $0x6c] sm:$0xf]
    %v2935 = vld [vmem:[#allocation7 + $0x70] sm:$0xf]
    %v2936 = vld [vmem:[#allocation7 + $0x74] sm:$0xf]
    %v2937 = vld [vmem:[#allocation7 + $0x78] sm:$0xf]
    %v2938 = vld [vmem:[#allocation7 + $0x7c] sm:$0xf]
    %v2939 = vld [vmem:[#allocation7 + $0x80] sm:$0xf]
    %v2940 = vld [vmem:[#allocation7 + $0x84] sm:$0xf]
    %v2941 = vld [vmem:[#allocation7 + $0x88] sm:$0xf]
    %v2942 = vld [vmem:[#allocation7 + $0x8c] sm:$0xf]
    %v2943 = vld [vmem:[#allocation7 + $0x90] sm:$0xf]
    %v2944 = vld [vmem:[#allocation7 + $0x94] sm:$0xf]
    %v2945 = vld [vmem:[#allocation7 + $0x98] sm:$0xf]
    %v2946 = vld [vmem:[#allocation7 + $0x9c] sm:$0xf]
    %v2947 = vld [vmem:[#allocation7 + $0xa0] sm:$0xf]
    %v2948 = vld [vmem:[#allocation7 + $0xa4] sm:$0xf]
    %v2949 = vld [vmem:[#allocation7 + $0xa8] sm:$0xf]
    %v2950 = vld [vmem:[#allocation7 + $0xac] sm:$0xf]
    %v2951 = vld [vmem:[#allocation7 + $0xb0] sm:$0xf]
    %v2952 = vld [vmem:[#allocation7 + $0xb4] sm:$0xf]
    %v2953 = vld [vmem:[#allocation7 + $0xb8] sm:$0xf]
    %v2954 = vld [vmem:[#allocation7 + $0xbc] sm:$0xf]
    %v2955 = vld [vmem:[#allocation7 + $0xc0] sm:$0xf]
    %v2956 = vld [vmem:[#allocation7 + $0xc4] sm:$0xf]
    %v2957 = vld [vmem:[#allocation7 + $0xc8] sm:$0xf]
    %v2958 = vld [vmem:[#allocation7 + $0xcc] sm:$0xf]
    %v2959 = vld [vmem:[#allocation7 + $0xd0] sm:$0xf]
    %v2960 = vld [vmem:[#allocation7 + $0xd4] sm:$0xf]
    %v2961 = vld [vmem:[#allocation7 + $0xd8] sm:$0xf]
    %v2962 = vld [vmem:[#allocation7 + $0xdc] sm:$0xf]
    %v2963 = vld [vmem:[#allocation7 + $0xe0] sm:$0xf]
    %v2964 = vld [vmem:[#allocation7 + $0xe4] sm:$0xf]
    %v2965 = vld [vmem:[#allocation7 + $0xe8] sm:$0xf]
    %v2966 = vld [vmem:[#allocation7 + $0xec] sm:$0xf]
    %v2967 = vld [vmem:[#allocation7 + $0xf0] sm:$0xf]
    %v2968 = vld [vmem:[#allocation7 + $0xf4] sm:$0xf]
    %v2969 = vld [vmem:[#allocation7 + $0xf8] sm:$0xf]
    %v2970 = vld [vmem:[#allocation7 + $0xfc] sm:$0xf]
    %v2971 = vld [vmem:[%s4] sm:$0x1]
    %v2973 = vlaneseq
    %v2974 = vshrl.u32 %v2973, 7
    %v2975 = vsub.s32 0, %v2974
    %v2976 = vrot.slane %v2971, %v2975
    %v3042 = vunpack.c.l.b16 %v2907
    %v3043 = vunpack.c.l.b16 %v2908
    %v3044 = vunpack.c.l.b16 %v2909
    %v3045 = vunpack.c.l.b16 %v2910
    %v3046 = vunpack.c.l.b16 %v2911
    %v3047 = vunpack.c.l.b16 %v2912
    %v3048 = vunpack.c.l.b16 %v2913
    %v3049 = vunpack.c.l.b16 %v2914
    %v3050 = vunpack.c.l.b16 %v2915
    %v3051 = vunpack.c.l.b16 %v2916
    %v3052 = vunpack.c.l.b16 %v2917
    %v3053 = vunpack.c.l.b16 %v2918
    %v3054 = vunpack.c.l.b16 %v2919
    %v3055 = vunpack.c.l.b16 %v2920
    %v3056 = vunpack.c.l.b16 %v2921
    %v3057 = vunpack.c.l.b16 %v2922
    %v3058 = vunpack.c.l.b16 %v2923
    %v3059 = vunpack.c.l.b16 %v2924
    %v3060 = vunpack.c.l.b16 %v2925
    %v3061 = vunpack.c.l.b16 %v2926
    %v3062 = vunpack.c.l.b16 %v2927
    %v3063 = vunpack.c.l.b16 %v2928
    %v3064 = vunpack.c.l.b16 %v2929
    %v3065 = vunpack.c.l.b16 %v2930
    %v3066 = vunpack.c.l.b16 %v2931
    %v3067 = vunpack.c.l.b16 %v2932
    %v3068 = vunpack.c.l.b16 %v2933
    %v3069 = vunpack.c.l.b16 %v2934
    %v3070 = vunpack.c.l.b16 %v2935
    %v3071 = vunpack.c.l.b16 %v2936
    %v3072 = vunpack.c.l.b16 %v2937
    %v3073 = vunpack.c.l.b16 %v2938
    %v3074 = vunpack.c.l.b16 %v2939
    %v3075 = vunpack.c.l.b16 %v2940
    %v3076 = vunpack.c.l.b16 %v2941
    %v3077 = vunpack.c.l.b16 %v2942
    %v3078 = vunpack.c.l.b16 %v2943
    %v3079 = vunpack.c.l.b16 %v2944
    %v3080 = vunpack.c.l.b16 %v2945
    %v3081 = vunpack.c.l.b16 %v2946
    %v3082 = vunpack.c.l.b16 %v2947
    %v3083 = vunpack.c.l.b16 %v2948
    %v3084 = vunpack.c.l.b16 %v2949
    %v3085 = vunpack.c.l.b16 %v2950
    %v3086 = vunpack.c.l.b16 %v2951
    %v3087 = vunpack.c.l.b16 %v2952
    %v3088 = vunpack.c.l.b16 %v2953
    %v3089 = vunpack.c.l.b16 %v2954
    %v3090 = vunpack.c.l.b16 %v2955
    %v3091 = vunpack.c.l.b16 %v2956
    %v3092 = vunpack.c.l.b16 %v2957
    %v3093 = vunpack.c.l.b16 %v2958
    %v3094 = vunpack.c.l.b16 %v2959
    %v3095 = vunpack.c.l.b16 %v2960
    %v3096 = vunpack.c.l.b16 %v2961
    %v3097 = vunpack.c.l.b16 %v2962
    %v3098 = vunpack.c.l.b16 %v2963
    %v3099 = vunpack.c.l.b16 %v2964
    %v3100 = vunpack.c.l.b16 %v2965
    %v3101 = vunpack.c.l.b16 %v2966
    %v3102 = vunpack.c.l.b16 %v2967
    %v3103 = vunpack.c.l.b16 %v2968
    %v3104 = vunpack.c.l.b16 %v2969
    %v3105 = vunpack.c.l.b16 %v2970
    %v3106 = vpack.c.b16 %v3043, %v3042
    %v3107 = vpack.c.b16 %v3045, %v3044
    %v3108 = vpack.c.b16 %v3047, %v3046
    %v3109 = vpack.c.b16 %v3049, %v3048
    %v3110 = vpack.c.b16 %v3051, %v3050
    %v3111 = vpack.c.b16 %v3053, %v3052
    %v3112 = vpack.c.b16 %v3055, %v3054
    %v3113 = vpack.c.b16 %v3057, %v3056
    %v3114 = vpack.c.b16 %v3059, %v3058
    %v3115 = vpack.c.b16 %v3061, %v3060
    %v3116 = vpack.c.b16 %v3063, %v3062
    %v3117 = vpack.c.b16 %v3065, %v3064
    %v3118 = vpack.c.b16 %v3067, %v3066
    %v3119 = vpack.c.b16 %v3069, %v3068
    %v3120 = vpack.c.b16 %v3071, %v3070
    %v3121 = vpack.c.b16 %v3073, %v3072
    %v3122 = vpack.c.b16 %v3075, %v3074
    %v3123 = vpack.c.b16 %v3077, %v3076
    %v3124 = vpack.c.b16 %v3079, %v3078
    %v3125 = vpack.c.b16 %v3081, %v3080
    %v3126 = vpack.c.b16 %v3083, %v3082
    %v3127 = vpack.c.b16 %v3085, %v3084
    %v3128 = vpack.c.b16 %v3087, %v3086
    %v3129 = vpack.c.b16 %v3089, %v3088
    %v3130 = vpack.c.b16 %v3091, %v3090
    %v3131 = vpack.c.b16 %v3093, %v3092
    %v3132 = vpack.c.b16 %v3095, %v3094
    %v3133 = vpack.c.b16 %v3097, %v3096
    %v3134 = vpack.c.b16 %v3099, %v3098
    %v3135 = vpack.c.b16 %v3101, %v3100
    %v3136 = vpack.c.b16 %v3103, %v3102
    %v3137 = vpack.c.b16 %v3105, %v3104
    %3170 = vmatprep.subr.bf16.mxu0 0
    %3171 = vmatpush1.bf16.msra.mxu0 %v3106
    %3172 = vmatprep.subr.bf16.mxu0 0
    %3173 = vmatpush1.bf16.msra.mxu0 %v3107
    %3174 = vmatprep.subr.bf16.mxu0 0
    %3175 = vmatpush1.bf16.msra.mxu0 %v3108
    %3176 = vmatprep.subr.bf16.mxu0 0
    %3177 = vmatpush1.bf16.msra.mxu0 %v3109
    %3178 = vmatprep.subr.bf16.mxu0 0
    %3179 = vmatpush1.bf16.msra.mxu0 %v3110
    %3180 = vmatprep.subr.bf16.mxu0 0
    %3181 = vmatpush1.bf16.msra.mxu0 %v3111
    %3182 = vmatprep.subr.bf16.mxu0 0
    %3183 = vmatpush1.bf16.msra.mxu0 %v3112
    %3184 = vmatprep.subr.bf16.mxu0 0
    %3185 = vmatpush1.bf16.msra.mxu0 %v3113
    %3186 = vmatprep.subr.bf16.mxu0 0
    %3187 = vmatpush1.bf16.msra.mxu0 %v3114
    %3188 = vmatprep.subr.bf16.mxu0 0
    %3189 = vmatpush1.bf16.msra.mxu0 %v3115
    %3190 = vmatprep.subr.bf16.mxu0 0
    %3191 = vmatpush1.bf16.msra.mxu0 %v3116
    %3192 = vmatprep.subr.bf16.mxu0 0
    %3193 = vmatpush1.bf16.msra.mxu0 %v3117
    %3194 = vmatprep.subr.bf16.mxu0 0
    %3195 = vmatpush1.bf16.msra.mxu0 %v3118
    %3196 = vmatprep.subr.bf16.mxu0 0
    %3197 = vmatpush1.bf16.msra.mxu0 %v3119
    %3198 = vmatprep.subr.bf16.mxu0 0
    %3199 = vmatpush1.bf16.msra.mxu0 %v3120
    %3200 = vmatprep.subr.bf16.mxu0 0
    %3201 = vmatpush1.bf16.msra.mxu0 %v3121
    %3202 = vmatprep.mubr.bf16.mxu0 %v2844
    %3203 = vmatmul.mubr.bf16.gmra.mrb[0].mxu0 %v2843
    %v3204 = vpop.f32.mrb[0].mxu0
    %v3205 = vadd.f32 %v2976, %v3204
    %v3206 = vpop.f32.mrb[0].mxu0
    %v3207 = vpop.f32.mrb[0].mxu0
    %v3208 = vadd.f32 %v2976, %v3207
    %v3209 = vpop.f32.mrb[0].mxu0
    %3210 = vmatprep.mubr.bf16.mxu0 %v2848
    %3211 = vmatmul.mubr.bf16.gmra.mrb[0].mxu0 %v2847
    %v3212 = vpop.f32.mrb[0].mxu0
    %v3213 = vadd.f32 %v2976, %v3212
    %v3214 = vpop.f32.mrb[0].mxu0
    %v3215 = vpop.f32.mrb[0].mxu0
    %v3216 = vadd.f32 %v2976, %v3215
    %v3217 = vpop.f32.mrb[0].mxu0
    %3218 = vmatprep.mubr.bf16.mxu0 %v2852
    %3219 = vmatmul.mubr.bf16.gmra.mrb[0].mxu0 %v2851
    %v3220 = vpop.f32.mrb[0].mxu0
    %v3221 = vadd.f32 %v2976, %v3220
    %v3222 = vpop.f32.mrb[0].mxu0
    %v3223 = vpop.f32.mrb[0].mxu0
    %v3224 = vadd.f32 %v2976, %v3223
    %v3225 = vpop.f32.mrb[0].mxu0
    %3226 = vmatprep.mubr.bf16.mxu0 %v2856
    %3227 = vmatmul.mubr.bf16.gmra.mrb[0].mxu0 %v2855
    %v3228 = vpop.f32.mrb[0].mxu0
    %v3229 = vadd.f32 %v2976, %v3228
    %v3230 = vpop.f32.mrb[0].mxu0
    %v3231 = vpop.f32.mrb[0].mxu0
    %v3232 = vadd.f32 %v2976, %v3231
    %v3233 = vpop.f32.mrb[0].mxu0
    %3234 = vmatprep.mubr.bf16.mxu0 %v2860
    %3235 = vmatmul.mubr.bf16.gmra.mrb[0].mxu0 %v2859
    %v3236 = vpop.f32.mrb[0].mxu0
    %v3237 = vadd.f32 %v2976, %v3236
    %v3238 = vpop.f32.mrb[0].mxu0
    %v3239 = vpop.f32.mrb[0].mxu0
    %v3240 = vadd.f32 %v2976, %v3239
    %v3241 = vpop.f32.mrb[0].mxu0
    %3242 = vmatprep.mubr.bf16.mxu0 %v2864
    %3243 = vmatmul.mubr.bf16.gmra.mrb[0].mxu0 %v2863
    %v3244 = vpop.f32.mrb[0].mxu0
    %v3245 = vadd.f32 %v2976, %v3244
    %v3246 = vpop.f32.mrb[0].mxu0
    %v3247 = vpop.f32.mrb[0].mxu0
    %v3248 = vadd.f32 %v2976, %v3247
    %v3249 = vpop.f32.mrb[0].mxu0
    %3250 = vmatprep.mubr.bf16.mxu0 %v2868
    %3251 = vmatmul.mubr.bf16.gmra.mrb[0].mxu0 %v2867
    %v3252 = vpop.f32.mrb[0].mxu0
    %v3253 = vadd.f32 %v2976, %v3252
    %v3254 = vpop.f32.mrb[0].mxu0
    %v3255 = vpop.f32.mrb[0].mxu0
    %v3256 = vadd.f32 %v2976, %v3255
    %v3257 = vpop.f32.mrb[0].mxu0
    %3258 = vmatprep.mubr.bf16.mxu0 %v2872
    %3259 = vmatmul.mubr.bf16.gmra.mrb[0].mxu0 %v2871
    %v3260 = vpop.f32.mrb[0].mxu0
    %v3261 = vadd.f32 %v2976, %v3260
    %v3262 = vpop.f32.mrb[0].mxu0
    %v3263 = vpop.f32.mrb[0].mxu0
    %v3264 = vadd.f32 %v2976, %v3263
    %v3265 = vpop.f32.mrb[0].mxu0
    %3266 = vmatprep.mubr.bf16.mxu0 %v2876
    %3267 = vmatmul.mubr.bf16.gmra.mrb[0].mxu0 %v2875
    %v3268 = vpop.f32.mrb[0].mxu0
    %v3269 = vadd.f32 %v2976, %v3268
    %v3270 = vpop.f32.mrb[0].mxu0
    %v3271 = vpop.f32.mrb[0].mxu0
    %v3272 = vadd.f32 %v2976, %v3271
    %v3273 = vpop.f32.mrb[0].mxu0
    %3274 = vmatprep.mubr.bf16.mxu0 %v2880
    %3275 = vmatmul.mubr.bf16.gmra.mrb[0].mxu0 %v2879
    %v3276 = vpop.f32.mrb[0].mxu0
    %v3277 = vadd.f32 %v2976, %v3276
    %v3278 = vpop.f32.mrb[0].mxu0
    %v3279 = vpop.f32.mrb[0].mxu0
    %v3280 = vadd.f32 %v2976, %v3279
    %v3281 = vpop.f32.mrb[0].mxu0
    %3282 = vmatprep.mubr.bf16.mxu0 %v2884
    %3283 = vmatmul.mubr.bf16.gmra.mrb[0].mxu0 %v2883
    %v3284 = vpop.f32.mrb[0].mxu0
    %v3285 = vadd.f32 %v2976, %v3284
    %v3286 = vpop.f32.mrb[0].mxu0
    %v3287 = vpop.f32.mrb[0].mxu0
    %v3288 = vadd.f32 %v2976, %v3287
    %v3289 = vpop.f32.mrb[0].mxu0
    %3290 = vmatprep.mubr.bf16.mxu0 %v2888
    %3291 = vmatmul.mubr.bf16.gmra.mrb[0].mxu0 %v2887
    %v3292 = vpop.f32.mrb[0].mxu0
    %v3293 = vadd.f32 %v2976, %v3292
    %v3294 = vpop.f32.mrb[0].mxu0
    %v3295 = vpop.f32.mrb[0].mxu0
    %v3296 = vadd.f32 %v2976, %v3295
    %v3297 = vpop.f32.mrb[0].mxu0
    %3298 = vmatprep.mubr.bf16.mxu0 %v2892
    %3299 = vmatmul.mubr.bf16.gmra.mrb[0].mxu0 %v2891
    %v3300 = vpop.f32.mrb[0].mxu0
    %v3301 = vadd.f32 %v2976, %v3300
    %v3302 = vpop.f32.mrb[0].mxu0
    %v3303 = vpop.f32.mrb[0].mxu0
    %v3304 = vadd.f32 %v2976, %v3303
    %v3305 = vpop.f32.mrb[0].mxu0
    %3306 = vmatprep.mubr.bf16.mxu0 %v2896
    %3307 = vmatmul.mubr.bf16.gmra.mrb[0].mxu0 %v2895
    %v3308 = vpop.f32.mrb[0].mxu0
    %v3309 = vadd.f32 %v2976, %v3308
    %v3310 = vpop.f32.mrb[0].mxu0
    %v3311 = vpop.f32.mrb[0].mxu0
    %v3312 = vadd.f32 %v2976, %v3311
    %v3313 = vpop.f32.mrb[0].mxu0
    %3314 = vmatprep.mubr.bf16.mxu0 %v2900
    %3315 = vmatmul.mubr.bf16.gmra.mrb[0].mxu0 %v2899
    %v3316 = vpop.f32.mrb[0].mxu0
    %v3317 = vadd.f32 %v2976, %v3316
    %v3318 = vpop.f32.mrb[0].mxu0
    %v3319 = vpop.f32.mrb[0].mxu0
    %v3320 = vadd.f32 %v2976, %v3319
    %v3321 = vpop.f32.mrb[0].mxu0
    %3322 = vmatprep.mubr.bf16.mxu0 %v2904
    %3323 = vmatmul.mubr.bf16.gmra.mrb[0].mxu0 %v2903
    %v3324 = vpop.f32.mrb[0].mxu0
    %v3325 = vadd.f32 %v2976, %v3324
    %v3326 = vpop.f32.mrb[0].mxu0
    %v3327 = vpop.f32.mrb[0].mxu0
    %v3328 = vadd.f32 %v2976, %v3327
    %v3329 = vpop.f32.mrb[0].mxu0
    %3330 = vdwg.mxu0
    %3331 = vmatprep.subr.bf16.mxu0 0
    %3332 = vmatpush1.bf16.msra.mxu0 %v3122
    %3333 = vmatprep.subr.bf16.mxu0 0
    %3334 = vmatpush1.bf16.msra.mxu0 %v3123
    %3335 = vmatprep.subr.bf16.mxu0 0
    %3336 = vmatpush1.bf16.msra.mxu0 %v3124
    %3337 = vmatprep.subr.bf16.mxu0 0
    %3338 = vmatpush1.bf16.msra.mxu0 %v3125
    %3339 = vmatprep.subr.bf16.mxu0 0
    %3340 = vmatpush1.bf16.msra.mxu0 %v3126
    %3341 = vmatprep.subr.bf16.mxu0 0
    %3342 = vmatpush1.bf16.msra.mxu0 %v3127
    %3343 = vmatprep.subr.bf16.mxu0 0
    %3344 = vmatpush1.bf16.msra.mxu0 %v3128
    %3345 = vmatprep.subr.bf16.mxu0 0
    %3346 = vmatpush1.bf16.msra.mxu0 %v3129
    %3347 = vmatprep.subr.bf16.mxu0 0
    %3348 = vmatpush1.bf16.msra.mxu0 %v3130
    %3349 = vmatprep.subr.bf16.mxu0 0
    %3350 = vmatpush1.bf16.msra.mxu0 %v3131
    %3351 = vmatprep.subr.bf16.mxu0 0
    %3352 = vmatpush1.bf16.msra.mxu0 %v3132
    %3353 = vmatprep.subr.bf16.mxu0 0
    %3354 = vmatpush1.bf16.msra.mxu0 %v3133
    %3355 = vmatprep.subr.bf16.mxu0 0
    %3356 = vmatpush1.bf16.msra.mxu0 %v3134
    %3357 = vmatprep.subr.bf16.mxu0 0
    %3358 = vmatpush1.bf16.msra.mxu0 %v3135
    %3359 = vmatprep.subr.bf16.mxu0 0
    %3360 = vmatpush1.bf16.msra.mxu0 %v3136
    %3361 = vmatprep.subr.bf16.mxu0 0
    %3362 = vmatpush1.bf16.msra.mxu0 %v3137
    %3363 = vmatprep.mubr.bf16.mxu0 %v2846
    %3364 = vmatmul.mubr.bf16.gmra.mrb[0].mxu0 %v2845
    %v3365 = vpop.f32.mrb[0].mxu0
    %v3366 = vadd.f32 %v3205, %v3365
    %v3367 = vpop.f32.mrb[0].mxu0
    %v3368 = vpop.f32.mrb[0].mxu0
    %v3369 = vadd.f32 %v3208, %v3368
    %v3370 = vpop.f32.mrb[0].mxu0
    %3371 = vmatprep.mubr.bf16.mxu0 %v2850
    %3372 = vmatmul.mubr.bf16.gmra.mrb[0].mxu0 %v2849
    %v3373 = vpop.f32.mrb[0].mxu0
    %v3374 = vadd.f32 %v3213, %v3373
    %v3375 = vpop.f32.mrb[0].mxu0
    %v3376 = vpop.f32.mrb[0].mxu0
    %v3377 = vadd.f32 %v3216, %v3376
    %v3378 = vpop.f32.mrb[0].mxu0
    %3379 = vmatprep.mubr.bf16.mxu0 %v2854
    %3380 = vmatmul.mubr.bf16.gmra.mrb[0].mxu0 %v2853
    %v3381 = vpop.f32.mrb[0].mxu0
    %v3382 = vadd.f32 %v3221, %v3381
    %v3383 = vpop.f32.mrb[0].mxu0
    %v3384 = vpop.f32.mrb[0].mxu0
    %v3385 = vadd.f32 %v3224, %v3384
    %v3386 = vpop.f32.mrb[0].mxu0
    %3387 = vmatprep.mubr.bf16.mxu0 %v2858
    %3388 = vmatmul.mubr.bf16.gmra.mrb[0].mxu0 %v2857
    %v3389 = vpop.f32.mrb[0].mxu0
    %v3390 = vadd.f32 %v3229, %v3389
    %v3391 = vpop.f32.mrb[0].mxu0
    %v3392 = vpop.f32.mrb[0].mxu0
    %v3393 = vadd.f32 %v3232, %v3392
    %v3394 = vpop.f32.mrb[0].mxu0
    %3395 = vmatprep.mubr.bf16.mxu0 %v2862
    %3396 = vmatmul.mubr.bf16.gmra.mrb[0].mxu0 %v2861
    %v3397 = vpop.f32.mrb[0].mxu0
    %v3398 = vadd.f32 %v3237, %v3397
    %v3399 = vpop.f32.mrb[0].mxu0
    %v3400 = vpop.f32.mrb[0].mxu0
    %v3401 = vadd.f32 %v3240, %v3400
    %v3402 = vpop.f32.mrb[0].mxu0
    %3403 = vmatprep.mubr.bf16.mxu0 %v2866
    %3404 = vmatmul.mubr.bf16.gmra.mrb[0].mxu0 %v2865
    %v3405 = vpop.f32.mrb[0].mxu0
    %v3406 = vadd.f32 %v3245, %v3405
    %v3407 = vpop.f32.mrb[0].mxu0
    %v3408 = vpop.f32.mrb[0].mxu0
    %v3409 = vadd.f32 %v3248, %v3408
    %v3410 = vpop.f32.mrb[0].mxu0
    %3411 = vmatprep.mubr.bf16.mxu0 %v2870
    %3412 = vmatmul.mubr.bf16.gmra.mrb[0].mxu0 %v2869
    %v3413 = vpop.f32.mrb[0].mxu0
    %v3414 = vadd.f32 %v3253, %v3413
    %v3415 = vpop.f32.mrb[0].mxu0
    %v3416 = vpop.f32.mrb[0].mxu0
    %v3417 = vadd.f32 %v3256, %v3416
    %v3418 = vpop.f32.mrb[0].mxu0
    %3419 = vmatprep.mubr.bf16.mxu0 %v2874
    %3420 = vmatmul.mubr.bf16.gmra.mrb[0].mxu0 %v2873
    %v3421 = vpop.f32.mrb[0].mxu0
    %v3422 = vadd.f32 %v3261, %v3421
    %v3423 = vpop.f32.mrb[0].mxu0
    %v3424 = vpop.f32.mrb[0].mxu0
    %v3425 = vadd.f32 %v3264, %v3424
    %v3426 = vpop.f32.mrb[0].mxu0
    %3427 = vmatprep.mubr.bf16.mxu0 %v2878
    %3428 = vmatmul.mubr.bf16.gmra.mrb[0].mxu0 %v2877
    %v3429 = vpop.f32.mrb[0].mxu0
    %v3430 = vadd.f32 %v3269, %v3429
    %v3431 = vpop.f32.mrb[0].mxu0
    %v3432 = vpop.f32.mrb[0].mxu0
    %v3433 = vadd.f32 %v3272, %v3432
    %v3434 = vpop.f32.mrb[0].mxu0
    %3435 = vmatprep.mubr.bf16.mxu0 %v2882
    %3436 = vmatmul.mubr.bf16.gmra.mrb[0].mxu0 %v2881
    %v3437 = vpop.f32.mrb[0].mxu0
    %v3438 = vadd.f32 %v3277, %v3437
    %v3439 = vpop.f32.mrb[0].mxu0
    %v3440 = vpop.f32.mrb[0].mxu0
    %v3441 = vadd.f32 %v3280, %v3440
    %v3442 = vpop.f32.mrb[0].mxu0
    %3443 = vmatprep.mubr.bf16.mxu0 %v2886
    %3444 = vmatmul.mubr.bf16.gmra.mrb[0].mxu0 %v2885
    %v3445 = vpop.f32.mrb[0].mxu0
    %v3446 = vadd.f32 %v3285, %v3445
    %v3447 = vpop.f32.mrb[0].mxu0
    %v3448 = vpop.f32.mrb[0].mxu0
    %v3449 = vadd.f32 %v3288, %v3448
    %v3450 = vpop.f32.mrb[0].mxu0
    %3451 = vmatprep.mubr.bf16.mxu0 %v2890
    %3452 = vmatmul.mubr.bf16.gmra.mrb[0].mxu0 %v2889
    %v3453 = vpop.f32.mrb[0].mxu0
    %v3454 = vadd.f32 %v3293, %v3453
    %v3455 = vpop.f32.mrb[0].mxu0
    %v3456 = vpop.f32.mrb[0].mxu0
    %v3457 = vadd.f32 %v3296, %v3456
    %v3458 = vpop.f32.mrb[0].mxu0
    %3459 = vmatprep.mubr.bf16.mxu0 %v2894
    %3460 = vmatmul.mubr.bf16.gmra.mrb[0].mxu0 %v2893
    %v3461 = vpop.f32.mrb[0].mxu0
    %v3462 = vadd.f32 %v3301, %v3461
    %v3463 = vpop.f32.mrb[0].mxu0
    %v3464 = vpop.f32.mrb[0].mxu0
    %v3465 = vadd.f32 %v3304, %v3464
    %v3466 = vpop.f32.mrb[0].mxu0
    %3467 = vmatprep.mubr.bf16.mxu0 %v2898
    %3468 = vmatmul.mubr.bf16.gmra.mrb[0].mxu0 %v2897
    %v3469 = vpop.f32.mrb[0].mxu0
    %v3470 = vadd.f32 %v3309, %v3469
    %v3471 = vpop.f32.mrb[0].mxu0
    %v3472 = vpop.f32.mrb[0].mxu0
    %v3473 = vadd.f32 %v3312, %v3472
    %v3474 = vpop.f32.mrb[0].mxu0
    %3475 = vmatprep.mubr.bf16.mxu0 %v2902
    %3476 = vmatmul.mubr.bf16.gmra.mrb[0].mxu0 %v2901
    %v3477 = vpop.f32.mrb[0].mxu0
    %v3478 = vadd.f32 %v3317, %v3477
    %v3479 = vpop.f32.mrb[0].mxu0
    %v3480 = vpop.f32.mrb[0].mxu0
    %v3481 = vadd.f32 %v3320, %v3480
    %v3482 = vpop.f32.mrb[0].mxu0
    %3483 = vmatprep.mubr.bf16.mxu0 %v2906
    %3484 = vmatmul.mubr.bf16.gmra.mrb[0].mxu0 %v2905
    %v3485 = vpop.f32.mrb[0].mxu0
    %v3486 = vadd.f32 %v3325, %v3485
    %v3487 = vpop.f32.mrb[0].mxu0
    %v3488 = vpop.f32.mrb[0].mxu0
    %v3489 = vadd.f32 %v3328, %v3488
    %v3490 = vpop.f32.mrb[0].mxu0
    %3491 = vdwg.mxu0
    %3492 = vst [vmem:[#allocation8] sm:$0xff] %v3366
    %3493 = vst [vmem:[#allocation8 + $0x8] sm:$0xff] %v3369
    %3494 = vst [vmem:[#allocation8 + $0x10] sm:$0xff] %v3374
    %3495 = vst [vmem:[#allocation8 + $0x18] sm:$0xff] %v3377
    %3496 = vst [vmem:[#allocation8 + $0x20] sm:$0xff] %v3382
    %3497 = vst [vmem:[#allocation8 + $0x28] sm:$0xff] %v3385
    %3498 = vst [vmem:[#allocation8 + $0x30] sm:$0xff] %v3390
    %3499 = vst [vmem:[#allocation8 + $0x38] sm:$0xff] %v3393
    %3500 = vst [vmem:[#allocation8 + $0x40] sm:$0xff] %v3398
    %3501 = vst [vmem:[#allocation8 + $0x48] sm:$0xff] %v3401
    %3502 = vst [vmem:[#allocation8 + $0x50] sm:$0xff] %v3406
    %3503 = vst [vmem:[#allocation8 + $0x58] sm:$0xff] %v3409
    %3504 = vst [vmem:[#allocation8 + $0x60] sm:$0xff] %v3414
    %3505 = vst [vmem:[#allocation8 + $0x68] sm:$0xff] %v3417
    %3506 = vst [vmem:[#allocation8 + $0x70] sm:$0xff] %v3422
    %3507 = vst [vmem:[#allocation8 + $0x78] sm:$0xff] %v3425
    %3508 = vst [vmem:[#allocation8 + $0x80] sm:$0xff] %v3430
    %3509 = vst [vmem:[#allocation8 + $0x88] sm:$0xff] %v3433
    %3510 = vst [vmem:[#allocation8 + $0x90] sm:$0xff] %v3438
    %3511 = vst [vmem:[#allocation8 + $0x98] sm:$0xff] %v3441
    %3512 = vst [vmem:[#allocation8 + $0xa0] sm:$0xff] %v3446
    %3513 = vst [vmem:[#allocation8 + $0xa8] sm:$0xff] %v3449
    %3514 = vst [vmem:[#allocation8 + $0xb0] sm:$0xff] %v3454
    %3515 = vst [vmem:[#allocation8 + $0xb8] sm:$0xff] %v3457
    %3516 = vst [vmem:[#allocation8 + $0xc0] sm:$0xff] %v3462
    %3517 = vst [vmem:[#allocation8 + $0xc8] sm:$0xff] %v3465
    %3518 = vst [vmem:[#allocation8 + $0xd0] sm:$0xff] %v3470
    %3519 = vst [vmem:[#allocation8 + $0xd8] sm:$0xff] %v3473
    %3520 = vst [vmem:[#allocation8 + $0xe0] sm:$0xff] %v3478
    %3521 = vst [vmem:[#allocation8 + $0xe8] sm:$0xff] %v3481
    %3522 = vst [vmem:[#allocation8 + $0xf0] sm:$0xff] %v3486
    %3523 = vst [vmem:[#allocation8 + $0xf8] sm:$0xff] %v3489
    // Predicated region
    $region34: #{tpu_custom_call.1} parent=1 // pred_check
      _
    $region35: #{tpu_custom_call.1} parent=1 // pred_check_branch
      %3525 = sbr.rel (0) target = $region37
    $region36: #{tpu_custom_call.1} parent=1 // pred_region
      %s3527 = ssub.s32 4096, 4096
      %3528 = vsyncadd [#allocation4], %s3527
      %s3529 = sshll.u32 [#allocation8], 4
      %s3530 = int_to_ptr.vmem [resolvable:$true] %s3529
      %3535 = dma.vmem_to_hbm [thread:$0]  %s3530, 4096, %s5, [#allocation4], 128, 128, 8
    $region37: #{tpu_custom_call.1} parent=1 // pred_fallthru
      _
    // Predicated region
    $region38: #{tpu_custom_call.1} parent=1 // pred_check
      _
    $region39: #{tpu_custom_call.1} parent=1 // pred_check_branch
      %3537 = sbr.rel (0) target = $region41
    $region40: #{tpu_custom_call.1} parent=1 // pred_region
      %3538 = dma.done [#allocation4], 4096
    $region41: #{tpu_custom_call.1} parent=1 // pred_fallthru
      _
    %3539 = vsyncpa [#allocation3], 1
    %3540 = vsyncpa [#allocation6], 1
    %3541 = vsyncpa [#allocation4], 1

</llo_original>
